<compile_context>
chip_gen: v7x
topology: tpu7x:2x2x1
jax: 0.10.0
libtpu: 0.0.40
codegen_flags: <defaults>
</compile_context>

<pallas_src>
import jax
import jax.numpy as jnp
import numpy as np
from jax.experimental import pallas as pl
from jax.experimental.pallas import tpu as pltpu


def _round_up(x, m):
    return (x + m - 1) // m * m


# ----------------------------- Pallas kernel --------------------------------
def _make_kernel(H, W, Ch, Ci, NPAD):
    Wp = W + 2                 # padded width
    M = H * Wp                 # rows of the flattened conv-output grid
    MC = M + 2                 # rows of the fused-tap operands actually used
    IOFF = Wp + 1              # flat offset of image pixel (0, 0) in padded buf
    Cm = Ch + Ci
    inv_hw = 1.0 / (H * W)
    f32, bf16 = jnp.float32, jnp.bfloat16

    def kernel(x_ref,             # (NPAD, Cm) bf16   zero-padded [net|inp], flat
               w1_ref,            # (3, 3*Cm, 3*Ch) bf16  fused z|r|q_inp weights
               wqn_ref,           # (3, 3*Ch, Ch)   bf16  q net-part weights
               b_ref,             # (1, 3*Ch) f32         fused bz|br|bq
               ww_ref, bw_ref,    # (Ch, Ch) bf16, (1, Ch) f32
               wglo_ref, bglo_ref,  # (Ch, 3*Ch) bf16, (1, 3*Ch) f32
               out_ref,           # (M, Ch) f32
               xb3_ref,           # scratch (MC3, 3*Cm) bf16  vertically fused taps
               p23_ref):          # scratch (MC3, 3*Ch) bf16  fused r*net taps

        # ---- build the vertically tap-fused conv operand -------------------
        # xb3[i, dy*Cm:(dy+1)*Cm] = x[i + dy*Wp, :]
        for dy in range(3):
            xb3_ref[pl.ds(0, MC), pl.ds(dy * Cm, Cm)] = x_ref[pl.ds(dy * Wp, MC), :]

        # net on the conv-output grid (exact zeros in the pad cols/rows)
        net_bf = x_ref[pl.ds(IOFF, M), pl.ds(0, Ch)]                 # (M, Ch) bf16
        net = net_bf.astype(f32)

        # ---- global pooling branch (mean taken before the fused 1x1s) ------
        gate = jax.nn.sigmoid(
            jnp.dot(net_bf, ww_ref[...], preferred_element_type=f32) + bw_ref[...])
        # padding rows contribute exactly 0 to the sum (net == 0 there)
        g_mean = jnp.sum(gate * net, axis=0, keepdims=True) * inv_hw  # (1, Ch)
        glo = jnp.dot(g_mean.astype(bf16), wglo_ref[...],
                      preferred_element_type=f32) + bglo_ref[...]     # (1, 3*Ch)

        # ---- pass 1: fused z | r | q_inp 3x3 conv — 3 matmuls, K = 3*Cm ----
        acc1 = jnp.dot(xb3_ref[pl.ds(0, M), :], w1_ref[0],
                       preferred_element_type=f32)
        acc1 = acc1 + jnp.dot(xb3_ref[pl.ds(1, M), :], w1_ref[1],
                              preferred_element_type=f32)
        acc1 = acc1 + jnp.dot(xb3_ref[pl.ds(2, M), :], w1_ref[2],
                              preferred_element_type=f32)
        acc1 = acc1 + (b_ref[...] + glo)

        z = jax.nn.sigmoid(acc1[:, 0 * Ch:1 * Ch])
        r = jax.nn.sigmoid(acc1[:, 1 * Ch:2 * Ch])

        # ---- pass 2: q net-part conv over r*net ----------------------------
        # Write r*net band-wise straight into the fused (rows, 3*Ch) operand:
        #   p23[i, dy*Ch:(dy+1)*Ch] = rnet_padded_flat[i + dy*Wp]
        # Only the small halo regions need zeros; interiors rewritten each step.
        rnet = (r * net).astype(bf16)            # (M, Ch); pad cols stay exactly 0
        zhalo = jnp.zeros((IOFF, Ch), bf16)
        p23_ref[pl.ds(0, IOFF), pl.ds(0, Ch)] = zhalo                      # band 0 head
        p23_ref[pl.ds(0, 1), pl.ds(Ch, Ch)] = zhalo[:1]                    # band 1 head
        p23_ref[pl.ds(M + 1, 1), pl.ds(Ch, Ch)] = zhalo[:1]                # band 1 tail
        p23_ref[pl.ds(M + 1 - Wp, IOFF), pl.ds(2 * Ch, Ch)] = zhalo        # band 2 tail
        p23_ref[pl.ds(IOFF, M + 1 - Wp), pl.ds(0, Ch)] = rnet[:M + 1 - Wp]
        p23_ref[pl.ds(1, M), pl.ds(Ch, Ch)] = rnet
        p23_ref[pl.ds(0, M + 1 - Wp), pl.ds(2 * Ch, Ch)] = rnet[Wp - 1:]

        acc2 = acc1[:, 2 * Ch:3 * Ch]
        acc2 = acc2 + jnp.dot(p23_ref[pl.ds(0, M), :], wqn_ref[0],
                              preferred_element_type=f32)
        acc2 = acc2 + jnp.dot(p23_ref[pl.ds(1, M), :], wqn_ref[1],
                              preferred_element_type=f32)
        acc2 = acc2 + jnp.dot(p23_ref[pl.ds(2, M), :], wqn_ref[2],
                              preferred_element_type=f32)
        q = jnp.tanh(acc2)

        out_ref[...] = (1.0 - z) * net + z * q

    return kernel


# ------------------------------ wrapper --------------------------------------
def conv_gru_pallas(net_nchw, inp_nchw, params):
    """net_nchw: (B, Ch, H, W); inp_nchw: (B, Ci, H, W) — PyTorch NCHW."""
    B, Ch, H, W = net_nchw.shape
    Ci = inp_nchw.shape[1]
    Cm = Ch + Ci
    Hp, Wp = H + 2, W + 2
    M = H * Wp
    NPAD = _round_up(M + 2 * Wp + 2, 16)   # rows of the flattened padded buffer
    MC3 = _round_up(M + 2, 16)             # rows of the fused-tap scratch
    f32, bf16 = jnp.float32, jnp.bfloat16

    # NHWC, merged channels, cast to bf16 BEFORE padding (halves the HBM churn
    # of the pad/reshape chain and of the kernel's input DMA), spatially
    # zero-padded, flattened to rows, row-padded so all tap slices stay in-bounds.
    merged = jnp.concatenate(
        [jnp.transpose(net_nchw, (0, 2, 3, 1)),
         jnp.transpose(inp_nchw, (0, 2, 3, 1))], axis=-1).astype(bf16)
    padded = jnp.pad(merged, ((0, 0), (1, 1), (1, 1), (0, 0)))
    flat = padded.reshape(B, Hp * Wp, Cm)
    flat = jnp.pad(flat, ((0, 0), (0, NPAD - Hp * Wp), (0, 0)))

    def w3(w):    # torch (Cout, Cin, 3, 3) -> (9, Cin, Cout), k = dy*3 + dx
        return jnp.transpose(w, (2, 3, 1, 0)).reshape(9, w.shape[1], w.shape[0])

    def vfuse(w9):  # (9, Cin, Cout) -> (3, 3*Cin, Cout): [dx][dy*Cin + cin, cout]
        cin, cout = w9.shape[1], w9.shape[2]
        w = w9.reshape(3, 3, cin, cout)            # (dy, dx, Cin, Cout)
        w = jnp.transpose(w, (1, 0, 2, 3))         # (dx, dy, Cin, Cout)
        return w.reshape(3, 3 * cin, cout)

    def w1x1(w):  # torch (Cout, Cin, 1, 1) -> (Cin, Cout)
        return jnp.transpose(w[:, :, 0, 0], (1, 0))

    wz, wr, wq = w3(params['convz_w']), w3(params['convr_w']), w3(params['convq_w'])
    # pass-1 fused weight, Cout bands = [z | r | q_inp-part]; q's net-input
    # channels get zeros here (its net part runs in pass 2 on r*net).
    wq_inp = jnp.concatenate(
        [jnp.zeros((9, Ch, Ch), f32), wq[:, Ch:, :]], axis=1)           # (9, Cm, Ch)
    w_pass1 = vfuse(jnp.concatenate([wz, wr, wq_inp], axis=2)).astype(bf16)  # (3,3Cm,3Ch)
    w_qnet = vfuse(wq[:, :Ch, :]).astype(bf16)                               # (3,3Ch,Ch)

    b_fused = jnp.concatenate(
        [params['convz_b'], params['convr_b'],
         params['convq_b']]).reshape(1, 3 * Ch).astype(f32)
    w_w = w1x1(params['w_w']).astype(bf16)
    b_w = params['w_b'].reshape(1, Ch).astype(f32)
    w_glo = jnp.concatenate(
        [w1x1(params['convz_glo_w']), w1x1(params['convr_glo_w']),
         w1x1(params['convq_glo_w'])], axis=1).astype(bf16)              # (Ch, 3Ch)
    b_glo = jnp.concatenate(
        [params['convz_glo_b'], params['convr_glo_b'],
         params['convq_glo_b']]).reshape(1, 3 * Ch).astype(f32)

    weights = [w_pass1, w_qnet, b_fused, w_w, b_w, w_glo, b_glo]

    def full_spec(a):
        nd = a.ndim
        return pl.BlockSpec(a.shape, lambda b, _nd=nd: (0,) * _nd)

    in_specs = ([pl.BlockSpec((None, NPAD, Cm), lambda b: (b, 0, 0))]
                + [full_spec(a) for a in weights])

    # Explicit scoped-VMEM budget: double-buffered in/out blocks + weights +
    # scratch + f32 temporaries, ~2x headroom, clamped to v7x physical (64 MiB).
    in_blk = NPAD * Cm * 2
    out_blk = M * Ch * 4
    w_bytes = sum(int(np.prod(a.shape)) * a.dtype.itemsize for a in weights)
    scratch_b = MC3 * (3 * Cm + 3 * Ch) * 2
    temps = M * (2 * 3 * Ch + 8 * Ch) * 4
    vmem_limit = int(min(64 << 20,
                         max(32 << 20,
                             2 * (2 * in_blk + 2 * out_blk + 2 * w_bytes
                                  + scratch_b + temps))))

    out = pl.pallas_call(
        _make_kernel(H, W, Ch, Ci, NPAD),
        out_shape=jax.ShapeDtypeStruct((B, M, Ch), f32),
        grid_spec=pltpu.PrefetchScalarGridSpec(
            num_scalar_prefetch=0,
            grid=(B,),
            in_specs=in_specs,
            out_specs=pl.BlockSpec((None, M, Ch), lambda b: (b, 0, 0)),
            scratch_shapes=[
                pltpu.VMEM((MC3, 3 * Cm), bf16),   # vertically fused input taps
                pltpu.VMEM((MC3, 3 * Ch), bf16),   # vertically fused r*net taps
            ],
        ),
        compiler_params=pltpu.CompilerParams(
            dimension_semantics=("parallel",),
            vmem_limit_bytes=vmem_limit),
    )(flat, *weights)

    # crop the 2 pad columns and go back to NCHW
    out = out.reshape(B, H, Wp, Ch)[:, :, :W, :]
    return jnp.transpose(out, (0, 3, 1, 2))


# ---------------------- pure-JAX reference (NCHW, like torch) ----------------
def _conv2d_ref(x, w, b, pad):
    y = jax.lax.conv_general_dilated(
        x, w, window_strides=(1, 1), padding=((pad, pad), (pad, pad)),
        dimension_numbers=('NCHW', 'OIHW', 'NCHW'),
        precision=jax.lax.Precision.HIGHEST)
    return y + b[None, :, None, None]


def conv_gru_ref(net, inp, p):
    net_inp = jnp.concatenate([net, inp], axis=1)
    glo = jax.nn.sigmoid(_conv2d_ref(net, p['w_w'], p['w_b'], 0)) * net
    glo = jnp.mean(glo, axis=(2, 3), keepdims=True)
    z = jax.nn.sigmoid(_conv2d_ref(net_inp, p['convz_w'], p['convz_b'], 1)
                       + _conv2d_ref(glo, p['convz_glo_w'], p['convz_glo_b'], 0))
    r = jax.nn.sigmoid(_conv2d_ref(net_inp, p['convr_w'], p['convr_b'], 1)
                       + _conv2d_ref(glo, p['convr_glo_w'], p['convr_glo_b'], 0))
    q = jnp.tanh(_conv2d_ref(jnp.concatenate([r * net, inp], axis=1),
                             p['convq_w'], p['convq_b'], 1)
                 + _conv2d_ref(glo, p['convq_glo_w'], p['convq_glo_b'], 0))
    return (1.0 - z) * net + z * q


# ------------------------------ param init -----------------------------------
def init_params(key, h_planes, i_planes):
    cin = h_planes + i_planes
    ks = jax.random.split(key, 14)
    n = lambda k, shape, s: jax.random.normal(k, shape, jnp.float32) * s
    return {
        'convz_w': n(ks[0], (h_planes, cin, 3, 3), 0.1),
        'convz_b': n(ks[1], (h_planes,), 0.02),
        'convr_w': n(ks[2], (h_planes, cin, 3, 3), 0.1),
        'convr_b': n(ks[3], (h_planes,), 0.02),
        'convq_w': n(ks[4], (h_planes, cin, 3, 3), 0.1),
        'convq_b': n(ks[5], (h_planes,), 0.02),
        'w_w': n(ks[6], (h_planes, h_planes, 1, 1), 0.1),
        'w_b': n(ks[7], (h_planes,), 0.02),
        'convz_glo_w': n(ks[8], (h_planes, h_planes, 1, 1), 0.1),
        'convz_glo_b': n(ks[9], (h_planes,), 0.02),
        'convr_glo_w': n(ks[10], (h_planes, h_planes, 1, 1), 0.1),
        'convr_glo_b': n(ks[11], (h_planes,), 0.02),
        'convq_glo_w': n(ks[12], (h_planes, h_planes, 1, 1), 0.1),
        'convq_glo_b': n(ks[13], (h_planes,), 0.02),
    }


if __name__ == "__main__":
    h_planes, i_planes = 32, 32
    B, H, W = 2, 16, 16

    key = jax.random.PRNGKey(0)
    kp, kn, ki1, ki2 = jax.random.split(key, 4)
    params = init_params(kp, h_planes, i_planes)

    net = jax.random.normal(kn, (B, h_planes, H, W), jnp.float32)
    # the torch module takes *inputs and cats them on channels (glue in JAX)
    inp_a = jax.random.normal(ki1, (B, i_planes // 2, H, W), jnp.float32)
    inp_b = jax.random.normal(ki2, (B, i_planes // 2, H, W), jnp.float32)
    inp = jnp.concatenate([inp_a, inp_b], axis=1)

    out = conv_gru_pallas(net, inp, params)
    out = jax.block_until_ready(out)

    ref = conv_gru_ref(net, inp, params)
    # bf16 activations/weights on the conv & 1x1 paths (f32 accumulation):
    # tolerance matches that numeric regime.
    np.testing.assert_allclose(np.asarray(out), np.asarray(ref),
                               rtol=2.5e-2, atol=2.5e-2)
    print("KERNEL_OK")
</pallas_src>

<mosaic_0001>
module attributes {stable_mosaic.version = 11 : i64} {
  func.func @kernel(%arg0: i32, %arg1: memref<1x336x64xbf16, #tpu.memory_space<vmem>>, %arg2: memref<3x192x96xbf16, #tpu.memory_space<vmem>>, %arg3: memref<3x96x32xbf16, #tpu.memory_space<vmem>>, %arg4: memref<1x96xf32, #tpu.memory_space<vmem>>, %arg5: memref<32x32xbf16, #tpu.memory_space<vmem>>, %arg6: memref<1x32xf32, #tpu.memory_space<vmem>>, %arg7: memref<32x96xbf16, #tpu.memory_space<vmem>>, %arg8: memref<1x96xf32, #tpu.memory_space<vmem>>, %arg9: memref<1x288x32xf32, #tpu.memory_space<vmem>>, %arg10: memref<304x192xbf16, #tpu.memory_space<vmem>>, %arg11: memref<304x96xbf16, #tpu.memory_space<vmem>>) attributes {dimension_semantics = [#tpu.dimension_semantics<parallel>], iteration_bounds = array<i64: 2>, scalar_prefetch = 0 : i64, scratch_operands = 2 : i64, tpu.core_type = #tpu.core_type<tc>, window_params = [{transform_indices = @transform_0, window_bounds = array<i64: 1, 336, 64>}, {pipeline_mode = #tpu.pipeline_mode<synchronous>, transform_indices = @transform_1, window_bounds = array<i64: 3, 192, 96>}, {pipeline_mode = #tpu.pipeline_mode<synchronous>, transform_indices = @transform_2, window_bounds = array<i64: 3, 96, 32>}, {pipeline_mode = #tpu.pipeline_mode<synchronous>, transform_indices = @transform_3, window_bounds = array<i64: 1, 96>}, {pipeline_mode = #tpu.pipeline_mode<synchronous>, transform_indices = @transform_4, window_bounds = array<i64: 32, 32>}, {pipeline_mode = #tpu.pipeline_mode<synchronous>, transform_indices = @transform_5, window_bounds = array<i64: 1, 32>}, {pipeline_mode = #tpu.pipeline_mode<synchronous>, transform_indices = @transform_6, window_bounds = array<i64: 32, 96>}, {pipeline_mode = #tpu.pipeline_mode<synchronous>, transform_indices = @transform_7, window_bounds = array<i64: 1, 96>}, {transform_indices = @transform_8, window_bounds = array<i64: 1, 288, 32>}]} {
    %c0 = arith.constant 0 : index
    %c0_0 = arith.constant 0 : index
    %c0_1 = arith.constant 0 : index
    %0 = vector.load %arg1[%c0, %c0_0, %c0_1] : memref<1x336x64xbf16, #tpu.memory_space<vmem>>, vector<1x290x64xbf16>
    %1 = vector.shape_cast %0 : vector<1x290x64xbf16> to vector<290x64xbf16>
    %c0_2 = arith.constant 0 : index
    %c0_3 = arith.constant 0 : index
    %2 = vector.load %arg10[%c0_2, %c0_3] : memref<304x192xbf16, #tpu.memory_space<vmem>>, vector<290x64xbf16>
    tpu.vector_store %arg10[%c0_2, %c0_3], %1 {strides = array<i32>} : memref<304x192xbf16, #tpu.memory_space<vmem>>, vector<290x64xbf16>,
    %c0_4 = arith.constant 0 : index
    %c18 = arith.constant 18 : index
    %c0_5 = arith.constant 0 : index
    %3 = vector.load %arg1[%c0_4, %c18, %c0_5] : memref<1x336x64xbf16, #tpu.memory_space<vmem>>, vector<1x290x64xbf16>
    %4 = vector.shape_cast %3 : vector<1x290x64xbf16> to vector<290x64xbf16>
    %c0_6 = arith.constant 0 : index
    %c64 = arith.constant 64 : index
    %5 = vector.load %arg10[%c0_6, %c64] : memref<304x192xbf16, #tpu.memory_space<vmem>>, vector<290x64xbf16>
    tpu.vector_store %arg10[%c0_6, %c64], %4 {strides = array<i32>} : memref<304x192xbf16, #tpu.memory_space<vmem>>, vector<290x64xbf16>,
    %c0_7 = arith.constant 0 : index
    %c36 = arith.constant 36 : index
    %c0_8 = arith.constant 0 : index
    %6 = vector.load %arg1[%c0_7, %c36, %c0_8] : memref<1x336x64xbf16, #tpu.memory_space<vmem>>, vector<1x290x64xbf16>
    %7 = vector.shape_cast %6 : vector<1x290x64xbf16> to vector<290x64xbf16>
    %c0_9 = arith.constant 0 : index
    %c128 = arith.constant 128 : index
    %8 = vector.load %arg10[%c0_9, %c128] : memref<304x192xbf16, #tpu.memory_space<vmem>>, vector<290x64xbf16>
    tpu.vector_store %arg10[%c0_9, %c128], %7 {strides = array<i32>} : memref<304x192xbf16, #tpu.memory_space<vmem>>, vector<290x64xbf16>,
    %c0_10 = arith.constant 0 : index
    %c19 = arith.constant 19 : index
    %c0_11 = arith.constant 0 : index
    %9 = vector.load %arg1[%c0_10, %c19, %c0_11] : memref<1x336x64xbf16, #tpu.memory_space<vmem>>, vector<1x288x32xbf16>
    %10 = vector.shape_cast %9 : vector<1x288x32xbf16> to vector<288x32xbf16>
    %11 = arith.extf %10 : vector<288x32xbf16> to vector<288x32xf32>
    %c0_12 = arith.constant 0 : index
    %c0_13 = arith.constant 0 : index
    %12 = vector.load %arg5[%c0_12, %c0_13] : memref<32x32xbf16, #tpu.memory_space<vmem>>, vector<32x32xbf16>
    %cst = arith.constant dense<0.000000e+00> : vector<288x32xf32>
    %13 = tpu.matmul %10, %12, %cst {dimension_numbers = #tpu.dot_dimension_numbers<[1], [0], [0], [1], [0, 0, 1, 1], [], []>} : vector<288x32xbf16>, vector<32x32xbf16>, vector<288x32xf32> -> vector<288x32xf32>
    %c0_14 = arith.constant 0 : index
    %c0_15 = arith.constant 0 : index
    %14 = vector.load %arg6[%c0_14, %c0_15] : memref<1x32xf32, #tpu.memory_space<vmem>>, vector<1x32xf32>
    %15 = vector.broadcast %14 : vector<1x32xf32> to vector<288x32xf32>
    %16 = arith.addf %13, %15 : vector<288x32xf32>
    %17 = arith.negf %16 : vector<288x32xf32>
    %18 = math.exp %17 : vector<288x32xf32>
    %cst_16 = arith.constant 1.000000e+00 : f32
    %19 = vector.broadcast %cst_16 : f32 to vector<288x32xf32>
    %20 = arith.addf %19, %18 : vector<288x32xf32>
    %21 = arith.divf %19, %20 : vector<288x32xf32>
    %22 = arith.mulf %21, %11 : vector<288x32xf32>
    %cst_17 = arith.constant dense<0.000000e+00> : vector<32xf32>
    %23 = vector.multi_reduction <add>, %22, %cst_17 [0] : vector<288x32xf32> to vector<32xf32>
    %24 = vector.shape_cast %23 : vector<32xf32> to vector<1x32xf32>
    %cst_18 = arith.constant 3.906250e-03 : f32
    %25 = vector.broadcast %cst_18 : f32 to vector<1x32xf32>
    %26 = arith.mulf %24, %25 : vector<1x32xf32>
    %27 = arith.truncf %26 : vector<1x32xf32> to vector<1x32xbf16>
    %c0_19 = arith.constant 0 : index
    %c0_20 = arith.constant 0 : index
    %28 = vector.load %arg7[%c0_19, %c0_20] : memref<32x96xbf16, #tpu.memory_space<vmem>>, vector<32x96xbf16>
    %cst_21 = arith.constant dense<0.000000e+00> : vector<1x96xf32>
    %29 = tpu.matmul %27, %28, %cst_21 {dimension_numbers = #tpu.dot_dimension_numbers<[1], [0], [0], [1], [0, 0, 1, 1], [], []>} : vector<1x32xbf16>, vector<32x96xbf16>, vector<1x96xf32> -> vector<1x96xf32>
    %c0_22 = arith.constant 0 : index
    %c0_23 = arith.constant 0 : index
    %30 = vector.load %arg8[%c0_22, %c0_23] : memref<1x96xf32, #tpu.memory_space<vmem>>, vector<1x96xf32>
    %31 = arith.addf %29, %30 : vector<1x96xf32>
    %c0_24 = arith.constant 0 : index
    %c0_25 = arith.constant 0 : index
    %32 = vector.load %arg10[%c0_24, %c0_25] : memref<304x192xbf16, #tpu.memory_space<vmem>>, vector<288x192xbf16>
    %c0_26 = arith.constant 0 : index
    %c0_27 = arith.constant 0 : index
    %c0_28 = arith.constant 0 : index
    %33 = vector.load %arg2[%c0_26, %c0_27, %c0_28] : memref<3x192x96xbf16, #tpu.memory_space<vmem>>, vector<1x192x96xbf16>
    %34 = vector.shape_cast %33 : vector<1x192x96xbf16> to vector<192x96xbf16>
    %cst_29 = arith.constant dense<0.000000e+00> : vector<288x96xf32>
    %35 = tpu.matmul %32, %34, %cst_29 {dimension_numbers = #tpu.dot_dimension_numbers<[1], [0], [0], [1], [0, 0, 1, 1], [], []>} : vector<288x192xbf16>, vector<192x96xbf16>, vector<288x96xf32> -> vector<288x96xf32>
    %c1 = arith.constant 1 : index
    %c0_30 = arith.constant 0 : index
    %36 = vector.load %arg10[%c1, %c0_30] : memref<304x192xbf16, #tpu.memory_space<vmem>>, vector<288x192xbf16>
    %c1_31 = arith.constant 1 : index
    %c0_32 = arith.constant 0 : index
    %c0_33 = arith.constant 0 : index
    %37 = vector.load %arg2[%c1_31, %c0_32, %c0_33] : memref<3x192x96xbf16, #tpu.memory_space<vmem>>, vector<1x192x96xbf16>
    %38 = vector.shape_cast %37 : vector<1x192x96xbf16> to vector<192x96xbf16>
    %cst_34 = arith.constant dense<0.000000e+00> : vector<288x96xf32>
    %39 = tpu.matmul %36, %38, %cst_34 {dimension_numbers = #tpu.dot_dimension_numbers<[1], [0], [0], [1], [0, 0, 1, 1], [], []>} : vector<288x192xbf16>, vector<192x96xbf16>, vector<288x96xf32> -> vector<288x96xf32>
    %40 = arith.addf %35, %39 : vector<288x96xf32>
    %c2 = arith.constant 2 : index
    %c0_35 = arith.constant 0 : index
    %41 = vector.load %arg10[%c2, %c0_35] : memref<304x192xbf16, #tpu.memory_space<vmem>>, vector<288x192xbf16>
    %c2_36 = arith.constant 2 : index
    %c0_37 = arith.constant 0 : index
    %c0_38 = arith.constant 0 : index
    %42 = vector.load %arg2[%c2_36, %c0_37, %c0_38] : memref<3x192x96xbf16, #tpu.memory_space<vmem>>, vector<1x192x96xbf16>
    %43 = vector.shape_cast %42 : vector<1x192x96xbf16> to vector<192x96xbf16>
    %cst_39 = arith.constant dense<0.000000e+00> : vector<288x96xf32>
    %44 = tpu.matmul %41, %43, %cst_39 {dimension_numbers = #tpu.dot_dimension_numbers<[1], [0], [0], [1], [0, 0, 1, 1], [], []>} : vector<288x192xbf16>, vector<192x96xbf16>, vector<288x96xf32> -> vector<288x96xf32>
    %45 = arith.addf %40, %44 : vector<288x96xf32>
    %c0_40 = arith.constant 0 : index
    %c0_41 = arith.constant 0 : index
    %46 = vector.load %arg4[%c0_40, %c0_41] : memref<1x96xf32, #tpu.memory_space<vmem>>, vector<1x96xf32>
    %47 = arith.addf %46, %31 : vector<1x96xf32>
    %48 = vector.broadcast %47 : vector<1x96xf32> to vector<288x96xf32>
    %49 = arith.addf %45, %48 : vector<288x96xf32>
    %50 = vector.extract_strided_slice %49 {offsets = [0, 0], sizes = [288, 32], strides = [1, 1]} : vector<288x96xf32> to vector<288x32xf32>
    %51 = arith.negf %50 : vector<288x32xf32>
    %52 = math.exp %51 : vector<288x32xf32>
    %cst_42 = arith.constant 1.000000e+00 : f32
    %53 = vector.broadcast %cst_42 : f32 to vector<288x32xf32>
    %54 = arith.addf %53, %52 : vector<288x32xf32>
    %55 = arith.divf %53, %54 : vector<288x32xf32>
    %56 = vector.extract_strided_slice %49 {offsets = [0, 32], sizes = [288, 32], strides = [1, 1]} : vector<288x96xf32> to vector<288x32xf32>
    %57 = arith.negf %56 : vector<288x32xf32>
    %58 = math.exp %57 : vector<288x32xf32>
    %cst_43 = arith.constant 1.000000e+00 : f32
    %59 = vector.broadcast %cst_43 : f32 to vector<288x32xf32>
    %60 = arith.addf %59, %58 : vector<288x32xf32>
    %61 = arith.divf %59, %60 : vector<288x32xf32>
    %62 = arith.mulf %61, %11 : vector<288x32xf32>
    %63 = arith.truncf %62 : vector<288x32xf32> to vector<288x32xbf16>
    %cst_44 = arith.constant 0.000000e+00 : bf16
    %64 = vector.broadcast %cst_44 : bf16 to vector<19x32xbf16>
    %c0_45 = arith.constant 0 : index
    %c0_46 = arith.constant 0 : index
    %65 = vector.load %arg11[%c0_45, %c0_46] : memref<304x96xbf16, #tpu.memory_space<vmem>>, vector<19x32xbf16>
    tpu.vector_store %arg11[%c0_45, %c0_46], %64 {strides = array<i32>} : memref<304x96xbf16, #tpu.memory_space<vmem>>, vector<19x32xbf16>,
    %66 = vector.extract_strided_slice %64 {offsets = [0, 0], sizes = [1, 32], strides = [1, 1]} : vector<19x32xbf16> to vector<1x32xbf16>
    %c0_47 = arith.constant 0 : index
    %c32 = arith.constant 32 : index
    %67 = vector.load %arg11[%c0_47, %c32] : memref<304x96xbf16, #tpu.memory_space<vmem>>, vector<1x32xbf16>
    tpu.vector_store %arg11[%c0_47, %c32], %66 {strides = array<i32>} : memref<304x96xbf16, #tpu.memory_space<vmem>>, vector<1x32xbf16>,
    %68 = vector.extract_strided_slice %64 {offsets = [0, 0], sizes = [1, 32], strides = [1, 1]} : vector<19x32xbf16> to vector<1x32xbf16>
    %c289 = arith.constant 289 : index
    %c32_48 = arith.constant 32 : index
    %69 = vector.load %arg11[%c289, %c32_48] : memref<304x96xbf16, #tpu.memory_space<vmem>>, vector<1x32xbf16>
    tpu.vector_store %arg11[%c289, %c32_48], %68 {strides = array<i32>} : memref<304x96xbf16, #tpu.memory_space<vmem>>, vector<1x32xbf16>,
    %c271 = arith.constant 271 : index
    %c64_49 = arith.constant 64 : index
    %70 = vector.load %arg11[%c271, %c64_49] : memref<304x96xbf16, #tpu.memory_space<vmem>>, vector<19x32xbf16>
    tpu.vector_store %arg11[%c271, %c64_49], %64 {strides = array<i32>} : memref<304x96xbf16, #tpu.memory_space<vmem>>, vector<19x32xbf16>,
    %71 = vector.extract_strided_slice %63 {offsets = [0, 0], sizes = [271, 32], strides = [1, 1]} : vector<288x32xbf16> to vector<271x32xbf16>
    %c19_50 = arith.constant 19 : index
    %c0_51 = arith.constant 0 : index
    %72 = vector.load %arg11[%c19_50, %c0_51] : memref<304x96xbf16, #tpu.memory_space<vmem>>, vector<271x32xbf16>
    tpu.vector_store %arg11[%c19_50, %c0_51], %71 {strides = array<i32>} : memref<304x96xbf16, #tpu.memory_space<vmem>>, vector<271x32xbf16>,
    %c1_52 = arith.constant 1 : index
    %c32_53 = arith.constant 32 : index
    %73 = vector.load %arg11[%c1_52, %c32_53] : memref<304x96xbf16, #tpu.memory_space<vmem>>, vector<288x32xbf16>
    tpu.vector_store %arg11[%c1_52, %c32_53], %63 {strides = array<i32>} : memref<304x96xbf16, #tpu.memory_space<vmem>>, vector<288x32xbf16>,
    %74 = vector.extract_strided_slice %63 {offsets = [17, 0], sizes = [271, 32], strides = [1, 1]} : vector<288x32xbf16> to vector<271x32xbf16>
    %c0_54 = arith.constant 0 : index
    %c64_55 = arith.constant 64 : index
    %75 = vector.load %arg11[%c0_54, %c64_55] : memref<304x96xbf16, #tpu.memory_space<vmem>>, vector<271x32xbf16>
    tpu.vector_store %arg11[%c0_54, %c64_55], %74 {strides = array<i32>} : memref<304x96xbf16, #tpu.memory_space<vmem>>, vector<271x32xbf16>,
    %76 = vector.extract_strided_slice %49 {offsets = [0, 64], sizes = [288, 32], strides = [1, 1]} : vector<288x96xf32> to vector<288x32xf32>
    %c0_56 = arith.constant 0 : index
    %c0_57 = arith.constant 0 : index
    %77 = vector.load %arg11[%c0_56, %c0_57] : memref<304x96xbf16, #tpu.memory_space<vmem>>, vector<288x96xbf16>
    %c0_58 = arith.constant 0 : index
    %c0_59 = arith.constant 0 : index
    %c0_60 = arith.constant 0 : index
    %78 = vector.load %arg3[%c0_58, %c0_59, %c0_60] : memref<3x96x32xbf16, #tpu.memory_space<vmem>>, vector<1x96x32xbf16>
    %79 = vector.shape_cast %78 : vector<1x96x32xbf16> to vector<96x32xbf16>
    %cst_61 = arith.constant dense<0.000000e+00> : vector<288x32xf32>
    %80 = tpu.matmul %77, %79, %cst_61 {dimension_numbers = #tpu.dot_dimension_numbers<[1], [0], [0], [1], [0, 0, 1, 1], [], []>} : vector<288x96xbf16>, vector<96x32xbf16>, vector<288x32xf32> -> vector<288x32xf32>
    %81 = arith.addf %76, %80 : vector<288x32xf32>
    %c1_62 = arith.constant 1 : index
    %c0_63 = arith.constant 0 : index
    %82 = vector.load %arg11[%c1_62, %c0_63] : memref<304x96xbf16, #tpu.memory_space<vmem>>, vector<288x96xbf16>
    %c1_64 = arith.constant 1 : index
    %c0_65 = arith.constant 0 : index
    %c0_66 = arith.constant 0 : index
    %83 = vector.load %arg3[%c1_64, %c0_65, %c0_66] : memref<3x96x32xbf16, #tpu.memory_space<vmem>>, vector<1x96x32xbf16>
    %84 = vector.shape_cast %83 : vector<1x96x32xbf16> to vector<96x32xbf16>
    %cst_67 = arith.constant dense<0.000000e+00> : vector<288x32xf32>
    %85 = tpu.matmul %82, %84, %cst_67 {dimension_numbers = #tpu.dot_dimension_numbers<[1], [0], [0], [1], [0, 0, 1, 1], [], []>} : vector<288x96xbf16>, vector<96x32xbf16>, vector<288x32xf32> -> vector<288x32xf32>
    %86 = arith.addf %81, %85 : vector<288x32xf32>
    %c2_68 = arith.constant 2 : index
    %c0_69 = arith.constant 0 : index
    %87 = vector.load %arg11[%c2_68, %c0_69] : memref<304x96xbf16, #tpu.memory_space<vmem>>, vector<288x96xbf16>
    %c2_70 = arith.constant 2 : index
    %c0_71 = arith.constant 0 : index
    %c0_72 = arith.constant 0 : index
    %88 = vector.load %arg3[%c2_70, %c0_71, %c0_72] : memref<3x96x32xbf16, #tpu.memory_space<vmem>>, vector<1x96x32xbf16>
    %89 = vector.shape_cast %88 : vector<1x96x32xbf16> to vector<96x32xbf16>
    %cst_73 = arith.constant dense<0.000000e+00> : vector<288x32xf32>
    %90 = tpu.matmul %87, %89, %cst_73 {dimension_numbers = #tpu.dot_dimension_numbers<[1], [0], [0], [1], [0, 0, 1, 1], [], []>} : vector<288x96xbf16>, vector<96x32xbf16>, vector<288x32xf32> -> vector<288x32xf32>
    %91 = arith.addf %86, %90 : vector<288x32xf32>
    %92 = math.tanh %91 : vector<288x32xf32>
    %cst_74 = arith.constant 1.000000e+00 : f32
    %93 = vector.broadcast %cst_74 : f32 to vector<288x32xf32>
    %94 = arith.subf %93, %55 : vector<288x32xf32>
    %95 = arith.mulf %94, %11 : vector<288x32xf32>
    %96 = arith.mulf %55, %92 : vector<288x32xf32>
    %97 = arith.addf %95, %96 : vector<288x32xf32>
    %c0_75 = arith.constant 0 : index
    %c0_76 = arith.constant 0 : index
    %c0_77 = arith.constant 0 : index
    %98 = vector.load %arg9[%c0_75, %c0_76, %c0_77] : memref<1x288x32xf32, #tpu.memory_space<vmem>>, vector<1x288x32xf32>
    %99 = vector.shape_cast %98 : vector<1x288x32xf32> to vector<288x32xf32>
    %100 = vector.shape_cast %97 : vector<288x32xf32> to vector<1x288x32xf32>
    tpu.vector_store %arg9[%c0_75, %c0_76, %c0_77], %100 {strides = array<i32>} : memref<1x288x32xf32, #tpu.memory_space<vmem>>, vector<1x288x32xf32>,
    return
  }
  func.func @transform_0(%arg0: i32) -> (i32, i32, i32) {
    %c0_i32 = arith.constant 0 : i32
    %c0_i32_0 = arith.constant 0 : i32
    %c0_i32_1 = arith.constant 0 : i32
    return %arg0, %c0_i32, %c0_i32_0 : i32, i32, i32
  }
  func.func @transform_1(%arg0: i32) -> (i32, i32, i32) {
    %c0_i32 = arith.constant 0 : i32
    %c0_i32_0 = arith.constant 0 : i32
    %c0_i32_1 = arith.constant 0 : i32
    %c0_i32_2 = arith.constant 0 : i32
    return %c0_i32, %c0_i32_0, %c0_i32_1 : i32, i32, i32
  }
  func.func @transform_2(%arg0: i32) -> (i32, i32, i32) {
    %c0_i32 = arith.constant 0 : i32
    %c0_i32_0 = arith.constant 0 : i32
    %c0_i32_1 = arith.constant 0 : i32
    %c0_i32_2 = arith.constant 0 : i32
    return %c0_i32, %c0_i32_0, %c0_i32_1 : i32, i32, i32
  }
  func.func @transform_3(%arg0: i32) -> (i32, i32) {
    %c0_i32 = arith.constant 0 : i32
    %c0_i32_0 = arith.constant 0 : i32
    %c0_i32_1 = arith.constant 0 : i32
    return %c0_i32, %c0_i32_0 : i32, i32
  }
  func.func @transform_4(%arg0: i32) -> (i32, i32) {
    %c0_i32 = arith.constant 0 : i32
    %c0_i32_0 = arith.constant 0 : i32
    %c0_i32_1 = arith.constant 0 : i32
    return %c0_i32, %c0_i32_0 : i32, i32
  }
  func.func @transform_5(%arg0: i32) -> (i32, i32) {
    %c0_i32 = arith.constant 0 : i32
    %c0_i32_0 = arith.constant 0 : i32
    %c0_i32_1 = arith.constant 0 : i32
    return %c0_i32, %c0_i32_0 : i32, i32
  }
  func.func @transform_6(%arg0: i32) -> (i32, i32) {
    %c0_i32 = arith.constant 0 : i32
    %c0_i32_0 = arith.constant 0 : i32
    %c0_i32_1 = arith.constant 0 : i32
    return %c0_i32, %c0_i32_0 : i32, i32
  }
  func.func @transform_7(%arg0: i32) -> (i32, i32) {
    %c0_i32 = arith.constant 0 : i32
    %c0_i32_0 = arith.constant 0 : i32
    %c0_i32_1 = arith.constant 0 : i32
    return %c0_i32, %c0_i32_0 : i32, i32
  }
  func.func @transform_8(%arg0: i32) -> (i32, i32, i32) {
    %c0_i32 = arith.constant 0 : i32
    %c0_i32_0 = arith.constant 0 : i32
    %c0_i32_1 = arith.constant 0 : i32
    return %arg0, %c0_i32, %c0_i32_0 : i32, i32, i32
  }
}

</mosaic_0001>

<llo_original>
// kernel: tpu_custom_call.1
$region0: #{tpu_custom_call.1}
  #allocation0 [shape = 'u32[]', space=smem, size = 0x4, offset = 0x4, fixed_abs, tag = 'smem constant byte address 0x4 - core index']
  #allocation1 [shape = 'u32[144,128]{1,0:T(1,128)}', space=vmem, size = 0x12000, scoped, tag = 'internal scratch']
  #allocation2 [shape = 'bf16[304,192]{1,0:T(16,128)(2,1)}', space=vmem, size = 0x26000, scoped, tag = 'scratch operand']
  #allocation3 [shape = 'bf16[304,96]{1,0:T(16,128)(2,1)}', space=vmem, size = 0x13000, scoped, tag = 'scratch operand']
  %s0 = inlined_call_operand.vmem [shape: bf16[2,336,64], index: 0, kind: input, shape index: {}]
  %s1 = inlined_call_operand.vmem [shape: bf16[3,192,96], index: 1, kind: input, shape index: {}]
  %s2 = inlined_call_operand.vmem [shape: bf16[3,96,32], index: 2, kind: input, shape index: {}]
  %s3 = inlined_call_operand.vmem [shape: f32[1,96], index: 3, kind: input, shape index: {}]
  %s4 = inlined_call_operand.vmem [shape: bf16[32,32], index: 4, kind: input, shape index: {}]
  %s5 = inlined_call_operand.vmem [shape: f32[1,32], index: 5, kind: input, shape index: {}]
  %s6 = inlined_call_operand.vmem [shape: bf16[32,96], index: 6, kind: input, shape index: {}]
  %s7 = inlined_call_operand.vmem [shape: f32[1,96], index: 7, kind: input, shape index: {}]
  %s8 = inlined_call_operand.vmem [shape: f32[2,288,32], index: 8, kind: output, shape index: {}]
  %s9 = sld [smem:[#allocation0]]
  $region65: #{tpu_custom_call.1} parent=0
    _
  %s11 = ssub.s32 1, %s9
  %s12 = scalar_select 0, %s11, %s9
  loop: start=0, step=1, limit=4
  $region2: #{tpu_custom_call.1} parent=0 // loop_pre_header
    _
  $region3: #{tpu_custom_call.1} parent=0 // loop_header
    %s14 = sphi 0, %s18
    %p15 = scmp.ge.s32.totalorder %s14, 4
    %s24 = sphi 0, %s26
    %s27 = sphi 0, %s24
    %s28 = sphi 0, %s27
    %s44 = sphi 0, %s28
    %s48 = sphi 0, %s48
    %s50 = sphi 0, %s48
    %s51 = sphi 0, %s50
    %s65 = sphi 0, %s51
    %s69 = sphi 0, %s69
    %s71 = sphi 0, %s69
    %s72 = sphi 0, %s71
    %s86 = sphi 0, %s72
    %s90 = sphi 0, %s90
    %s92 = sphi 0, %s90
    %s93 = sphi 0, %s92
    %s107 = sphi 0, %s93
    %s111 = sphi 0, %s111
    %s113 = sphi 0, %s111
    %s114 = sphi 0, %s113
    %s128 = sphi 0, %s114
    %s132 = sphi 0, %s132
    %s134 = sphi 0, %s132
    %s135 = sphi 0, %s134
    %s149 = sphi 0, %s135
    %s153 = sphi 0, %s153
    %s155 = sphi 0, %s153
    %s156 = sphi 0, %s155
    %s170 = sphi 0, %s156
    %s174 = sphi 0, %s174
    %s176 = sphi 0, %s174
    %s177 = sphi 0, %s176
    %s191 = sphi 0, %s177
    %s197 = sphi 0, %s199
    %s200 = sphi 0, %s197
    %s201 = sphi 0, %s200
    %s217 = sphi 0, %s201
  $region4: #{tpu_custom_call.1} parent=0 // loop_header_branch
    %17 = sbr.rel (%p15) target = $region8
  $region5: #{tpu_custom_call.1} parent=0 // loop_body
    %s19 = ssub.s32 %s14, 1
    %s20 = ssub.s32 %s14, 2
    %s21 = sadd.s32 %s14, 1
    %s22 = ssub.s32 %s14, %s21
    %p23 = scmp.eq.s32.totalorder %s22, 0
    %s25 = sadd.s32 %s24, 1
    %s26 = scalar_select %p23, %s24, %s25
    %p29 = pneg %p23
    %p30 = scmp.eq.s32.totalorder %s14, 1
    %p31 = por %p29, %p30
    %p32 = scmp.ne.s32.totalorder %s24, %s27
    %p33 = scmp.eq.s32.totalorder %s14, 0
    %p34 = por %p32, %p33
    %p35 = scmp.ne.s32.totalorder %s24, %s27
    %p36 = scmp.eq.s32.totalorder %s19, 1
    %p37 = por %p35, %p36
    %p38 = scmp.ne.s32.totalorder %s27, %s28
    %p39 = scmp.eq.s32.totalorder %s19, 0
    %p40 = por %p38, %p39
    %p41 = scmp.ne.s32.totalorder %s27, %s28
    %p42 = scmp.eq.s32.totalorder %s20, 1
    %p43 = por %p41, %p42
    %p45 = scmp.ne.s32.totalorder %s28, %s44
    %p46 = scmp.eq.s32.totalorder %s20, 0
    %p47 = por %p45, %p46
    %s49 = sadd.s32 %s48, 1
    %p52 = scmp.eq.s32.totalorder %s14, 1
    %p53 = scmp.ne.s32.totalorder %s48, %s50
    %p54 = scmp.eq.s32.totalorder %s14, 0
    %p55 = por %p53, %p54
    %p56 = scmp.ne.s32.totalorder %s48, %s50
    %p57 = scmp.eq.s32.totalorder %s19, 1
    %p58 = por %p56, %p57
    %p59 = scmp.ne.s32.totalorder %s50, %s51
    %p60 = scmp.eq.s32.totalorder %s19, 0
    %p61 = por %p59, %p60
    %p62 = scmp.ne.s32.totalorder %s50, %s51
    %p63 = scmp.eq.s32.totalorder %s20, 1
    %p64 = por %p62, %p63
    %p66 = scmp.ne.s32.totalorder %s51, %s65
    %p67 = scmp.eq.s32.totalorder %s20, 0
    %p68 = por %p66, %p67
    %s70 = sadd.s32 %s69, 1
    %p73 = scmp.eq.s32.totalorder %s14, 1
    %p74 = scmp.ne.s32.totalorder %s69, %s71
    %p75 = scmp.eq.s32.totalorder %s14, 0
    %p76 = por %p74, %p75
    %p77 = scmp.ne.s32.totalorder %s69, %s71
    %p78 = scmp.eq.s32.totalorder %s19, 1
    %p79 = por %p77, %p78
    %p80 = scmp.ne.s32.totalorder %s71, %s72
    %p81 = scmp.eq.s32.totalorder %s19, 0
    %p82 = por %p80, %p81
    %p83 = scmp.ne.s32.totalorder %s71, %s72
    %p84 = scmp.eq.s32.totalorder %s20, 1
    %p85 = por %p83, %p84
    %p87 = scmp.ne.s32.totalorder %s72, %s86
    %p88 = scmp.eq.s32.totalorder %s20, 0
    %p89 = por %p87, %p88
    %s91 = sadd.s32 %s90, 1
    %p94 = scmp.eq.s32.totalorder %s14, 1
    %p95 = scmp.ne.s32.totalorder %s90, %s92
    %p96 = scmp.eq.s32.totalorder %s14, 0
    %p97 = por %p95, %p96
    %p98 = scmp.ne.s32.totalorder %s90, %s92
    %p99 = scmp.eq.s32.totalorder %s19, 1
    %p100 = por %p98, %p99
    %p101 = scmp.ne.s32.totalorder %s92, %s93
    %p102 = scmp.eq.s32.totalorder %s19, 0
    %p103 = por %p101, %p102
    %p104 = scmp.ne.s32.totalorder %s92, %s93
    %p105 = scmp.eq.s32.totalorder %s20, 1
    %p106 = por %p104, %p105
    %p108 = scmp.ne.s32.totalorder %s93, %s107
    %p109 = scmp.eq.s32.totalorder %s20, 0
    %p110 = por %p108, %p109
    %s112 = sadd.s32 %s111, 1
    %p115 = scmp.eq.s32.totalorder %s14, 1
    %p116 = scmp.ne.s32.totalorder %s111, %s113
    %p117 = scmp.eq.s32.totalorder %s14, 0
    %p118 = por %p116, %p117
    %p119 = scmp.ne.s32.totalorder %s111, %s113
    %p120 = scmp.eq.s32.totalorder %s19, 1
    %p121 = por %p119, %p120
    %p122 = scmp.ne.s32.totalorder %s113, %s114
    %p123 = scmp.eq.s32.totalorder %s19, 0
    %p124 = por %p122, %p123
    %p125 = scmp.ne.s32.totalorder %s113, %s114
    %p126 = scmp.eq.s32.totalorder %s20, 1
    %p127 = por %p125, %p126
    %p129 = scmp.ne.s32.totalorder %s114, %s128
    %p130 = scmp.eq.s32.totalorder %s20, 0
    %p131 = por %p129, %p130
    %s133 = sadd.s32 %s132, 1
    %p136 = scmp.eq.s32.totalorder %s14, 1
    %p137 = scmp.ne.s32.totalorder %s132, %s134
    %p138 = scmp.eq.s32.totalorder %s14, 0
    %p139 = por %p137, %p138
    %p140 = scmp.ne.s32.totalorder %s132, %s134
    %p141 = scmp.eq.s32.totalorder %s19, 1
    %p142 = por %p140, %p141
    %p143 = scmp.ne.s32.totalorder %s134, %s135
    %p144 = scmp.eq.s32.totalorder %s19, 0
    %p145 = por %p143, %p144
    %p146 = scmp.ne.s32.totalorder %s134, %s135
    %p147 = scmp.eq.s32.totalorder %s20, 1
    %p148 = por %p146, %p147
    %p150 = scmp.ne.s32.totalorder %s135, %s149
    %p151 = scmp.eq.s32.totalorder %s20, 0
    %p152 = por %p150, %p151
    %s154 = sadd.s32 %s153, 1
    %p157 = scmp.eq.s32.totalorder %s14, 1
    %p158 = scmp.ne.s32.totalorder %s153, %s155
    %p159 = scmp.eq.s32.totalorder %s14, 0
    %p160 = por %p158, %p159
    %p161 = scmp.ne.s32.totalorder %s153, %s155
    %p162 = scmp.eq.s32.totalorder %s19, 1
    %p163 = por %p161, %p162
    %p164 = scmp.ne.s32.totalorder %s155, %s156
    %p165 = scmp.eq.s32.totalorder %s19, 0
    %p166 = por %p164, %p165
    %p167 = scmp.ne.s32.totalorder %s155, %s156
    %p168 = scmp.eq.s32.totalorder %s20, 1
    %p169 = por %p167, %p168
    %p171 = scmp.ne.s32.totalorder %s156, %s170
    %p172 = scmp.eq.s32.totalorder %s20, 0
    %p173 = por %p171, %p172
    %s175 = sadd.s32 %s174, 1
    %p178 = scmp.eq.s32.totalorder %s14, 1
    %p179 = scmp.ne.s32.totalorder %s174, %s176
    %p180 = scmp.eq.s32.totalorder %s14, 0
    %p181 = por %p179, %p180
    %p182 = scmp.ne.s32.totalorder %s174, %s176
    %p183 = scmp.eq.s32.totalorder %s19, 1
    %p184 = por %p182, %p183
    %p185 = scmp.ne.s32.totalorder %s176, %s177
    %p186 = scmp.eq.s32.totalorder %s19, 0
    %p187 = por %p185, %p186
    %p188 = scmp.ne.s32.totalorder %s176, %s177
    %p189 = scmp.eq.s32.totalorder %s20, 1
    %p190 = por %p188, %p189
    %p192 = scmp.ne.s32.totalorder %s177, %s191
    %p193 = scmp.eq.s32.totalorder %s20, 0
    %p194 = por %p192, %p193
    %s195 = ssub.s32 %s14, %s21
    %p196 = scmp.eq.s32.totalorder %s195, 0
    %s198 = sadd.s32 %s197, 1
    %s199 = scalar_select %p196, %s197, %s198
    %p202 = pneg %p196
    %p203 = scmp.eq.s32.totalorder %s14, 1
    %p204 = por %p202, %p203
    %p205 = scmp.ne.s32.totalorder %s197, %s200
    %p206 = scmp.eq.s32.totalorder %s14, 0
    %p207 = por %p205, %p206
    %p208 = scmp.ne.s32.totalorder %s197, %s200
    %p209 = scmp.eq.s32.totalorder %s19, 1
    %p210 = por %p208, %p209
    %p211 = scmp.ne.s32.totalorder %s200, %s201
    %p212 = scmp.eq.s32.totalorder %s19, 0
    %p213 = por %p211, %p212
    %p214 = scmp.ne.s32.totalorder %s200, %s201
    %p215 = scmp.eq.s32.totalorder %s20, 1
    %p216 = por %p214, %p215
    %p218 = scmp.ne.s32.totalorder %s201, %s217
    %p219 = scmp.eq.s32.totalorder %s20, 0
    %p220 = por %p218, %p219
    %p221 = scmp.le.s32.totalorder 1, %s14
    %p222 = scmp.lt.s32.totalorder %s14, 3
    %p223 = pnand %p221, %p222
    %p224 = pneg %p223
    // Predicated region
    $region9: #{tpu_custom_call.1} parent=5 // pred_check
      _
    $region10: #{tpu_custom_call.1} parent=5 // pred_check_branch
      %226 = sbr.rel (%p223) target = $region12
    $region11: #{tpu_custom_call.1} parent=5 // pred_region
      %s227 = ssub.s32 %s14, 1
      // Predicated region
      $region13: #{tpu_custom_call.1} parent=11 // pred_check
        %p228 = pneg %p61
      $region14: #{tpu_custom_call.1} parent=11 // pred_check_branch
        %230 = sbr.rel (%p228) target = $region16
      $region15: #{tpu_custom_call.1} parent=11 // pred_region
        _
      $region16: #{tpu_custom_call.1} parent=11 // pred_fallthru
        _
      // Predicated region
      $region17: #{tpu_custom_call.1} parent=11 // pred_check
        %p231 = pneg %p82
      $region18: #{tpu_custom_call.1} parent=11 // pred_check_branch
        %233 = sbr.rel (%p231) target = $region20
      $region19: #{tpu_custom_call.1} parent=11 // pred_region
        _
      $region20: #{tpu_custom_call.1} parent=11 // pred_fallthru
        _
      // Predicated region
      $region21: #{tpu_custom_call.1} parent=11 // pred_check
        %p234 = pneg %p103
      $region22: #{tpu_custom_call.1} parent=11 // pred_check_branch
        %236 = sbr.rel (%p234) target = $region24
      $region23: #{tpu_custom_call.1} parent=11 // pred_region
        _
      $region24: #{tpu_custom_call.1} parent=11 // pred_fallthru
        _
      // Predicated region
      $region25: #{tpu_custom_call.1} parent=11 // pred_check
        %p237 = pneg %p124
      $region26: #{tpu_custom_call.1} parent=11 // pred_check_branch
        %239 = sbr.rel (%p237) target = $region28
      $region27: #{tpu_custom_call.1} parent=11 // pred_region
        _
      $region28: #{tpu_custom_call.1} parent=11 // pred_fallthru
        _
      // Predicated region
      $region29: #{tpu_custom_call.1} parent=11 // pred_check
        %p240 = pneg %p145
      $region30: #{tpu_custom_call.1} parent=11 // pred_check_branch
        %242 = sbr.rel (%p240) target = $region32
      $region31: #{tpu_custom_call.1} parent=11 // pred_region
        _
      $region32: #{tpu_custom_call.1} parent=11 // pred_fallthru
        _
      // Predicated region
      $region33: #{tpu_custom_call.1} parent=11 // pred_check
        %p243 = pneg %p166
      $region34: #{tpu_custom_call.1} parent=11 // pred_check_branch
        %245 = sbr.rel (%p243) target = $region36
      $region35: #{tpu_custom_call.1} parent=11 // pred_region
        _
      $region36: #{tpu_custom_call.1} parent=11 // pred_fallthru
        _
      // Predicated region
      $region37: #{tpu_custom_call.1} parent=11 // pred_check
        %p246 = pneg %p187
      $region38: #{tpu_custom_call.1} parent=11 // pred_check_branch
        %248 = sbr.rel (%p246) target = $region40
      $region39: #{tpu_custom_call.1} parent=11 // pred_region
        _
      $region40: #{tpu_custom_call.1} parent=11 // pred_fallthru
        _
    $region12: #{tpu_custom_call.1} parent=5 // pred_fallthru
      _
    %p249 = scmp.lt.s32.totalorder %s14, 2
    // Predicated region
    $region41: #{tpu_custom_call.1} parent=5 // pred_check
      %p250 = pneg %p249
    $region42: #{tpu_custom_call.1} parent=5 // pred_check_branch
      %252 = sbr.rel (%p250) target = $region44
    $region43: #{tpu_custom_call.1} parent=5 // pred_region
      // Predicated region
      $region45: #{tpu_custom_call.1} parent=43 // pred_check
        %p253 = pneg %p34
      $region46: #{tpu_custom_call.1} parent=43 // pred_check_branch
        %255 = sbr.rel (%p253) target = $region48
      $region47: #{tpu_custom_call.1} parent=43 // pred_region
        %p256 = scmp.lt.s32.totalorder %s14, 1
        %s257 = scalar_select %p256, %s14, 1
        %s258 = smul.addr %s257, 42
        %s259 = smul.addr %s258, 4
        %s260 = scalar_lea.vmem %s0, %s259
      $region48: #{tpu_custom_call.1} parent=43 // pred_fallthru
        _
    $region44: #{tpu_custom_call.1} parent=5 // pred_fallthru
      _
    %p261 = scmp.le.s32.totalorder 1, %s14
    %p262 = scmp.lt.s32.totalorder %s14, 3
    %p263 = pnand %p261, %p262
    %p264 = pneg %p263
    // Predicated region
    $region49: #{tpu_custom_call.1} parent=5 // pred_check
      _
    $region50: #{tpu_custom_call.1} parent=5 // pred_check_branch
      %266 = sbr.rel (%p263) target = $region52
    $region51: #{tpu_custom_call.1} parent=5 // pred_region
      %s267 = ssub.s32 %s14, 1
      %p268 = scmp.lt.s32.totalorder %s19, 1
      %s269 = scalar_select %p268, %s19, 1
      %s270 = smul.addr %s269, 42
      %s271 = smul.addr %s270, 4
      %s272 = scalar_lea.vmem %s0, %s271
      %p273 = pneg %p40
      %p274 = pneg %p37
      %p275 = pneg %p61
      %p276 = pneg %p58
      %p277 = pneg %p82
      %p278 = pneg %p79
      %p279 = pneg %p103
      %p280 = pneg %p100
      %p281 = pneg %p124
      %p282 = pneg %p121
      %p283 = pneg %p145
      %p284 = pneg %p142
      %p285 = pneg %p166
      %p286 = pneg %p163
      %p287 = pneg %p187
      %p288 = pneg %p184
      %p289 = pneg %p213
      %p290 = pneg %p210
      %p291 = scmp.lt.s32.totalorder %s19, 1
      %s292 = scalar_select %p291, %s19, 1
      %s293 = smul.addr %s292, 36
      %s294 = smul.addr %s293, 8
      %s295 = scalar_lea.vmem %s8, %s294
      %p296 = scmp.lt.s32.totalorder %s19, 1
      %s297 = scalar_select %p296, %s19, 1
      %s298 = smul.addr %s297, 42
      %s299 = smul.addr %s298, 4
      %s300 = scalar_lea.vmem %s0, %s299
      %p301 = scmp.lt.s32.totalorder %s19, 1
      %s302 = scalar_select %p301, %s19, 1
      %s303 = smul.addr %s302, 36
      %s304 = smul.addr %s303, 8
      %s305 = scalar_lea.vmem %s8, %s304
      %v307 = vld [vmem:[%s300] sm:$0xf]
      %v308 = vld [vmem:[%s300 + $0x4] sm:$0xf]
      %v309 = vld [vmem:[%s300 + $0x8] sm:$0xf]
      %v310 = vld [vmem:[%s300 + $0xc] sm:$0xf]
      %v311 = vld [vmem:[%s300 + $0x10] sm:$0xf]
      %v312 = vld [vmem:[%s300 + $0x14] sm:$0xf]
      %v313 = vld [vmem:[%s300 + $0x18] sm:$0xf]
      %v314 = vld [vmem:[%s300 + $0x1c] sm:$0xf]
      %v315 = vld [vmem:[%s300 + $0x20] sm:$0xf]
      %v316 = vld [vmem:[%s300 + $0x24] sm:$0xf]
      %v317 = vld [vmem:[%s300 + $0x28] sm:$0xf]
      %v318 = vld [vmem:[%s300 + $0x2c] sm:$0xf]
      %v319 = vld [vmem:[%s300 + $0x30] sm:$0xf]
      %v320 = vld [vmem:[%s300 + $0x34] sm:$0xf]
      %v321 = vld [vmem:[%s300 + $0x38] sm:$0xf]
      %v322 = vld [vmem:[%s300 + $0x3c] sm:$0xf]
      %v323 = vld [vmem:[%s300 + $0x40] sm:$0xf]
      %v324 = vld [vmem:[%s300 + $0x44] sm:$0xf]
      %v325 = vld [vmem:[%s300 + $0x48] sm:$0xf]
      %v326 = vld [vmem:[%s300 + $0x4c] sm:$0xf]
      %v327 = vld [vmem:[%s300 + $0x50] sm:$0xf]
      %v328 = vld [vmem:[%s300 + $0x54] sm:$0xf]
      %v329 = vld [vmem:[%s300 + $0x58] sm:$0xf]
      %v330 = vld [vmem:[%s300 + $0x5c] sm:$0xf]
      %v331 = vld [vmem:[%s300 + $0x60] sm:$0xf]
      %v332 = vld [vmem:[%s300 + $0x64] sm:$0xf]
      %v333 = vld [vmem:[%s300 + $0x68] sm:$0xf]
      %v334 = vld [vmem:[%s300 + $0x6c] sm:$0xf]
      %v335 = vld [vmem:[%s300 + $0x70] sm:$0xf]
      %v336 = vld [vmem:[%s300 + $0x74] sm:$0xf]
      %v337 = vld [vmem:[%s300 + $0x78] sm:$0xf]
      %v338 = vld [vmem:[%s300 + $0x7c] sm:$0xf]
      %v339 = vld [vmem:[%s300 + $0x80] sm:$0xf]
      %v340 = vld [vmem:[%s300 + $0x84] sm:$0xf]
      %v341 = vld [vmem:[%s300 + $0x88] sm:$0xf]
      %v342 = vld [vmem:[%s300 + $0x8c] sm:$0xf]
      %v343 = vld [vmem:[%s300 + $0x90] sm:$0x1]
      %v381 = vunpack.c.l.b16 %v307
      %v382 = vunpack.c.l.b16 %v308
      %v383 = vunpack.c.l.b16 %v309
      %v384 = vunpack.c.l.b16 %v310
      %v385 = vunpack.c.l.b16 %v311
      %v386 = vunpack.c.l.b16 %v312
      %v387 = vunpack.c.l.b16 %v313
      %v388 = vunpack.c.l.b16 %v314
      %v389 = vunpack.c.l.b16 %v315
      %v390 = vunpack.c.l.b16 %v316
      %v391 = vunpack.c.l.b16 %v317
      %v392 = vunpack.c.l.b16 %v318
      %v393 = vunpack.c.l.b16 %v319
      %v394 = vunpack.c.l.b16 %v320
      %v395 = vunpack.c.l.b16 %v321
      %v396 = vunpack.c.l.b16 %v322
      %v397 = vunpack.c.l.b16 %v323
      %v398 = vunpack.c.l.b16 %v324
      %v399 = vunpack.c.l.b16 %v325
      %v400 = vunpack.c.l.b16 %v326
      %v401 = vunpack.c.l.b16 %v327
      %v402 = vunpack.c.l.b16 %v328
      %v403 = vunpack.c.l.b16 %v329
      %v404 = vunpack.c.l.b16 %v330
      %v405 = vunpack.c.l.b16 %v331
      %v406 = vunpack.c.l.b16 %v332
      %v407 = vunpack.c.l.b16 %v333
      %v408 = vunpack.c.l.b16 %v334
      %v409 = vunpack.c.l.b16 %v335
      %v410 = vunpack.c.l.b16 %v336
      %v411 = vunpack.c.l.b16 %v337
      %v412 = vunpack.c.l.b16 %v338
      %v413 = vunpack.c.l.b16 %v339
      %v414 = vunpack.c.l.b16 %v340
      %v415 = vunpack.c.l.b16 %v341
      %v416 = vunpack.c.l.b16 %v342
      %v417 = vunpack.c.l.b16 %v343
      %v418 = vpack.c.b16 %v382, %v381
      %v419 = vpack.c.b16 %v384, %v383
      %v420 = vpack.c.b16 %v386, %v385
      %v421 = vpack.c.b16 %v388, %v387
      %v422 = vpack.c.b16 %v390, %v389
      %v423 = vpack.c.b16 %v392, %v391
      %v424 = vpack.c.b16 %v394, %v393
      %v425 = vpack.c.b16 %v396, %v395
      %v426 = vpack.c.b16 %v398, %v397
      %v427 = vpack.c.b16 %v400, %v399
      %v428 = vpack.c.b16 %v402, %v401
      %v429 = vpack.c.b16 %v404, %v403
      %v430 = vpack.c.b16 %v406, %v405
      %v431 = vpack.c.b16 %v408, %v407
      %v432 = vpack.c.b16 %v410, %v409
      %v433 = vpack.c.b16 %v412, %v411
      %v434 = vpack.c.b16 %v414, %v413
      %v435 = vpack.c.b16 %v416, %v415
      %v436 = vpack.c.b16 %v417, %v417
      %vm456 = vcmask 523264
      %457 = vst.msk [vmem:[#allocation2] sm:$0xff] %vm456, %v418
      %458 = vst.msk [vmem:[#allocation2 + $0x10] sm:$0xff] %vm456, %v419
      %459 = vst.msk [vmem:[#allocation2 + $0x20] sm:$0xff] %vm456, %v420
      %460 = vst.msk [vmem:[#allocation2 + $0x30] sm:$0xff] %vm456, %v421
      %461 = vst.msk [vmem:[#allocation2 + $0x40] sm:$0xff] %vm456, %v422
      %462 = vst.msk [vmem:[#allocation2 + $0x50] sm:$0xff] %vm456, %v423
      %463 = vst.msk [vmem:[#allocation2 + $0x60] sm:$0xff] %vm456, %v424
      %464 = vst.msk [vmem:[#allocation2 + $0x70] sm:$0xff] %vm456, %v425
      %465 = vst.msk [vmem:[#allocation2 + $0x80] sm:$0xff] %vm456, %v426
      %466 = vst.msk [vmem:[#allocation2 + $0x90] sm:$0xff] %vm456, %v427
      %467 = vst.msk [vmem:[#allocation2 + $0xa0] sm:$0xff] %vm456, %v428
      %468 = vst.msk [vmem:[#allocation2 + $0xb0] sm:$0xff] %vm456, %v429
      %469 = vst.msk [vmem:[#allocation2 + $0xc0] sm:$0xff] %vm456, %v430
      %470 = vst.msk [vmem:[#allocation2 + $0xd0] sm:$0xff] %vm456, %v431
      %471 = vst.msk [vmem:[#allocation2 + $0xe0] sm:$0xff] %vm456, %v432
      %472 = vst.msk [vmem:[#allocation2 + $0xf0] sm:$0xff] %vm456, %v433
      %473 = vst.msk [vmem:[#allocation2 + $0x100] sm:$0xff] %vm456, %v434
      %474 = vst.msk [vmem:[#allocation2 + $0x110] sm:$0xff] %vm456, %v435
      %vm475 = vcmask 516096
      %476 = vst.msk [vmem:[#allocation2 + $0x120] sm:$0x1] %vm475, %v436
      %v477 = vld [vmem:[%s300 + $0x8] sm:$0xe]
      %v478 = vld [vmem:[%s300 + $0xc] sm:$0xf]
      %v479 = vld [vmem:[%s300 + $0x10] sm:$0xf]
      %v480 = vld [vmem:[%s300 + $0x14] sm:$0xf]
      %v481 = vld [vmem:[%s300 + $0x18] sm:$0xf]
      %v482 = vld [vmem:[%s300 + $0x1c] sm:$0xf]
      %v483 = vld [vmem:[%s300 + $0x20] sm:$0xf]
      %v484 = vld [vmem:[%s300 + $0x24] sm:$0xf]
      %v485 = vld [vmem:[%s300 + $0x28] sm:$0xf]
      %v486 = vld [vmem:[%s300 + $0x2c] sm:$0xf]
      %v487 = vld [vmem:[%s300 + $0x30] sm:$0xf]
      %v488 = vld [vmem:[%s300 + $0x34] sm:$0xf]
      %v489 = vld [vmem:[%s300 + $0x38] sm:$0xf]
      %v490 = vld [vmem:[%s300 + $0x3c] sm:$0xf]
      %v491 = vld [vmem:[%s300 + $0x40] sm:$0xf]
      %v492 = vld [vmem:[%s300 + $0x44] sm:$0xf]
      %v493 = vld [vmem:[%s300 + $0x48] sm:$0xf]
      %v494 = vld [vmem:[%s300 + $0x4c] sm:$0xf]
      %v495 = vld [vmem:[%s300 + $0x50] sm:$0xf]
      %v496 = vld [vmem:[%s300 + $0x54] sm:$0xf]
      %v497 = vld [vmem:[%s300 + $0x58] sm:$0xf]
      %v498 = vld [vmem:[%s300 + $0x5c] sm:$0xf]
      %v499 = vld [vmem:[%s300 + $0x60] sm:$0xf]
      %v500 = vld [vmem:[%s300 + $0x64] sm:$0xf]
      %v501 = vld [vmem:[%s300 + $0x68] sm:$0xf]
      %v502 = vld [vmem:[%s300 + $0x6c] sm:$0xf]
      %v503 = vld [vmem:[%s300 + $0x70] sm:$0xf]
      %v504 = vld [vmem:[%s300 + $0x74] sm:$0xf]
      %v505 = vld [vmem:[%s300 + $0x78] sm:$0xf]
      %v506 = vld [vmem:[%s300 + $0x7c] sm:$0xf]
      %v507 = vld [vmem:[%s300 + $0x80] sm:$0xf]
      %v508 = vld [vmem:[%s300 + $0x84] sm:$0xf]
      %v509 = vld [vmem:[%s300 + $0x88] sm:$0xf]
      %v510 = vld [vmem:[%s300 + $0x8c] sm:$0xf]
      %v511 = vld [vmem:[%s300 + $0x90] sm:$0xf]
      %v512 = vld [vmem:[%s300 + $0x94] sm:$0xf]
      %v513 = vld [vmem:[%s300 + $0x98] sm:$0x3]
      %v551 = vunpack.c.l.b16 %v477
      %v552 = vunpack.c.l.b16 %v478
      %v553 = vunpack.c.l.b16 %v479
      %v554 = vunpack.c.l.b16 %v480
      %v555 = vunpack.c.l.b16 %v481
      %v556 = vunpack.c.l.b16 %v482
      %v557 = vunpack.c.l.b16 %v483
      %v558 = vunpack.c.l.b16 %v484
      %v559 = vunpack.c.l.b16 %v485
      %v560 = vunpack.c.l.b16 %v486
      %v561 = vunpack.c.l.b16 %v487
      %v562 = vunpack.c.l.b16 %v488
      %v563 = vunpack.c.l.b16 %v489
      %v564 = vunpack.c.l.b16 %v490
      %v565 = vunpack.c.l.b16 %v491
      %v566 = vunpack.c.l.b16 %v492
      %v567 = vunpack.c.l.b16 %v493
      %v568 = vunpack.c.l.b16 %v494
      %v569 = vunpack.c.l.b16 %v495
      %v570 = vunpack.c.l.b16 %v496
      %v571 = vunpack.c.l.b16 %v497
      %v572 = vunpack.c.l.b16 %v498
      %v573 = vunpack.c.l.b16 %v499
      %v574 = vunpack.c.l.b16 %v500
      %v575 = vunpack.c.l.b16 %v501
      %v576 = vunpack.c.l.b16 %v502
      %v577 = vunpack.c.l.b16 %v503
      %v578 = vunpack.c.l.b16 %v504
      %v579 = vunpack.c.l.b16 %v505
      %v580 = vunpack.c.l.b16 %v506
      %v581 = vunpack.c.l.b16 %v507
      %v582 = vunpack.c.l.b16 %v508
      %v583 = vunpack.c.l.b16 %v509
      %v584 = vunpack.c.l.b16 %v510
      %v585 = vunpack.c.l.b16 %v511
      %v586 = vunpack.c.l.b16 %v512
      %v587 = vunpack.c.l.b16 %v513
      %v588 = vpack.c.b16 %v552, %v551
      %v589 = vpack.c.b16 %v554, %v553
      %v590 = vpack.c.b16 %v556, %v555
      %v591 = vpack.c.b16 %v558, %v557
      %v592 = vpack.c.b16 %v560, %v559
      %v593 = vpack.c.b16 %v562, %v561
      %v594 = vpack.c.b16 %v564, %v563
      %v595 = vpack.c.b16 %v566, %v565
      %v596 = vpack.c.b16 %v568, %v567
      %v597 = vpack.c.b16 %v570, %v569
      %v598 = vpack.c.b16 %v572, %v571
      %v599 = vpack.c.b16 %v574, %v573
      %v600 = vpack.c.b16 %v576, %v575
      %v601 = vpack.c.b16 %v578, %v577
      %v602 = vpack.c.b16 %v580, %v579
      %v603 = vpack.c.b16 %v582, %v581
      %v604 = vpack.c.b16 %v584, %v583
      %v605 = vpack.c.b16 %v586, %v585
      %v606 = vpack.c.b16 %v587, %v587
      %vm607 = vcmask 1046528
      %v608 = vrot.slane %v588, 1
      %v609 = vrot.slane %v589, 1
      %v610 = vsel %vm607, %v608, %v609
      %v611 = vrot.slane %v590, 1
      %v612 = vsel %vm607, %v609, %v611
      %v613 = vrot.slane %v591, 1
      %v614 = vsel %vm607, %v611, %v613
      %v615 = vrot.slane %v592, 1
      %v616 = vsel %vm607, %v613, %v615
      %v617 = vrot.slane %v593, 1
      %v618 = vsel %vm607, %v615, %v617
      %v619 = vrot.slane %v594, 1
      %v620 = vsel %vm607, %v617, %v619
      %v621 = vrot.slane %v595, 1
      %v622 = vsel %vm607, %v619, %v621
      %v623 = vrot.slane %v596, 1
      %v624 = vsel %vm607, %v621, %v623
      %v625 = vrot.slane %v597, 1
      %v626 = vsel %vm607, %v623, %v625
      %v627 = vrot.slane %v598, 1
      %v628 = vsel %vm607, %v625, %v627
      %v629 = vrot.slane %v599, 1
      %v630 = vsel %vm607, %v627, %v629
      %v631 = vrot.slane %v600, 1
      %v632 = vsel %vm607, %v629, %v631
      %v633 = vrot.slane %v601, 1
      %v634 = vsel %vm607, %v631, %v633
      %v635 = vrot.slane %v602, 1
      %v636 = vsel %vm607, %v633, %v635
      %v637 = vrot.slane %v603, 1
      %v638 = vsel %vm607, %v635, %v637
      %v639 = vrot.slane %v604, 1
      %v640 = vsel %vm607, %v637, %v639
      %v641 = vrot.slane %v605, 1
      %v642 = vsel %vm607, %v639, %v641
      %v643 = vrot.slane %v606, 1
      %v644 = vsel %vm607, %v641, %v643
      %645 = vrot.lane.b32.xlu0 %v610, 64
      %v646 = vpop.permute.xlu0 %645
      %647 = vrot.lane.b32.xlu0 %v612, 64
      %v648 = vpop.permute.xlu0 %647
      %649 = vrot.lane.b32.xlu0 %v614, 64
      %v650 = vpop.permute.xlu0 %649
      %651 = vrot.lane.b32.xlu0 %v616, 64
      %v652 = vpop.permute.xlu0 %651
      %653 = vrot.lane.b32.xlu0 %v618, 64
      %v654 = vpop.permute.xlu0 %653
      %655 = vrot.lane.b32.xlu0 %v620, 64
      %v656 = vpop.permute.xlu0 %655
      %657 = vrot.lane.b32.xlu0 %v622, 64
      %v658 = vpop.permute.xlu0 %657
      %659 = vrot.lane.b32.xlu0 %v624, 64
      %v660 = vpop.permute.xlu0 %659
      %661 = vrot.lane.b32.xlu0 %v626, 64
      %v662 = vpop.permute.xlu0 %661
      %663 = vrot.lane.b32.xlu0 %v628, 64
      %v664 = vpop.permute.xlu0 %663
      %665 = vrot.lane.b32.xlu0 %v630, 64
      %v666 = vpop.permute.xlu0 %665
      %667 = vrot.lane.b32.xlu0 %v632, 64
      %v668 = vpop.permute.xlu0 %667
      %669 = vrot.lane.b32.xlu0 %v634, 64
      %v670 = vpop.permute.xlu0 %669
      %671 = vrot.lane.b32.xlu0 %v636, 64
      %v672 = vpop.permute.xlu0 %671
      %673 = vrot.lane.b32.xlu0 %v638, 64
      %v674 = vpop.permute.xlu0 %673
      %675 = vrot.lane.b32.xlu0 %v640, 64
      %v676 = vpop.permute.xlu0 %675
      %677 = vrot.lane.b32.xlu0 %v642, 64
      %v678 = vpop.permute.xlu0 %677
      %679 = vrot.lane.b32.xlu0 %v644, 64
      %v680 = vpop.permute.xlu0 %679
      %681 = vrot.lane.b32.xlu0 %v643, 64
      %v682 = vpop.permute.xlu0 %681
      %vm702 = vcmask 1048064
      %703 = vst.msk [vmem:[#allocation2] sm:$0xff] %vm702, %v646
      %704 = vst.msk [vmem:[#allocation2 + $0x10] sm:$0xff] %vm702, %v648
      %705 = vst.msk [vmem:[#allocation2 + $0x20] sm:$0xff] %vm702, %v650
      %706 = vst.msk [vmem:[#allocation2 + $0x30] sm:$0xff] %vm702, %v652
      %707 = vst.msk [vmem:[#allocation2 + $0x40] sm:$0xff] %vm702, %v654
      %708 = vst.msk [vmem:[#allocation2 + $0x50] sm:$0xff] %vm702, %v656
      %709 = vst.msk [vmem:[#allocation2 + $0x60] sm:$0xff] %vm702, %v658
      %710 = vst.msk [vmem:[#allocation2 + $0x70] sm:$0xff] %vm702, %v660
      %711 = vst.msk [vmem:[#allocation2 + $0x80] sm:$0xff] %vm702, %v662
      %712 = vst.msk [vmem:[#allocation2 + $0x90] sm:$0xff] %vm702, %v664
      %713 = vst.msk [vmem:[#allocation2 + $0xa0] sm:$0xff] %vm702, %v666
      %714 = vst.msk [vmem:[#allocation2 + $0xb0] sm:$0xff] %vm702, %v668
      %715 = vst.msk [vmem:[#allocation2 + $0xc0] sm:$0xff] %vm702, %v670
      %716 = vst.msk [vmem:[#allocation2 + $0xd0] sm:$0xff] %vm702, %v672
      %717 = vst.msk [vmem:[#allocation2 + $0xe0] sm:$0xff] %vm702, %v674
      %718 = vst.msk [vmem:[#allocation2 + $0xf0] sm:$0xff] %vm702, %v676
      %719 = vst.msk [vmem:[#allocation2 + $0x100] sm:$0xff] %vm702, %v678
      %720 = vst.msk [vmem:[#allocation2 + $0x110] sm:$0xff] %vm702, %v680
      %vm721 = vcmask 1040896
      %722 = vst.msk [vmem:[#allocation2 + $0x120] sm:$0x1] %vm721, %v682
      %v723 = vld [vmem:[%s300 + $0x10] sm:$0xc]
      %v724 = vld [vmem:[%s300 + $0x14] sm:$0xf]
      %v725 = vld [vmem:[%s300 + $0x18] sm:$0xf]
      %v726 = vld [vmem:[%s300 + $0x1c] sm:$0xf]
      %v727 = vld [vmem:[%s300 + $0x20] sm:$0xf]
      %v728 = vld [vmem:[%s300 + $0x24] sm:$0xf]
      %v729 = vld [vmem:[%s300 + $0x28] sm:$0xf]
      %v730 = vld [vmem:[%s300 + $0x2c] sm:$0xf]
      %v731 = vld [vmem:[%s300 + $0x30] sm:$0xf]
      %v732 = vld [vmem:[%s300 + $0x34] sm:$0xf]
      %v733 = vld [vmem:[%s300 + $0x38] sm:$0xf]
      %v734 = vld [vmem:[%s300 + $0x3c] sm:$0xf]
      %v735 = vld [vmem:[%s300 + $0x40] sm:$0xf]
      %v736 = vld [vmem:[%s300 + $0x44] sm:$0xf]
      %v737 = vld [vmem:[%s300 + $0x48] sm:$0xf]
      %v738 = vld [vmem:[%s300 + $0x4c] sm:$0xf]
      %v739 = vld [vmem:[%s300 + $0x50] sm:$0xf]
      %v740 = vld [vmem:[%s300 + $0x54] sm:$0xf]
      %v741 = vld [vmem:[%s300 + $0x58] sm:$0xf]
      %v742 = vld [vmem:[%s300 + $0x5c] sm:$0xf]
      %v743 = vld [vmem:[%s300 + $0x60] sm:$0xf]
      %v744 = vld [vmem:[%s300 + $0x64] sm:$0xf]
      %v745 = vld [vmem:[%s300 + $0x68] sm:$0xf]
      %v746 = vld [vmem:[%s300 + $0x6c] sm:$0xf]
      %v747 = vld [vmem:[%s300 + $0x70] sm:$0xf]
      %v748 = vld [vmem:[%s300 + $0x74] sm:$0xf]
      %v749 = vld [vmem:[%s300 + $0x78] sm:$0xf]
      %v750 = vld [vmem:[%s300 + $0x7c] sm:$0xf]
      %v751 = vld [vmem:[%s300 + $0x80] sm:$0xf]
      %v752 = vld [vmem:[%s300 + $0x84] sm:$0xf]
      %v753 = vld [vmem:[%s300 + $0x88] sm:$0xf]
      %v754 = vld [vmem:[%s300 + $0x8c] sm:$0xf]
      %v755 = vld [vmem:[%s300 + $0x90] sm:$0xf]
      %v756 = vld [vmem:[%s300 + $0x94] sm:$0xf]
      %v757 = vld [vmem:[%s300 + $0x98] sm:$0xf]
      %v758 = vld [vmem:[%s300 + $0x9c] sm:$0xf]
      %v759 = vld [vmem:[%s300 + $0xa0] sm:$0x7]
      %v797 = vunpack.c.l.b16 %v723
      %v798 = vunpack.c.l.b16 %v724
      %v799 = vunpack.c.l.b16 %v725
      %v800 = vunpack.c.l.b16 %v726
      %v801 = vunpack.c.l.b16 %v727
      %v802 = vunpack.c.l.b16 %v728
      %v803 = vunpack.c.l.b16 %v729
      %v804 = vunpack.c.l.b16 %v730
      %v805 = vunpack.c.l.b16 %v731
      %v806 = vunpack.c.l.b16 %v732
      %v807 = vunpack.c.l.b16 %v733
      %v808 = vunpack.c.l.b16 %v734
      %v809 = vunpack.c.l.b16 %v735
      %v810 = vunpack.c.l.b16 %v736
      %v811 = vunpack.c.l.b16 %v737
      %v812 = vunpack.c.l.b16 %v738
      %v813 = vunpack.c.l.b16 %v739
      %v814 = vunpack.c.l.b16 %v740
      %v815 = vunpack.c.l.b16 %v741
      %v816 = vunpack.c.l.b16 %v742
      %v817 = vunpack.c.l.b16 %v743
      %v818 = vunpack.c.l.b16 %v744
      %v819 = vunpack.c.l.b16 %v745
      %v820 = vunpack.c.l.b16 %v746
      %v821 = vunpack.c.l.b16 %v747
      %v822 = vunpack.c.l.b16 %v748
      %v823 = vunpack.c.l.b16 %v749
      %v824 = vunpack.c.l.b16 %v750
      %v825 = vunpack.c.l.b16 %v751
      %v826 = vunpack.c.l.b16 %v752
      %v827 = vunpack.c.l.b16 %v753
      %v828 = vunpack.c.l.b16 %v754
      %v829 = vunpack.c.l.b16 %v755
      %v830 = vunpack.c.l.b16 %v756
      %v831 = vunpack.c.l.b16 %v757
      %v832 = vunpack.c.l.b16 %v758
      %v833 = vunpack.c.l.b16 %v759
      %v834 = vpack.c.b16 %v798, %v797
      %v835 = vpack.c.b16 %v800, %v799
      %v836 = vpack.c.b16 %v802, %v801
      %v837 = vpack.c.b16 %v804, %v803
      %v838 = vpack.c.b16 %v806, %v805
      %v839 = vpack.c.b16 %v808, %v807
      %v840 = vpack.c.b16 %v810, %v809
      %v841 = vpack.c.b16 %v812, %v811
      %v842 = vpack.c.b16 %v814, %v813
      %v843 = vpack.c.b16 %v816, %v815
      %v844 = vpack.c.b16 %v818, %v817
      %v845 = vpack.c.b16 %v820, %v819
      %v846 = vpack.c.b16 %v822, %v821
      %v847 = vpack.c.b16 %v824, %v823
      %v848 = vpack.c.b16 %v826, %v825
      %v849 = vpack.c.b16 %v828, %v827
      %v850 = vpack.c.b16 %v830, %v829
      %v851 = vpack.c.b16 %v832, %v831
      %v852 = vpack.c.b16 %v833, %v833
      %vm853 = vcmask 1045504
      %v854 = vrot.slane %v834, 2
      %v855 = vrot.slane %v835, 2
      %v856 = vsel %vm853, %v854, %v855
      %v857 = vrot.slane %v836, 2
      %v858 = vsel %vm853, %v855, %v857
      %v859 = vrot.slane %v837, 2
      %v860 = vsel %vm853, %v857, %v859
      %v861 = vrot.slane %v838, 2
      %v862 = vsel %vm853, %v859, %v861
      %v863 = vrot.slane %v839, 2
      %v864 = vsel %vm853, %v861, %v863
      %v865 = vrot.slane %v840, 2
      %v866 = vsel %vm853, %v863, %v865
      %v867 = vrot.slane %v841, 2
      %v868 = vsel %vm853, %v865, %v867
      %v869 = vrot.slane %v842, 2
      %v870 = vsel %vm853, %v867, %v869
      %v871 = vrot.slane %v843, 2
      %v872 = vsel %vm853, %v869, %v871
      %v873 = vrot.slane %v844, 2
      %v874 = vsel %vm853, %v871, %v873
      %v875 = vrot.slane %v845, 2
      %v876 = vsel %vm853, %v873, %v875
      %v877 = vrot.slane %v846, 2
      %v878 = vsel %vm853, %v875, %v877
      %v879 = vrot.slane %v847, 2
      %v880 = vsel %vm853, %v877, %v879
      %v881 = vrot.slane %v848, 2
      %v882 = vsel %vm853, %v879, %v881
      %v883 = vrot.slane %v849, 2
      %v884 = vsel %vm853, %v881, %v883
      %v885 = vrot.slane %v850, 2
      %v886 = vsel %vm853, %v883, %v885
      %v887 = vrot.slane %v851, 2
      %v888 = vsel %vm853, %v885, %v887
      %v889 = vrot.slane %v852, 2
      %v890 = vsel %vm853, %v887, %v889
      %910 = vst.msk [vmem:[#allocation2 + $0x8] sm:$0xff] %vm456, %v856
      %911 = vst.msk [vmem:[#allocation2 + $0x18] sm:$0xff] %vm456, %v858
      %912 = vst.msk [vmem:[#allocation2 + $0x28] sm:$0xff] %vm456, %v860
      %913 = vst.msk [vmem:[#allocation2 + $0x38] sm:$0xff] %vm456, %v862
      %914 = vst.msk [vmem:[#allocation2 + $0x48] sm:$0xff] %vm456, %v864
      %915 = vst.msk [vmem:[#allocation2 + $0x58] sm:$0xff] %vm456, %v866
      %916 = vst.msk [vmem:[#allocation2 + $0x68] sm:$0xff] %vm456, %v868
      %917 = vst.msk [vmem:[#allocation2 + $0x78] sm:$0xff] %vm456, %v870
      %918 = vst.msk [vmem:[#allocation2 + $0x88] sm:$0xff] %vm456, %v872
      %919 = vst.msk [vmem:[#allocation2 + $0x98] sm:$0xff] %vm456, %v874
      %920 = vst.msk [vmem:[#allocation2 + $0xa8] sm:$0xff] %vm456, %v876
      %921 = vst.msk [vmem:[#allocation2 + $0xb8] sm:$0xff] %vm456, %v878
      %922 = vst.msk [vmem:[#allocation2 + $0xc8] sm:$0xff] %vm456, %v880
      %923 = vst.msk [vmem:[#allocation2 + $0xd8] sm:$0xff] %vm456, %v882
      %924 = vst.msk [vmem:[#allocation2 + $0xe8] sm:$0xff] %vm456, %v884
      %925 = vst.msk [vmem:[#allocation2 + $0xf8] sm:$0xff] %vm456, %v886
      %926 = vst.msk [vmem:[#allocation2 + $0x108] sm:$0xff] %vm456, %v888
      %927 = vst.msk [vmem:[#allocation2 + $0x118] sm:$0xff] %vm456, %v890
      %928 = vst.msk [vmem:[#allocation2 + $0x128] sm:$0x1] %vm475, %v889
      %v929 = vld [vmem:[%s300 + $0x8] sm:$0xe]
      %v930 = vld [vmem:[%s300 + $0xc] sm:$0xf]
      %v931 = vld [vmem:[%s300 + $0x10] sm:$0xf]
      %v932 = vld [vmem:[%s300 + $0x14] sm:$0xf]
      %v933 = vld [vmem:[%s300 + $0x18] sm:$0xf]
      %v934 = vld [vmem:[%s300 + $0x1c] sm:$0xf]
      %v935 = vld [vmem:[%s300 + $0x20] sm:$0xf]
      %v936 = vld [vmem:[%s300 + $0x24] sm:$0xf]
      %v937 = vld [vmem:[%s300 + $0x28] sm:$0xf]
      %v938 = vld [vmem:[%s300 + $0x2c] sm:$0xf]
      %v939 = vld [vmem:[%s300 + $0x30] sm:$0xf]
      %v940 = vld [vmem:[%s300 + $0x34] sm:$0xf]
      %v941 = vld [vmem:[%s300 + $0x38] sm:$0xf]
      %v942 = vld [vmem:[%s300 + $0x3c] sm:$0xf]
      %v943 = vld [vmem:[%s300 + $0x40] sm:$0xf]
      %v944 = vld [vmem:[%s300 + $0x44] sm:$0xf]
      %v945 = vld [vmem:[%s300 + $0x48] sm:$0xf]
      %v946 = vld [vmem:[%s300 + $0x4c] sm:$0xf]
      %v947 = vld [vmem:[%s300 + $0x50] sm:$0xf]
      %v948 = vld [vmem:[%s300 + $0x54] sm:$0xf]
      %v949 = vld [vmem:[%s300 + $0x58] sm:$0xf]
      %v950 = vld [vmem:[%s300 + $0x5c] sm:$0xf]
      %v951 = vld [vmem:[%s300 + $0x60] sm:$0xf]
      %v952 = vld [vmem:[%s300 + $0x64] sm:$0xf]
      %v953 = vld [vmem:[%s300 + $0x68] sm:$0xf]
      %v954 = vld [vmem:[%s300 + $0x6c] sm:$0xf]
      %v955 = vld [vmem:[%s300 + $0x70] sm:$0xf]
      %v956 = vld [vmem:[%s300 + $0x74] sm:$0xf]
      %v957 = vld [vmem:[%s300 + $0x78] sm:$0xf]
      %v958 = vld [vmem:[%s300 + $0x7c] sm:$0xf]
      %v959 = vld [vmem:[%s300 + $0x80] sm:$0xf]
      %v960 = vld [vmem:[%s300 + $0x84] sm:$0xf]
      %v961 = vld [vmem:[%s300 + $0x88] sm:$0xf]
      %v962 = vld [vmem:[%s300 + $0x8c] sm:$0xf]
      %v963 = vld [vmem:[%s300 + $0x90] sm:$0xf]
      %v964 = vld [vmem:[%s300 + $0x94] sm:$0xf]
      %v965 = vld [vmem:[%s300 + $0x98] sm:$0x3]
      %v966 = vunpack.c.l.bf16 %v929
      %v967 = vunpack.c.l.bf16 %v930
      %v968 = vunpack.c.l.bf16 %v931
      %v969 = vunpack.c.l.bf16 %v932
      %v970 = vunpack.c.l.bf16 %v933
      %v971 = vunpack.c.l.bf16 %v934
      %v972 = vunpack.c.l.bf16 %v935
      %v973 = vunpack.c.l.bf16 %v936
      %v974 = vunpack.c.l.bf16 %v937
      %v975 = vunpack.c.l.bf16 %v938
      %v976 = vunpack.c.l.bf16 %v939
      %v977 = vunpack.c.l.bf16 %v940
      %v978 = vunpack.c.l.bf16 %v941
      %v979 = vunpack.c.l.bf16 %v942
      %v980 = vunpack.c.l.bf16 %v943
      %v981 = vunpack.c.l.bf16 %v944
      %v982 = vunpack.c.l.bf16 %v945
      %v983 = vunpack.c.l.bf16 %v946
      %v984 = vunpack.c.l.bf16 %v947
      %v985 = vunpack.c.l.bf16 %v948
      %v986 = vunpack.c.l.bf16 %v949
      %v987 = vunpack.c.l.bf16 %v950
      %v988 = vunpack.c.l.bf16 %v951
      %v989 = vunpack.c.l.bf16 %v952
      %v990 = vunpack.c.l.bf16 %v953
      %v991 = vunpack.c.l.bf16 %v954
      %v992 = vunpack.c.l.bf16 %v955
      %v993 = vunpack.c.l.bf16 %v956
      %v994 = vunpack.c.l.bf16 %v957
      %v995 = vunpack.c.l.bf16 %v958
      %v996 = vunpack.c.l.bf16 %v959
      %v997 = vunpack.c.l.bf16 %v960
      %v998 = vunpack.c.l.bf16 %v961
      %v999 = vunpack.c.l.bf16 %v962
      %v1000 = vunpack.c.l.bf16 %v963
      %v1001 = vunpack.c.l.bf16 %v964
      %v1002 = vunpack.c.l.bf16 %v965
      %v1003 = vld [vmem:[%s4] sm:$0xf]
      %v1004 = vld [vmem:[%s4 + $0x4] sm:$0xf]
      %v1005 = vld [vmem:[%s4 + $0x8] sm:$0xf]
      %v1006 = vld [vmem:[%s4 + $0xc] sm:$0xf]
      %v1007 = vld [vmem:[%s5] sm:$0x1]
      %v1009 = vlaneseq
      %v1010 = vshrl.u32 %v1009, 7
      %v1011 = vsub.s32 0, %v1010
      %v1012 = vrot.slane %v1007, %v1011
      %v1051 = vunpack.c.l.b16 %v929
      %v1052 = vunpack.c.l.b16 %v930
      %v1053 = vunpack.c.l.b16 %v931
      %v1054 = vunpack.c.l.b16 %v932
      %v1055 = vunpack.c.l.b16 %v933
      %v1056 = vunpack.c.l.b16 %v934
      %v1057 = vunpack.c.l.b16 %v935
      %v1058 = vunpack.c.l.b16 %v936
      %v1059 = vunpack.c.l.b16 %v937
      %v1060 = vunpack.c.l.b16 %v938
      %v1061 = vunpack.c.l.b16 %v939
      %v1062 = vunpack.c.l.b16 %v940
      %v1063 = vunpack.c.l.b16 %v941
      %v1064 = vunpack.c.l.b16 %v942
      %v1065 = vunpack.c.l.b16 %v943
      %v1066 = vunpack.c.l.b16 %v944
      %v1067 = vunpack.c.l.b16 %v945
      %v1068 = vunpack.c.l.b16 %v946
      %v1069 = vunpack.c.l.b16 %v947
      %v1070 = vunpack.c.l.b16 %v948
      %v1071 = vunpack.c.l.b16 %v949
      %v1072 = vunpack.c.l.b16 %v950
      %v1073 = vunpack.c.l.b16 %v951
      %v1074 = vunpack.c.l.b16 %v952
      %v1075 = vunpack.c.l.b16 %v953
      %v1076 = vunpack.c.l.b16 %v954
      %v1077 = vunpack.c.l.b16 %v955
      %v1078 = vunpack.c.l.b16 %v956
      %v1079 = vunpack.c.l.b16 %v957
      %v1080 = vunpack.c.l.b16 %v958
      %v1081 = vunpack.c.l.b16 %v959
      %v1082 = vunpack.c.l.b16 %v960
      %v1083 = vunpack.c.l.b16 %v961
      %v1084 = vunpack.c.l.b16 %v962
      %v1085 = vunpack.c.l.b16 %v963
      %v1086 = vunpack.c.l.b16 %v964
      %v1087 = vunpack.c.l.b16 %v965
      %v1088 = vpack.c.b16 %v1052, %v1051
      %v1089 = vpack.c.b16 %v1054, %v1053
      %v1090 = vpack.c.b16 %v1056, %v1055
      %v1091 = vpack.c.b16 %v1058, %v1057
      %v1092 = vpack.c.b16 %v1060, %v1059
      %v1093 = vpack.c.b16 %v1062, %v1061
      %v1094 = vpack.c.b16 %v1064, %v1063
      %v1095 = vpack.c.b16 %v1066, %v1065
      %v1096 = vpack.c.b16 %v1068, %v1067
      %v1097 = vpack.c.b16 %v1070, %v1069
      %v1098 = vpack.c.b16 %v1072, %v1071
      %v1099 = vpack.c.b16 %v1074, %v1073
      %v1100 = vpack.c.b16 %v1076, %v1075
      %v1101 = vpack.c.b16 %v1078, %v1077
      %v1102 = vpack.c.b16 %v1080, %v1079
      %v1103 = vpack.c.b16 %v1082, %v1081
      %v1104 = vpack.c.b16 %v1084, %v1083
      %v1105 = vpack.c.b16 %v1086, %v1085
      %v1106 = vpack.c.b16 %v1087, %v1087
      %vm1107 = vsmask.f32 6400
      %v1109 = vshrl.u32 %v1088, 16
      %v1111 = vrot.slane %v1109, 1
      %v1112 = vshll.u32 %v1088, 16
      %v1114 = vrot.slane %v1112, 2
      %v1115 = vor.u32 %v1111, %v1114
      %v1117 = vshrl.u32 %v1089, 16
      %v1119 = vrot.slane %v1117, 1
      %v1120 = vshll.u32 %v1089, 16
      %v1122 = vrot.slane %v1120, 2
      %v1123 = vor.u32 %v1119, %v1122
      %v1124 = vsel %vm1107, %v1115, %v1123
      %v1126 = vshrl.u32 %v1090, 16
      %v1128 = vrot.slane %v1126, 1
      %v1129 = vshll.u32 %v1090, 16
      %v1131 = vrot.slane %v1129, 2
      %v1132 = vor.u32 %v1128, %v1131
      %v1133 = vsel %vm1107, %v1123, %v1132
      %v1135 = vshrl.u32 %v1091, 16
      %v1137 = vrot.slane %v1135, 1
      %v1138 = vshll.u32 %v1091, 16
      %v1140 = vrot.slane %v1138, 2
      %v1141 = vor.u32 %v1137, %v1140
      %v1142 = vsel %vm1107, %v1132, %v1141
      %v1144 = vshrl.u32 %v1092, 16
      %v1146 = vrot.slane %v1144, 1
      %v1147 = vshll.u32 %v1092, 16
      %v1149 = vrot.slane %v1147, 2
      %v1150 = vor.u32 %v1146, %v1149
      %v1151 = vsel %vm1107, %v1141, %v1150
      %v1153 = vshrl.u32 %v1093, 16
      %v1155 = vrot.slane %v1153, 1
      %v1156 = vshll.u32 %v1093, 16
      %v1158 = vrot.slane %v1156, 2
      %v1159 = vor.u32 %v1155, %v1158
      %v1160 = vsel %vm1107, %v1150, %v1159
      %v1162 = vshrl.u32 %v1094, 16
      %v1164 = vrot.slane %v1162, 1
      %v1165 = vshll.u32 %v1094, 16
      %v1167 = vrot.slane %v1165, 2
      %v1168 = vor.u32 %v1164, %v1167
      %v1169 = vsel %vm1107, %v1159, %v1168
      %v1171 = vshrl.u32 %v1095, 16
      %v1173 = vrot.slane %v1171, 1
      %v1174 = vshll.u32 %v1095, 16
      %v1176 = vrot.slane %v1174, 2
      %v1177 = vor.u32 %v1173, %v1176
      %v1178 = vsel %vm1107, %v1168, %v1177
      %v1180 = vshrl.u32 %v1096, 16
      %v1182 = vrot.slane %v1180, 1
      %v1183 = vshll.u32 %v1096, 16
      %v1185 = vrot.slane %v1183, 2
      %v1186 = vor.u32 %v1182, %v1185
      %v1187 = vsel %vm1107, %v1177, %v1186
      %v1189 = vshrl.u32 %v1097, 16
      %v1191 = vrot.slane %v1189, 1
      %v1192 = vshll.u32 %v1097, 16
      %v1194 = vrot.slane %v1192, 2
      %v1195 = vor.u32 %v1191, %v1194
      %v1196 = vsel %vm1107, %v1186, %v1195
      %v1198 = vshrl.u32 %v1098, 16
      %v1200 = vrot.slane %v1198, 1
      %v1201 = vshll.u32 %v1098, 16
      %v1203 = vrot.slane %v1201, 2
      %v1204 = vor.u32 %v1200, %v1203
      %v1205 = vsel %vm1107, %v1195, %v1204
      %v1207 = vshrl.u32 %v1099, 16
      %v1209 = vrot.slane %v1207, 1
      %v1210 = vshll.u32 %v1099, 16
      %v1212 = vrot.slane %v1210, 2
      %v1213 = vor.u32 %v1209, %v1212
      %v1214 = vsel %vm1107, %v1204, %v1213
      %v1216 = vshrl.u32 %v1100, 16
      %v1218 = vrot.slane %v1216, 1
      %v1219 = vshll.u32 %v1100, 16
      %v1221 = vrot.slane %v1219, 2
      %v1222 = vor.u32 %v1218, %v1221
      %v1223 = vsel %vm1107, %v1213, %v1222
      %v1225 = vshrl.u32 %v1101, 16
      %v1227 = vrot.slane %v1225, 1
      %v1228 = vshll.u32 %v1101, 16
      %v1230 = vrot.slane %v1228, 2
      %v1231 = vor.u32 %v1227, %v1230
      %v1232 = vsel %vm1107, %v1222, %v1231
      %v1234 = vshrl.u32 %v1102, 16
      %v1236 = vrot.slane %v1234, 1
      %v1237 = vshll.u32 %v1102, 16
      %v1239 = vrot.slane %v1237, 2
      %v1240 = vor.u32 %v1236, %v1239
      %v1241 = vsel %vm1107, %v1231, %v1240
      %v1243 = vshrl.u32 %v1103, 16
      %v1245 = vrot.slane %v1243, 1
      %v1246 = vshll.u32 %v1103, 16
      %v1248 = vrot.slane %v1246, 2
      %v1249 = vor.u32 %v1245, %v1248
      %v1250 = vsel %vm1107, %v1240, %v1249
      %v1252 = vshrl.u32 %v1104, 16
      %v1254 = vrot.slane %v1252, 1
      %v1255 = vshll.u32 %v1104, 16
      %v1257 = vrot.slane %v1255, 2
      %v1258 = vor.u32 %v1254, %v1257
      %v1259 = vsel %vm1107, %v1249, %v1258
      %v1261 = vshrl.u32 %v1105, 16
      %v1263 = vrot.slane %v1261, 1
      %v1264 = vshll.u32 %v1105, 16
      %v1266 = vrot.slane %v1264, 2
      %v1267 = vor.u32 %v1263, %v1266
      %v1268 = vsel %vm1107, %v1258, %v1267
      %v1270 = vshrl.u32 %v1106, 16
      %v1272 = vrot.slane %v1270, 1
      %v1273 = vshll.u32 %v1106, 16
      %v1275 = vrot.slane %v1273, 2
      %v1276 = vor.u32 %v1272, %v1275
      %v1277 = vsel %vm1107, %v1267, %v1276
      %v1282 = vunpack.c.l.b16 %v1003
      %v1283 = vunpack.c.l.b16 %v1004
      %v1284 = vunpack.c.l.b16 %v1005
      %v1285 = vunpack.c.l.b16 %v1006
      %v1286 = vpack.c.b16 %v1283, %v1282
      %v1287 = vpack.c.b16 %v1285, %v1284
      %vm1290 = vcmask 261120
      %v1292 = vsel %vm1290, %v1124, 0
      %v1295 = vsel %vm1290, %v1133, 0
      %v1298 = vsel %vm1290, %v1142, 0
      %v1301 = vsel %vm1290, %v1151, 0
      %v1304 = vsel %vm1290, %v1160, 0
      %v1307 = vsel %vm1290, %v1169, 0
      %v1310 = vsel %vm1290, %v1178, 0
      %v1313 = vsel %vm1290, %v1187, 0
      %v1316 = vsel %vm1290, %v1196, 0
      %v1319 = vsel %vm1290, %v1205, 0
      %v1322 = vsel %vm1290, %v1214, 0
      %v1325 = vsel %vm1290, %v1223, 0
      %v1328 = vsel %vm1290, %v1232, 0
      %v1331 = vsel %vm1290, %v1241, 0
      %v1334 = vsel %vm1290, %v1250, 0
      %v1337 = vsel %vm1290, %v1259, 0
      %v1340 = vsel %vm1290, %v1268, 0
      %v1343 = vsel %vm1290, %v1277, 0
      %1345 = vmatprep.subr.bf16.mxu0 0
      %1346 = vmatpush1.bf16.msra.mxu0 %v1286
      %1347 = vmatprep.subr.bf16.mxu0 0
      %1348 = vmatpush1.bf16.msra.mxu0 %v1287
      %1349 = vmatprep.subr.bf16.mxu0 0
      %1350 = vmatpush1.bf16.msra.mxu0 0
      %1351 = vmatprep.subr.bf16.mxu0 0
      %1352 = vmatpush1.bf16.msra.mxu0 0
      %1353 = vmatprep.subr.bf16.mxu0 0
      %1354 = vmatpush1.bf16.msra.mxu0 0
      %1355 = vmatprep.subr.bf16.mxu0 0
      %1356 = vmatpush1.bf16.msra.mxu0 0
      %1357 = vmatprep.subr.bf16.mxu0 0
      %1358 = vmatpush1.bf16.msra.mxu0 0
      %1359 = vmatprep.subr.bf16.mxu0 0
      %1360 = vmatpush1.bf16.msra.mxu0 0
      %1361 = vmatprep.subr.bf16.mxu0 0
      %1362 = vmatpush1.bf16.msra.mxu0 0
      %1363 = vmatprep.subr.bf16.mxu0 0
      %1364 = vmatpush1.bf16.msra.mxu0 0
      %1365 = vmatprep.subr.bf16.mxu0 0
      %1366 = vmatpush1.bf16.msra.mxu0 0
      %1367 = vmatprep.subr.bf16.mxu0 0
      %1368 = vmatpush1.bf16.msra.mxu0 0
      %1369 = vmatprep.subr.bf16.mxu0 0
      %1370 = vmatpush1.bf16.msra.mxu0 0
      %1371 = vmatprep.subr.bf16.mxu0 0
      %1372 = vmatpush1.bf16.msra.mxu0 0
      %1373 = vmatprep.subr.bf16.mxu0 0
      %1374 = vmatpush1.bf16.msra.mxu0 0
      %1375 = vmatprep.subr.bf16.mxu0 0
      %1376 = vmatpush1.bf16.msra.mxu0 0
      %1377 = vmatprep.mubr.bf16.mxu0 0
      %1378 = vmatmul.mubr.bf16.gmra.mrb[0].mxu0 %v1292
      %v1379 = vpop.f32.mrb[0].mxu0
      %v1380 = vadd.f32 %v1012, %v1379
      %v1381 = vpop.f32.mrb[0].mxu0
      %v1382 = vpop.f32.mrb[0].mxu0
      %v1383 = vadd.f32 %v1012, %v1382
      %v1384 = vpop.f32.mrb[0].mxu0
      %1385 = vmatprep.mubr.bf16.mxu0 0
      %1386 = vmatmul.mubr.bf16.gmra.mrb[0].mxu0 %v1295
      %v1387 = vpop.f32.mrb[0].mxu0
      %v1388 = vadd.f32 %v1012, %v1387
      %v1389 = vpop.f32.mrb[0].mxu0
      %v1390 = vpop.f32.mrb[0].mxu0
      %v1391 = vadd.f32 %v1012, %v1390
      %v1392 = vpop.f32.mrb[0].mxu0
      %1393 = vmatprep.mubr.bf16.mxu0 0
      %1394 = vmatmul.mubr.bf16.gmra.mrb[0].mxu0 %v1298
      %v1395 = vpop.f32.mrb[0].mxu0
      %v1396 = vadd.f32 %v1012, %v1395
      %v1397 = vpop.f32.mrb[0].mxu0
      %v1398 = vpop.f32.mrb[0].mxu0
      %v1399 = vadd.f32 %v1012, %v1398
      %v1400 = vpop.f32.mrb[0].mxu0
      %1401 = vmatprep.mubr.bf16.mxu0 0
      %1402 = vmatmul.mubr.bf16.gmra.mrb[0].mxu0 %v1301
      %v1403 = vpop.f32.mrb[0].mxu0
      %v1404 = vadd.f32 %v1012, %v1403
      %v1405 = vpop.f32.mrb[0].mxu0
      %v1406 = vpop.f32.mrb[0].mxu0
      %v1407 = vadd.f32 %v1012, %v1406
      %v1408 = vpop.f32.mrb[0].mxu0
      %1409 = vmatprep.mubr.bf16.mxu0 0
      %1410 = vmatmul.mubr.bf16.gmra.mrb[0].mxu0 %v1304
      %v1411 = vpop.f32.mrb[0].mxu0
      %v1412 = vadd.f32 %v1012, %v1411
      %v1413 = vpop.f32.mrb[0].mxu0
      %v1414 = vpop.f32.mrb[0].mxu0
      %v1415 = vadd.f32 %v1012, %v1414
      %v1416 = vpop.f32.mrb[0].mxu0
      %1417 = vmatprep.mubr.bf16.mxu0 0
      %1418 = vmatmul.mubr.bf16.gmra.mrb[0].mxu0 %v1307
      %v1419 = vpop.f32.mrb[0].mxu0
      %v1420 = vadd.f32 %v1012, %v1419
      %v1421 = vpop.f32.mrb[0].mxu0
      %v1422 = vpop.f32.mrb[0].mxu0
      %v1423 = vadd.f32 %v1012, %v1422
      %v1424 = vpop.f32.mrb[0].mxu0
      %1425 = vmatprep.mubr.bf16.mxu0 0
      %1426 = vmatmul.mubr.bf16.gmra.mrb[0].mxu0 %v1310
      %v1427 = vpop.f32.mrb[0].mxu0
      %v1428 = vadd.f32 %v1012, %v1427
      %v1429 = vpop.f32.mrb[0].mxu0
      %v1430 = vpop.f32.mrb[0].mxu0
      %v1431 = vadd.f32 %v1012, %v1430
      %v1432 = vpop.f32.mrb[0].mxu0
      %1433 = vmatprep.mubr.bf16.mxu0 0
      %1434 = vmatmul.mubr.bf16.gmra.mrb[0].mxu0 %v1313
      %v1435 = vpop.f32.mrb[0].mxu0
      %v1436 = vadd.f32 %v1012, %v1435
      %v1437 = vpop.f32.mrb[0].mxu0
      %v1438 = vpop.f32.mrb[0].mxu0
      %v1439 = vadd.f32 %v1012, %v1438
      %v1440 = vpop.f32.mrb[0].mxu0
      %1441 = vmatprep.mubr.bf16.mxu0 0
      %1442 = vmatmul.mubr.bf16.gmra.mrb[0].mxu0 %v1316
      %v1443 = vpop.f32.mrb[0].mxu0
      %v1444 = vadd.f32 %v1012, %v1443
      %v1445 = vpop.f32.mrb[0].mxu0
      %v1446 = vpop.f32.mrb[0].mxu0
      %v1447 = vadd.f32 %v1012, %v1446
      %v1448 = vpop.f32.mrb[0].mxu0
      %1449 = vmatprep.mubr.bf16.mxu0 0
      %1450 = vmatmul.mubr.bf16.gmra.mrb[0].mxu0 %v1319
      %v1451 = vpop.f32.mrb[0].mxu0
      %v1452 = vadd.f32 %v1012, %v1451
      %v1453 = vpop.f32.mrb[0].mxu0
      %v1454 = vpop.f32.mrb[0].mxu0
      %v1455 = vadd.f32 %v1012, %v1454
      %v1456 = vpop.f32.mrb[0].mxu0
      %1457 = vmatprep.mubr.bf16.mxu0 0
      %1458 = vmatmul.mubr.bf16.gmra.mrb[0].mxu0 %v1322
      %v1459 = vpop.f32.mrb[0].mxu0
      %v1460 = vadd.f32 %v1012, %v1459
      %v1461 = vpop.f32.mrb[0].mxu0
      %v1462 = vpop.f32.mrb[0].mxu0
      %v1463 = vadd.f32 %v1012, %v1462
      %v1464 = vpop.f32.mrb[0].mxu0
      %1465 = vmatprep.mubr.bf16.mxu0 0
      %1466 = vmatmul.mubr.bf16.gmra.mrb[0].mxu0 %v1325
      %v1467 = vpop.f32.mrb[0].mxu0
      %v1468 = vadd.f32 %v1012, %v1467
      %v1469 = vpop.f32.mrb[0].mxu0
      %v1470 = vpop.f32.mrb[0].mxu0
      %v1471 = vadd.f32 %v1012, %v1470
      %v1472 = vpop.f32.mrb[0].mxu0
      %1473 = vmatprep.mubr.bf16.mxu0 0
      %1474 = vmatmul.mubr.bf16.gmra.mrb[0].mxu0 %v1328
      %v1475 = vpop.f32.mrb[0].mxu0
      %v1476 = vadd.f32 %v1012, %v1475
      %v1477 = vpop.f32.mrb[0].mxu0
      %v1478 = vpop.f32.mrb[0].mxu0
      %v1479 = vadd.f32 %v1012, %v1478
      %v1480 = vpop.f32.mrb[0].mxu0
      %1481 = vmatprep.mubr.bf16.mxu0 0
      %1482 = vmatmul.mubr.bf16.gmra.mrb[0].mxu0 %v1331
      %v1483 = vpop.f32.mrb[0].mxu0
      %v1484 = vadd.f32 %v1012, %v1483
      %v1485 = vpop.f32.mrb[0].mxu0
      %v1486 = vpop.f32.mrb[0].mxu0
      %v1487 = vadd.f32 %v1012, %v1486
      %v1488 = vpop.f32.mrb[0].mxu0
      %1489 = vmatprep.mubr.bf16.mxu0 0
      %1490 = vmatmul.mubr.bf16.gmra.mrb[0].mxu0 %v1334
      %v1491 = vpop.f32.mrb[0].mxu0
      %v1492 = vadd.f32 %v1012, %v1491
      %v1493 = vpop.f32.mrb[0].mxu0
      %v1494 = vpop.f32.mrb[0].mxu0
      %v1495 = vadd.f32 %v1012, %v1494
      %v1496 = vpop.f32.mrb[0].mxu0
      %1497 = vmatprep.mubr.bf16.mxu0 0
      %1498 = vmatmul.mubr.bf16.gmra.mrb[0].mxu0 %v1337
      %v1499 = vpop.f32.mrb[0].mxu0
      %v1500 = vadd.f32 %v1012, %v1499
      %v1501 = vpop.f32.mrb[0].mxu0
      %v1502 = vpop.f32.mrb[0].mxu0
      %v1503 = vadd.f32 %v1012, %v1502
      %v1504 = vpop.f32.mrb[0].mxu0
      %1505 = vmatprep.mubr.bf16.mxu0 0
      %1506 = vmatmul.mubr.bf16.gmra.mrb[0].mxu0 %v1340
      %v1507 = vpop.f32.mrb[0].mxu0
      %v1508 = vadd.f32 %v1012, %v1507
      %v1509 = vpop.f32.mrb[0].mxu0
      %v1510 = vpop.f32.mrb[0].mxu0
      %v1511 = vadd.f32 %v1012, %v1510
      %v1512 = vpop.f32.mrb[0].mxu0
      %1513 = vmatprep.mubr.bf16.mxu0 0
      %1514 = vmatmul.mubr.bf16.gmra.mrb[0].mxu0 %v1343
      %v1515 = vpop.f32.mrb[0].mxu0
      %v1516 = vadd.f32 %v1012, %v1515
      %v1517 = vpop.f32.mrb[0].mxu0
      %v1518 = vpop.f32.mrb[0].mxu0
      %v1519 = vadd.f32 %v1012, %v1518
      %v1520 = vpop.f32.mrb[0].mxu0
      %1521 = vdwg.mxu0
      %v1522 = vxor.u32 %v1380, 2147483648
      %v1523 = vxor.u32 %v1383, 2147483648
      %v1524 = vxor.u32 %v1388, 2147483648
      %v1525 = vxor.u32 %v1391, 2147483648
      %v1526 = vxor.u32 %v1396, 2147483648
      %v1527 = vxor.u32 %v1399, 2147483648
      %v1528 = vxor.u32 %v1404, 2147483648
      %v1529 = vxor.u32 %v1407, 2147483648
      %v1530 = vxor.u32 %v1412, 2147483648
      %v1531 = vxor.u32 %v1415, 2147483648
      %v1532 = vxor.u32 %v1420, 2147483648
      %v1533 = vxor.u32 %v1423, 2147483648
      %v1534 = vxor.u32 %v1428, 2147483648
      %v1535 = vxor.u32 %v1431, 2147483648
      %v1536 = vxor.u32 %v1436, 2147483648
      %v1537 = vxor.u32 %v1439, 2147483648
      %v1538 = vxor.u32 %v1444, 2147483648
      %v1539 = vxor.u32 %v1447, 2147483648
      %v1540 = vxor.u32 %v1452, 2147483648
      %v1541 = vxor.u32 %v1455, 2147483648
      %v1542 = vxor.u32 %v1460, 2147483648
      %v1543 = vxor.u32 %v1463, 2147483648
      %v1544 = vxor.u32 %v1468, 2147483648
      %v1545 = vxor.u32 %v1471, 2147483648
      %v1546 = vxor.u32 %v1476, 2147483648
      %v1547 = vxor.u32 %v1479, 2147483648
      %v1548 = vxor.u32 %v1484, 2147483648
      %v1549 = vxor.u32 %v1487, 2147483648
      %v1550 = vxor.u32 %v1492, 2147483648
      %v1551 = vxor.u32 %v1495, 2147483648
      %v1552 = vxor.u32 %v1500, 2147483648
      %v1553 = vxor.u32 %v1503, 2147483648
      %v1554 = vxor.u32 %v1508, 2147483648
      %v1555 = vxor.u32 %v1511, 2147483648
      %v1556 = vxor.u32 %v1516, 2147483648
      %v1557 = vxor.u32 %v1519, 2147483648
      %v1558 = vmul.f32 %v1522, 1.442695
      %v1559 = vpow.pop %v1558
      %v1560 = vmul.f32 %v1523, 1.442695
      %v1561 = vpow.pop %v1560
      %v1562 = vmul.f32 %v1524, 1.442695
      %v1563 = vpow.pop %v1562
      %v1564 = vmul.f32 %v1525, 1.442695
      %v1565 = vpow.pop %v1564
      %v1566 = vmul.f32 %v1526, 1.442695
      %v1567 = vpow.pop %v1566
      %v1568 = vmul.f32 %v1527, 1.442695
      %v1569 = vpow.pop %v1568
      %v1570 = vmul.f32 %v1528, 1.442695
      %v1571 = vpow.pop %v1570
      %v1572 = vmul.f32 %v1529, 1.442695
      %v1573 = vpow.pop %v1572
      %v1574 = vmul.f32 %v1530, 1.442695
      %v1575 = vpow.pop %v1574
      %v1576 = vmul.f32 %v1531, 1.442695
      %v1577 = vpow.pop %v1576
      %v1578 = vmul.f32 %v1532, 1.442695
      %v1579 = vpow.pop %v1578
      %v1580 = vmul.f32 %v1533, 1.442695
      %v1581 = vpow.pop %v1580
      %v1582 = vmul.f32 %v1534, 1.442695
      %v1583 = vpow.pop %v1582
      %v1584 = vmul.f32 %v1535, 1.442695
      %v1585 = vpow.pop %v1584
      %v1586 = vmul.f32 %v1536, 1.442695
      %v1587 = vpow.pop %v1586
      %v1588 = vmul.f32 %v1537, 1.442695
      %v1589 = vpow.pop %v1588
      %v1590 = vmul.f32 %v1538, 1.442695
      %v1591 = vpow.pop %v1590
      %v1592 = vmul.f32 %v1539, 1.442695
      %v1593 = vpow.pop %v1592
      %v1594 = vmul.f32 %v1540, 1.442695
      %v1595 = vpow.pop %v1594
      %v1596 = vmul.f32 %v1541, 1.442695
      %v1597 = vpow.pop %v1596
      %v1598 = vmul.f32 %v1542, 1.442695
      %v1599 = vpow.pop %v1598
      %v1600 = vmul.f32 %v1543, 1.442695
      %v1601 = vpow.pop %v1600
      %v1602 = vmul.f32 %v1544, 1.442695
      %v1603 = vpow.pop %v1602
      %v1604 = vmul.f32 %v1545, 1.442695
      %v1605 = vpow.pop %v1604
      %v1606 = vmul.f32 %v1546, 1.442695
      %v1607 = vpow.pop %v1606
      %v1608 = vmul.f32 %v1547, 1.442695
      %v1609 = vpow.pop %v1608
      %v1610 = vmul.f32 %v1548, 1.442695
      %v1611 = vpow.pop %v1610
      %v1612 = vmul.f32 %v1549, 1.442695
      %v1613 = vpow.pop %v1612
      %v1614 = vmul.f32 %v1550, 1.442695
      %v1615 = vpow.pop %v1614
      %v1616 = vmul.f32 %v1551, 1.442695
      %v1617 = vpow.pop %v1616
      %v1618 = vmul.f32 %v1552, 1.442695
      %v1619 = vpow.pop %v1618
      %v1620 = vmul.f32 %v1553, 1.442695
      %v1621 = vpow.pop %v1620
      %v1622 = vmul.f32 %v1554, 1.442695
      %v1623 = vpow.pop %v1622
      %v1624 = vmul.f32 %v1555, 1.442695
      %v1625 = vpow.pop %v1624
      %v1626 = vmul.f32 %v1556, 1.442695
      %v1627 = vpow.pop %v1626
      %v1628 = vmul.f32 %v1557, 1.442695
      %v1629 = vpow.pop %v1628
      %v1630 = vadd.f32 %v1559, 1.0
      %v1631 = vadd.f32 %v1561, 1.0
      %v1632 = vadd.f32 %v1563, 1.0
      %v1633 = vadd.f32 %v1565, 1.0
      %v1634 = vadd.f32 %v1567, 1.0
      %v1635 = vadd.f32 %v1569, 1.0
      %v1636 = vadd.f32 %v1571, 1.0
      %v1637 = vadd.f32 %v1573, 1.0
      %v1638 = vadd.f32 %v1575, 1.0
      %v1639 = vadd.f32 %v1577, 1.0
      %v1640 = vadd.f32 %v1579, 1.0
      %v1641 = vadd.f32 %v1581, 1.0
      %v1642 = vadd.f32 %v1583, 1.0
      %v1643 = vadd.f32 %v1585, 1.0
      %v1644 = vadd.f32 %v1587, 1.0
      %v1645 = vadd.f32 %v1589, 1.0
      %v1646 = vadd.f32 %v1591, 1.0
      %v1647 = vadd.f32 %v1593, 1.0
      %v1648 = vadd.f32 %v1595, 1.0
      %v1649 = vadd.f32 %v1597, 1.0
      %v1650 = vadd.f32 %v1599, 1.0
      %v1651 = vadd.f32 %v1601, 1.0
      %v1652 = vadd.f32 %v1603, 1.0
      %v1653 = vadd.f32 %v1605, 1.0
      %v1654 = vadd.f32 %v1607, 1.0
      %v1655 = vadd.f32 %v1609, 1.0
      %v1656 = vadd.f32 %v1611, 1.0
      %v1657 = vadd.f32 %v1613, 1.0
      %v1658 = vadd.f32 %v1615, 1.0
      %v1659 = vadd.f32 %v1617, 1.0
      %v1660 = vadd.f32 %v1619, 1.0
      %v1661 = vadd.f32 %v1621, 1.0
      %v1662 = vadd.f32 %v1623, 1.0
      %v1663 = vadd.f32 %v1625, 1.0
      %v1664 = vadd.f32 %v1627, 1.0
      %v1665 = vadd.f32 %v1629, 1.0
      %v1666 = vrcp.pop %v1630
      %v1667 = vmul.f32 1.0, %v1666
      %v1668 = vrcp.pop %v1631
      %v1669 = vmul.f32 1.0, %v1668
      %v1670 = vrcp.pop %v1632
      %v1671 = vmul.f32 1.0, %v1670
      %v1672 = vrcp.pop %v1633
      %v1673 = vmul.f32 1.0, %v1672
      %v1674 = vrcp.pop %v1634
      %v1675 = vmul.f32 1.0, %v1674
      %v1676 = vrcp.pop %v1635
      %v1677 = vmul.f32 1.0, %v1676
      %v1678 = vrcp.pop %v1636
      %v1679 = vmul.f32 1.0, %v1678
      %v1680 = vrcp.pop %v1637
      %v1681 = vmul.f32 1.0, %v1680
      %v1682 = vrcp.pop %v1638
      %v1683 = vmul.f32 1.0, %v1682
      %v1684 = vrcp.pop %v1639
      %v1685 = vmul.f32 1.0, %v1684
      %v1686 = vrcp.pop %v1640
      %v1687 = vmul.f32 1.0, %v1686
      %v1688 = vrcp.pop %v1641
      %v1689 = vmul.f32 1.0, %v1688
      %v1690 = vrcp.pop %v1642
      %v1691 = vmul.f32 1.0, %v1690
      %v1692 = vrcp.pop %v1643
      %v1693 = vmul.f32 1.0, %v1692
      %v1694 = vrcp.pop %v1644
      %v1695 = vmul.f32 1.0, %v1694
      %v1696 = vrcp.pop %v1645
      %v1697 = vmul.f32 1.0, %v1696
      %v1698 = vrcp.pop %v1646
      %v1699 = vmul.f32 1.0, %v1698
      %v1700 = vrcp.pop %v1647
      %v1701 = vmul.f32 1.0, %v1700
      %v1702 = vrcp.pop %v1648
      %v1703 = vmul.f32 1.0, %v1702
      %v1704 = vrcp.pop %v1649
      %v1705 = vmul.f32 1.0, %v1704
      %v1706 = vrcp.pop %v1650
      %v1707 = vmul.f32 1.0, %v1706
      %v1708 = vrcp.pop %v1651
      %v1709 = vmul.f32 1.0, %v1708
      %v1710 = vrcp.pop %v1652
      %v1711 = vmul.f32 1.0, %v1710
      %v1712 = vrcp.pop %v1653
      %v1713 = vmul.f32 1.0, %v1712
      %v1714 = vrcp.pop %v1654
      %v1715 = vmul.f32 1.0, %v1714
      %v1716 = vrcp.pop %v1655
      %v1717 = vmul.f32 1.0, %v1716
      %v1718 = vrcp.pop %v1656
      %v1719 = vmul.f32 1.0, %v1718
      %v1720 = vrcp.pop %v1657
      %v1721 = vmul.f32 1.0, %v1720
      %v1722 = vrcp.pop %v1658
      %v1723 = vmul.f32 1.0, %v1722
      %v1724 = vrcp.pop %v1659
      %v1725 = vmul.f32 1.0, %v1724
      %v1726 = vrcp.pop %v1660
      %v1727 = vmul.f32 1.0, %v1726
      %v1728 = vrcp.pop %v1661
      %v1729 = vmul.f32 1.0, %v1728
      %v1730 = vrcp.pop %v1662
      %v1731 = vmul.f32 1.0, %v1730
      %v1732 = vrcp.pop %v1663
      %v1733 = vmul.f32 1.0, %v1732
      %v1734 = vrcp.pop %v1664
      %v1735 = vmul.f32 1.0, %v1734
      %v1736 = vrcp.pop %v1665
      %v1737 = vmul.f32 1.0, %v1736
      %vm1775 = vcmask 1044480
      %v1776 = vrot.slane %v966, 3
      %v1777 = vrot.slane %v967, 3
      %v1778 = vsel %vm1775, %v1776, %v1777
      %v1779 = vrot.slane %v968, 3
      %v1780 = vsel %vm1775, %v1777, %v1779
      %v1781 = vrot.slane %v969, 3
      %v1782 = vsel %vm1775, %v1779, %v1781
      %v1783 = vrot.slane %v970, 3
      %v1784 = vsel %vm1775, %v1781, %v1783
      %v1785 = vrot.slane %v971, 3
      %v1786 = vsel %vm1775, %v1783, %v1785
      %v1787 = vrot.slane %v972, 3
      %v1788 = vsel %vm1775, %v1785, %v1787
      %v1789 = vrot.slane %v973, 3
      %v1790 = vsel %vm1775, %v1787, %v1789
      %v1791 = vrot.slane %v974, 3
      %v1792 = vsel %vm1775, %v1789, %v1791
      %v1793 = vrot.slane %v975, 3
      %v1794 = vsel %vm1775, %v1791, %v1793
      %v1795 = vrot.slane %v976, 3
      %v1796 = vsel %vm1775, %v1793, %v1795
      %v1797 = vrot.slane %v977, 3
      %v1798 = vsel %vm1775, %v1795, %v1797
      %v1799 = vrot.slane %v978, 3
      %v1800 = vsel %vm1775, %v1797, %v1799
      %v1801 = vrot.slane %v979, 3
      %v1802 = vsel %vm1775, %v1799, %v1801
      %v1803 = vrot.slane %v980, 3
      %v1804 = vsel %vm1775, %v1801, %v1803
      %v1805 = vrot.slane %v981, 3
      %v1806 = vsel %vm1775, %v1803, %v1805
      %v1807 = vrot.slane %v982, 3
      %v1808 = vsel %vm1775, %v1805, %v1807
      %v1809 = vrot.slane %v983, 3
      %v1810 = vsel %vm1775, %v1807, %v1809
      %v1811 = vrot.slane %v984, 3
      %v1812 = vsel %vm1775, %v1809, %v1811
      %v1813 = vrot.slane %v985, 3
      %v1814 = vsel %vm1775, %v1811, %v1813
      %v1815 = vrot.slane %v986, 3
      %v1816 = vsel %vm1775, %v1813, %v1815
      %v1817 = vrot.slane %v987, 3
      %v1818 = vsel %vm1775, %v1815, %v1817
      %v1819 = vrot.slane %v988, 3
      %v1820 = vsel %vm1775, %v1817, %v1819
      %v1821 = vrot.slane %v989, 3
      %v1822 = vsel %vm1775, %v1819, %v1821
      %v1823 = vrot.slane %v990, 3
      %v1824 = vsel %vm1775, %v1821, %v1823
      %v1825 = vrot.slane %v991, 3
      %v1826 = vsel %vm1775, %v1823, %v1825
      %v1827 = vrot.slane %v992, 3
      %v1828 = vsel %vm1775, %v1825, %v1827
      %v1829 = vrot.slane %v993, 3
      %v1830 = vsel %vm1775, %v1827, %v1829
      %v1831 = vrot.slane %v994, 3
      %v1832 = vsel %vm1775, %v1829, %v1831
      %v1833 = vrot.slane %v995, 3
      %v1834 = vsel %vm1775, %v1831, %v1833
      %v1835 = vrot.slane %v996, 3
      %v1836 = vsel %vm1775, %v1833, %v1835
      %v1837 = vrot.slane %v997, 3
      %v1838 = vsel %vm1775, %v1835, %v1837
      %v1839 = vrot.slane %v998, 3
      %v1840 = vsel %vm1775, %v1837, %v1839
      %v1841 = vrot.slane %v999, 3
      %v1842 = vsel %vm1775, %v1839, %v1841
      %v1843 = vrot.slane %v1000, 3
      %v1844 = vsel %vm1775, %v1841, %v1843
      %v1845 = vrot.slane %v1001, 3
      %v1846 = vsel %vm1775, %v1843, %v1845
      %v1847 = vrot.slane %v1002, 3
      %v1848 = vsel %vm1775, %v1845, %v1847
      %v1885 = vmul.f32 %v1667, %v1778
      %v1886 = vmul.f32 %v1669, %v1780
      %v1887 = vmul.f32 %v1671, %v1782
      %v1888 = vmul.f32 %v1673, %v1784
      %v1889 = vmul.f32 %v1675, %v1786
      %v1890 = vmul.f32 %v1677, %v1788
      %v1891 = vmul.f32 %v1679, %v1790
      %v1892 = vmul.f32 %v1681, %v1792
      %v1893 = vmul.f32 %v1683, %v1794
      %v1894 = vmul.f32 %v1685, %v1796
      %v1895 = vmul.f32 %v1687, %v1798
      %v1896 = vmul.f32 %v1689, %v1800
      %v1897 = vmul.f32 %v1691, %v1802
      %v1898 = vmul.f32 %v1693, %v1804
      %v1899 = vmul.f32 %v1695, %v1806
      %v1900 = vmul.f32 %v1697, %v1808
      %v1901 = vmul.f32 %v1699, %v1810
      %v1902 = vmul.f32 %v1701, %v1812
      %v1903 = vmul.f32 %v1703, %v1814
      %v1904 = vmul.f32 %v1705, %v1816
      %v1905 = vmul.f32 %v1707, %v1818
      %v1906 = vmul.f32 %v1709, %v1820
      %v1907 = vmul.f32 %v1711, %v1822
      %v1908 = vmul.f32 %v1713, %v1824
      %v1909 = vmul.f32 %v1715, %v1826
      %v1910 = vmul.f32 %v1717, %v1828
      %v1911 = vmul.f32 %v1719, %v1830
      %v1912 = vmul.f32 %v1721, %v1832
      %v1913 = vmul.f32 %v1723, %v1834
      %v1914 = vmul.f32 %v1725, %v1836
      %v1915 = vmul.f32 %v1727, %v1838
      %v1916 = vmul.f32 %v1729, %v1840
      %v1917 = vmul.f32 %v1731, %v1842
      %v1918 = vmul.f32 %v1733, %v1844
      %v1919 = vmul.f32 %v1735, %v1846
      %v1920 = vmul.f32 %v1737, %v1848
      %v1921 = vsel %vm1290, %v1885, 0.0
      %v1922 = vsel %vm1290, %v1886, 0.0
      %v1923 = vadd.f32 %v1921, %v1922
      %v1924 = vsel %vm1290, %v1887, 0.0
      %v1925 = vadd.f32 %v1923, %v1924
      %v1926 = vsel %vm1290, %v1888, 0.0
      %v1927 = vadd.f32 %v1925, %v1926
      %v1928 = vsel %vm1290, %v1889, 0.0
      %v1929 = vadd.f32 %v1927, %v1928
      %v1930 = vsel %vm1290, %v1890, 0.0
      %v1931 = vadd.f32 %v1929, %v1930
      %v1932 = vsel %vm1290, %v1891, 0.0
      %v1933 = vadd.f32 %v1931, %v1932
      %v1934 = vsel %vm1290, %v1892, 0.0
      %v1935 = vadd.f32 %v1933, %v1934
      %v1936 = vsel %vm1290, %v1893, 0.0
      %v1937 = vadd.f32 %v1935, %v1936
      %v1938 = vsel %vm1290, %v1894, 0.0
      %v1939 = vadd.f32 %v1937, %v1938
      %v1940 = vsel %vm1290, %v1895, 0.0
      %v1941 = vadd.f32 %v1939, %v1940
      %v1942 = vsel %vm1290, %v1896, 0.0
      %v1943 = vadd.f32 %v1941, %v1942
      %v1944 = vsel %vm1290, %v1897, 0.0
      %v1945 = vadd.f32 %v1943, %v1944
      %v1946 = vsel %vm1290, %v1898, 0.0
      %v1947 = vadd.f32 %v1945, %v1946
      %v1948 = vsel %vm1290, %v1899, 0.0
      %v1949 = vadd.f32 %v1947, %v1948
      %v1950 = vsel %vm1290, %v1900, 0.0
      %v1951 = vadd.f32 %v1949, %v1950
      %v1952 = vsel %vm1290, %v1901, 0.0
      %v1953 = vadd.f32 %v1951, %v1952
      %v1954 = vsel %vm1290, %v1902, 0.0
      %v1955 = vadd.f32 %v1953, %v1954
      %v1956 = vsel %vm1290, %v1903, 0.0
      %v1957 = vadd.f32 %v1955, %v1956
      %v1958 = vsel %vm1290, %v1904, 0.0
      %v1959 = vadd.f32 %v1957, %v1958
      %v1960 = vsel %vm1290, %v1905, 0.0
      %v1961 = vadd.f32 %v1959, %v1960
      %v1962 = vsel %vm1290, %v1906, 0.0
      %v1963 = vadd.f32 %v1961, %v1962
      %v1964 = vsel %vm1290, %v1907, 0.0
      %v1965 = vadd.f32 %v1963, %v1964
      %v1966 = vsel %vm1290, %v1908, 0.0
      %v1967 = vadd.f32 %v1965, %v1966
      %v1968 = vsel %vm1290, %v1909, 0.0
      %v1969 = vadd.f32 %v1967, %v1968
      %v1970 = vsel %vm1290, %v1910, 0.0
      %v1971 = vadd.f32 %v1969, %v1970
      %v1972 = vsel %vm1290, %v1911, 0.0
      %v1973 = vadd.f32 %v1971, %v1972
      %v1974 = vsel %vm1290, %v1912, 0.0
      %v1975 = vadd.f32 %v1973, %v1974
      %v1976 = vsel %vm1290, %v1913, 0.0
      %v1977 = vadd.f32 %v1975, %v1976
      %v1978 = vsel %vm1290, %v1914, 0.0
      %v1979 = vadd.f32 %v1977, %v1978
      %v1980 = vsel %vm1290, %v1915, 0.0
      %v1981 = vadd.f32 %v1979, %v1980
      %v1982 = vsel %vm1290, %v1916, 0.0
      %v1983 = vadd.f32 %v1981, %v1982
      %v1984 = vsel %vm1290, %v1917, 0.0
      %v1985 = vadd.f32 %v1983, %v1984
      %v1986 = vsel %vm1290, %v1918, 0.0
      %v1987 = vadd.f32 %v1985, %v1986
      %v1988 = vsel %vm1290, %v1919, 0.0
      %v1989 = vadd.f32 %v1987, %v1988
      %v1990 = vsel %vm1290, %v1920, 0.0
      %v1991 = vadd.f32 %v1989, %v1990
      %v1992 = vrot.slane %v1991, 4
      %v1993 = vadd.f32 %v1991, %v1992
      %v1994 = vrot.slane %v1993, 2
      %v1995 = vadd.f32 %v1993, %v1994
      %v1996 = vrot.slane %v1995, 1
      %v1997 = vadd.f32 %v1995, %v1996
      %v1998 = vmul.f32 %v1997, 0.00390625
      %v1999 = vpack.c.bf16 %v1998, %v1998
      %v2000 = vld [vmem:[%s6] sm:$0xf]
      %v2001 = vld [vmem:[%s6 + $0x4] sm:$0xf]
      %v2002 = vld [vmem:[%s6 + $0x8] sm:$0xf]
      %v2003 = vld [vmem:[%s6 + $0xc] sm:$0xf]
      %v2004 = vld [vmem:[%s7] sm:$0x1]
      %v2009 = vunpack.c.l.b16 %v2000
      %v2010 = vunpack.c.l.b16 %v2001
      %v2011 = vunpack.c.l.b16 %v2002
      %v2012 = vunpack.c.l.b16 %v2003
      %v2013 = vpack.c.b16 %v2010, %v2009
      %v2014 = vpack.c.b16 %v2012, %v2011
      %v2018 = vsel %vm1290, %v1999, 0
      %2020 = vmatprep.subr.bf16.mxu0 0
      %2021 = vmatpush1.bf16.msra.mxu0 %v2013
      %2022 = vmatprep.subr.bf16.mxu0 0
      %2023 = vmatpush1.bf16.msra.mxu0 %v2014
      %2024 = vmatprep.subr.bf16.mxu0 0
      %2025 = vmatpush1.bf16.msra.mxu0 0
      %2026 = vmatprep.subr.bf16.mxu0 0
      %2027 = vmatpush1.bf16.msra.mxu0 0
      %2028 = vmatprep.subr.bf16.mxu0 0
      %2029 = vmatpush1.bf16.msra.mxu0 0
      %2030 = vmatprep.subr.bf16.mxu0 0
      %2031 = vmatpush1.bf16.msra.mxu0 0
      %2032 = vmatprep.subr.bf16.mxu0 0
      %2033 = vmatpush1.bf16.msra.mxu0 0
      %2034 = vmatprep.subr.bf16.mxu0 0
      %2035 = vmatpush1.bf16.msra.mxu0 0
      %2036 = vmatprep.subr.bf16.mxu0 0
      %2037 = vmatpush1.bf16.msra.mxu0 0
      %2038 = vmatprep.subr.bf16.mxu0 0
      %2039 = vmatpush1.bf16.msra.mxu0 0
      %2040 = vmatprep.subr.bf16.mxu0 0
      %2041 = vmatpush1.bf16.msra.mxu0 0
      %2042 = vmatprep.subr.bf16.mxu0 0
      %2043 = vmatpush1.bf16.msra.mxu0 0
      %2044 = vmatprep.subr.bf16.mxu0 0
      %2045 = vmatpush1.bf16.msra.mxu0 0
      %2046 = vmatprep.subr.bf16.mxu0 0
      %2047 = vmatpush1.bf16.msra.mxu0 0
      %2048 = vmatprep.subr.bf16.mxu0 0
      %2049 = vmatpush1.bf16.msra.mxu0 0
      %2050 = vmatprep.subr.bf16.mxu0 0
      %2051 = vmatpush1.bf16.msra.mxu0 0
      %2052 = vmatprep.mubr.bf16.mxu0 0
      %2053 = vmatmul.mubr.bf16.gmra.mrb[0].mxu0 %v2018
      %v2054 = vpop.f32.mrb[0].mxu0
      %v2055 = vadd.f32 %v2004, %v2054
      %v2056 = vpop.f32.mrb[0].mxu0
      %v2057 = vpop.f32.mrb[0].mxu0
      %v2058 = vpop.f32.mrb[0].mxu0
      %2059 = vdwg.mxu0
      %v2060 = vld [vmem:[#allocation2] sm:$0xff]
      %v2061 = vld [vmem:[#allocation2 + $0x8] sm:$0xff]
      %v2062 = vld [vmem:[#allocation2 + $0x10] sm:$0xff]
      %v2063 = vld [vmem:[#allocation2 + $0x18] sm:$0xff]
      %v2064 = vld [vmem:[#allocation2 + $0x20] sm:$0xff]
      %v2065 = vld [vmem:[#allocation2 + $0x28] sm:$0xff]
      %v2066 = vld [vmem:[#allocation2 + $0x30] sm:$0xff]
      %v2067 = vld [vmem:[#allocation2 + $0x38] sm:$0xff]
      %v2068 = vld [vmem:[#allocation2 + $0x40] sm:$0xff]
      %v2069 = vld [vmem:[#allocation2 + $0x48] sm:$0xff]
      %v2070 = vld [vmem:[#allocation2 + $0x50] sm:$0xff]
      %v2071 = vld [vmem:[#allocation2 + $0x58] sm:$0xff]
      %v2072 = vld [vmem:[#allocation2 + $0x60] sm:$0xff]
      %v2073 = vld [vmem:[#allocation2 + $0x68] sm:$0xff]
      %v2074 = vld [vmem:[#allocation2 + $0x70] sm:$0xff]
      %v2075 = vld [vmem:[#allocation2 + $0x78] sm:$0xff]
      %v2076 = vld [vmem:[#allocation2 + $0x80] sm:$0xff]
      %v2077 = vld [vmem:[#allocation2 + $0x88] sm:$0xff]
      %v2078 = vld [vmem:[#allocation2 + $0x90] sm:$0xff]
      %v2079 = vld [vmem:[#allocation2 + $0x98] sm:$0xff]
      %v2080 = vld [vmem:[#allocation2 + $0xa0] sm:$0xff]
      %v2081 = vld [vmem:[#allocation2 + $0xa8] sm:$0xff]
      %v2082 = vld [vmem:[#allocation2 + $0xb0] sm:$0xff]
      %v2083 = vld [vmem:[#allocation2 + $0xb8] sm:$0xff]
      %v2084 = vld [vmem:[#allocation2 + $0xc0] sm:$0xff]
      %v2085 = vld [vmem:[#allocation2 + $0xc8] sm:$0xff]
      %v2086 = vld [vmem:[#allocation2 + $0xd0] sm:$0xff]
      %v2087 = vld [vmem:[#allocation2 + $0xd8] sm:$0xff]
      %v2088 = vld [vmem:[#allocation2 + $0xe0] sm:$0xff]
      %v2089 = vld [vmem:[#allocation2 + $0xe8] sm:$0xff]
      %v2090 = vld [vmem:[#allocation2 + $0xf0] sm:$0xff]
      %v2091 = vld [vmem:[#allocation2 + $0xf8] sm:$0xff]
      %v2092 = vld [vmem:[#allocation2 + $0x100] sm:$0xff]
      %v2093 = vld [vmem:[#allocation2 + $0x108] sm:$0xff]
      %v2094 = vld [vmem:[#allocation2 + $0x110] sm:$0xff]
      %v2095 = vld [vmem:[#allocation2 + $0x118] sm:$0xff]
      %v2096 = vld [vmem:[%s1] sm:$0xf]
      %v2097 = vld [vmem:[%s1 + $0x4] sm:$0xf]
      %v2098 = vld [vmem:[%s1 + $0x8] sm:$0xf]
      %v2099 = vld [vmem:[%s1 + $0xc] sm:$0xf]
      %v2100 = vld [vmem:[%s1 + $0x10] sm:$0xf]
      %v2101 = vld [vmem:[%s1 + $0x14] sm:$0xf]
      %v2102 = vld [vmem:[%s1 + $0x18] sm:$0xf]
      %v2103 = vld [vmem:[%s1 + $0x1c] sm:$0xf]
      %v2104 = vld [vmem:[%s1 + $0x20] sm:$0xf]
      %v2105 = vld [vmem:[%s1 + $0x24] sm:$0xf]
      %v2106 = vld [vmem:[%s1 + $0x28] sm:$0xf]
      %v2107 = vld [vmem:[%s1 + $0x2c] sm:$0xf]
      %v2108 = vld [vmem:[%s1 + $0x30] sm:$0xf]
      %v2109 = vld [vmem:[%s1 + $0x34] sm:$0xf]
      %v2110 = vld [vmem:[%s1 + $0x38] sm:$0xf]
      %v2111 = vld [vmem:[%s1 + $0x3c] sm:$0xf]
      %v2112 = vld [vmem:[%s1 + $0x40] sm:$0xf]
      %v2113 = vld [vmem:[%s1 + $0x44] sm:$0xf]
      %v2114 = vld [vmem:[%s1 + $0x48] sm:$0xf]
      %v2115 = vld [vmem:[%s1 + $0x4c] sm:$0xf]
      %v2116 = vld [vmem:[%s1 + $0x50] sm:$0xf]
      %v2117 = vld [vmem:[%s1 + $0x54] sm:$0xf]
      %v2118 = vld [vmem:[%s1 + $0x58] sm:$0xf]
      %v2119 = vld [vmem:[%s1 + $0x5c] sm:$0xf]
      %v2120 = vld [vmem:[#allocation2 + $0x120] sm:$0x1]
      %v2121 = vld [vmem:[#allocation2 + $0x128] sm:$0x1]
      %s2122 = scalar_lea.vmem %s1, 96
      %v2123 = vld [vmem:[%s2122] sm:$0xf]
      %v2124 = vld [vmem:[%s2122 + $0x4] sm:$0xf]
      %v2125 = vld [vmem:[%s2122 + $0x8] sm:$0xf]
      %v2126 = vld [vmem:[%s2122 + $0xc] sm:$0xf]
      %v2127 = vld [vmem:[%s2122 + $0x10] sm:$0xf]
      %v2128 = vld [vmem:[%s2122 + $0x14] sm:$0xf]
      %v2129 = vld [vmem:[%s2122 + $0x18] sm:$0xf]
      %v2130 = vld [vmem:[%s2122 + $0x1c] sm:$0xf]
      %v2131 = vld [vmem:[%s2122 + $0x20] sm:$0xf]
      %v2132 = vld [vmem:[%s2122 + $0x24] sm:$0xf]
      %v2133 = vld [vmem:[%s2122 + $0x28] sm:$0xf]
      %v2134 = vld [vmem:[%s2122 + $0x2c] sm:$0xf]
      %v2135 = vld [vmem:[%s2122 + $0x30] sm:$0xf]
      %v2136 = vld [vmem:[%s2122 + $0x34] sm:$0xf]
      %v2137 = vld [vmem:[%s2122 + $0x38] sm:$0xf]
      %v2138 = vld [vmem:[%s2122 + $0x3c] sm:$0xf]
      %v2139 = vld [vmem:[%s2122 + $0x40] sm:$0xf]
      %v2140 = vld [vmem:[%s2122 + $0x44] sm:$0xf]
      %v2141 = vld [vmem:[%s2122 + $0x48] sm:$0xf]
      %v2142 = vld [vmem:[%s2122 + $0x4c] sm:$0xf]
      %v2143 = vld [vmem:[%s2122 + $0x50] sm:$0xf]
      %v2144 = vld [vmem:[%s2122 + $0x54] sm:$0xf]
      %v2145 = vld [vmem:[%s2122 + $0x58] sm:$0xf]
      %v2146 = vld [vmem:[%s2122 + $0x5c] sm:$0xf]
      %vm2147 = vsmask.f32 7424
      %v2149 = vshrl.u32 %v2060, 16
      %v2151 = vshll.u32 %v2060, 16
      %v2153 = vrot.slane %v2151, 1
      %v2154 = vor.u32 %v2149, %v2153
      %v2156 = vshll.u32 %v2062, 16
      %v2158 = vrot.slane %v2156, 1
      %v2159 = vsel %vm2147, %v2154, %v2158
      %v2161 = vshrl.u32 %v2061, 16
      %v2163 = vshll.u32 %v2061, 16
      %v2165 = vrot.slane %v2163, 1
      %v2166 = vor.u32 %v2161, %v2165
      %v2168 = vshll.u32 %v2063, 16
      %v2170 = vrot.slane %v2168, 1
      %v2171 = vsel %vm2147, %v2166, %v2170
      %v2172 = vshrl.u32 %v2062, 16
      %v2174 = vor.u32 %v2172, %v2158
      %v2176 = vshll.u32 %v2064, 16
      %v2178 = vrot.slane %v2176, 1
      %v2179 = vsel %vm2147, %v2174, %v2178
      %v2180 = vshrl.u32 %v2063, 16
      %v2182 = vor.u32 %v2180, %v2170
      %v2184 = vshll.u32 %v2065, 16
      %v2186 = vrot.slane %v2184, 1
      %v2187 = vsel %vm2147, %v2182, %v2186
      %v2188 = vshrl.u32 %v2064, 16
      %v2190 = vor.u32 %v2188, %v2178
      %v2192 = vshll.u32 %v2066, 16
      %v2194 = vrot.slane %v2192, 1
      %v2195 = vsel %vm2147, %v2190, %v2194
      %v2196 = vshrl.u32 %v2065, 16
      %v2198 = vor.u32 %v2196, %v2186
      %v2200 = vshll.u32 %v2067, 16
      %v2202 = vrot.slane %v2200, 1
      %v2203 = vsel %vm2147, %v2198, %v2202
      %v2204 = vshrl.u32 %v2066, 16
      %v2206 = vor.u32 %v2204, %v2194
      %v2208 = vshll.u32 %v2068, 16
      %v2210 = vrot.slane %v2208, 1
      %v2211 = vsel %vm2147, %v2206, %v2210
      %v2212 = vshrl.u32 %v2067, 16
      %v2214 = vor.u32 %v2212, %v2202
      %v2216 = vshll.u32 %v2069, 16
      %v2218 = vrot.slane %v2216, 1
      %v2219 = vsel %vm2147, %v2214, %v2218
      %v2220 = vshrl.u32 %v2068, 16
      %v2222 = vor.u32 %v2220, %v2210
      %v2224 = vshll.u32 %v2070, 16
      %v2226 = vrot.slane %v2224, 1
      %v2227 = vsel %vm2147, %v2222, %v2226
      %v2228 = vshrl.u32 %v2069, 16
      %v2230 = vor.u32 %v2228, %v2218
      %v2232 = vshll.u32 %v2071, 16
      %v2234 = vrot.slane %v2232, 1
      %v2235 = vsel %vm2147, %v2230, %v2234
      %v2236 = vshrl.u32 %v2070, 16
      %v2238 = vor.u32 %v2236, %v2226
      %v2240 = vshll.u32 %v2072, 16
      %v2242 = vrot.slane %v2240, 1
      %v2243 = vsel %vm2147, %v2238, %v2242
      %v2244 = vshrl.u32 %v2071, 16
      %v2246 = vor.u32 %v2244, %v2234
      %v2248 = vshll.u32 %v2073, 16
      %v2250 = vrot.slane %v2248, 1
      %v2251 = vsel %vm2147, %v2246, %v2250
      %v2252 = vshrl.u32 %v2072, 16
      %v2254 = vor.u32 %v2252, %v2242
      %v2256 = vshll.u32 %v2074, 16
      %v2258 = vrot.slane %v2256, 1
      %v2259 = vsel %vm2147, %v2254, %v2258
      %v2260 = vshrl.u32 %v2073, 16
      %v2262 = vor.u32 %v2260, %v2250
      %v2264 = vshll.u32 %v2075, 16
      %v2266 = vrot.slane %v2264, 1
      %v2267 = vsel %vm2147, %v2262, %v2266
      %v2268 = vshrl.u32 %v2074, 16
      %v2270 = vor.u32 %v2268, %v2258
      %v2272 = vshll.u32 %v2076, 16
      %v2274 = vrot.slane %v2272, 1
      %v2275 = vsel %vm2147, %v2270, %v2274
      %v2276 = vshrl.u32 %v2075, 16
      %v2278 = vor.u32 %v2276, %v2266
      %v2280 = vshll.u32 %v2077, 16
      %v2282 = vrot.slane %v2280, 1
      %v2283 = vsel %vm2147, %v2278, %v2282
      %v2284 = vshrl.u32 %v2076, 16
      %v2286 = vor.u32 %v2284, %v2274
      %v2288 = vshll.u32 %v2078, 16
      %v2290 = vrot.slane %v2288, 1
      %v2291 = vsel %vm2147, %v2286, %v2290
      %v2292 = vshrl.u32 %v2077, 16
      %v2294 = vor.u32 %v2292, %v2282
      %v2296 = vshll.u32 %v2079, 16
      %v2298 = vrot.slane %v2296, 1
      %v2299 = vsel %vm2147, %v2294, %v2298
      %v2300 = vshrl.u32 %v2078, 16
      %v2302 = vor.u32 %v2300, %v2290
      %v2304 = vshll.u32 %v2080, 16
      %v2306 = vrot.slane %v2304, 1
      %v2307 = vsel %vm2147, %v2302, %v2306
      %v2308 = vshrl.u32 %v2079, 16
      %v2310 = vor.u32 %v2308, %v2298
      %v2312 = vshll.u32 %v2081, 16
      %v2314 = vrot.slane %v2312, 1
      %v2315 = vsel %vm2147, %v2310, %v2314
      %v2316 = vshrl.u32 %v2080, 16
      %v2318 = vor.u32 %v2316, %v2306
      %v2320 = vshll.u32 %v2082, 16
      %v2322 = vrot.slane %v2320, 1
      %v2323 = vsel %vm2147, %v2318, %v2322
      %v2324 = vshrl.u32 %v2081, 16
      %v2326 = vor.u32 %v2324, %v2314
      %v2328 = vshll.u32 %v2083, 16
      %v2330 = vrot.slane %v2328, 1
      %v2331 = vsel %vm2147, %v2326, %v2330
      %v2332 = vshrl.u32 %v2082, 16
      %v2334 = vor.u32 %v2332, %v2322
      %v2336 = vshll.u32 %v2084, 16
      %v2338 = vrot.slane %v2336, 1
      %v2339 = vsel %vm2147, %v2334, %v2338
      %v2340 = vshrl.u32 %v2083, 16
      %v2342 = vor.u32 %v2340, %v2330
      %v2344 = vshll.u32 %v2085, 16
      %v2346 = vrot.slane %v2344, 1
      %v2347 = vsel %vm2147, %v2342, %v2346
      %v2348 = vshrl.u32 %v2084, 16
      %v2350 = vor.u32 %v2348, %v2338
      %v2352 = vshll.u32 %v2086, 16
      %v2354 = vrot.slane %v2352, 1
      %v2355 = vsel %vm2147, %v2350, %v2354
      %v2356 = vshrl.u32 %v2085, 16
      %v2358 = vor.u32 %v2356, %v2346
      %v2360 = vshll.u32 %v2087, 16
      %v2362 = vrot.slane %v2360, 1
      %v2363 = vsel %vm2147, %v2358, %v2362
      %v2364 = vshrl.u32 %v2086, 16
      %v2366 = vor.u32 %v2364, %v2354
      %v2368 = vshll.u32 %v2088, 16
      %v2370 = vrot.slane %v2368, 1
      %v2371 = vsel %vm2147, %v2366, %v2370
      %v2372 = vshrl.u32 %v2087, 16
      %v2374 = vor.u32 %v2372, %v2362
      %v2376 = vshll.u32 %v2089, 16
      %v2378 = vrot.slane %v2376, 1
      %v2379 = vsel %vm2147, %v2374, %v2378
      %v2380 = vshrl.u32 %v2088, 16
      %v2382 = vor.u32 %v2380, %v2370
      %v2384 = vshll.u32 %v2090, 16
      %v2386 = vrot.slane %v2384, 1
      %v2387 = vsel %vm2147, %v2382, %v2386
      %v2388 = vshrl.u32 %v2089, 16
      %v2390 = vor.u32 %v2388, %v2378
      %v2392 = vshll.u32 %v2091, 16
      %v2394 = vrot.slane %v2392, 1
      %v2395 = vsel %vm2147, %v2390, %v2394
      %v2396 = vshrl.u32 %v2090, 16
      %v2398 = vor.u32 %v2396, %v2386
      %v2400 = vshll.u32 %v2092, 16
      %v2402 = vrot.slane %v2400, 1
      %v2403 = vsel %vm2147, %v2398, %v2402
      %v2404 = vshrl.u32 %v2091, 16
      %v2406 = vor.u32 %v2404, %v2394
      %v2408 = vshll.u32 %v2093, 16
      %v2410 = vrot.slane %v2408, 1
      %v2411 = vsel %vm2147, %v2406, %v2410
      %v2412 = vshrl.u32 %v2092, 16
      %v2414 = vor.u32 %v2412, %v2402
      %v2416 = vshll.u32 %v2094, 16
      %v2418 = vrot.slane %v2416, 1
      %v2419 = vsel %vm2147, %v2414, %v2418
      %v2420 = vshrl.u32 %v2093, 16
      %v2422 = vor.u32 %v2420, %v2410
      %v2424 = vshll.u32 %v2095, 16
      %v2426 = vrot.slane %v2424, 1
      %v2427 = vsel %vm2147, %v2422, %v2426
      %v2428 = vshrl.u32 %v2094, 16
      %v2430 = vor.u32 %v2428, %v2418
      %v2432 = vshll.u32 %v2120, 16
      %v2434 = vrot.slane %v2432, 1
      %v2435 = vsel %vm2147, %v2430, %v2434
      %v2436 = vshrl.u32 %v2095, 16
      %v2438 = vor.u32 %v2436, %v2426
      %v2440 = vshll.u32 %v2121, 16
      %v2442 = vrot.slane %v2440, 1
      %v2443 = vsel %vm2147, %v2438, %v2442
      %v2486 = vunpack.c.l.b16 %v2123
      %v2487 = vunpack.c.l.b16 %v2124
      %v2488 = vunpack.c.l.b16 %v2125
      %v2489 = vunpack.c.l.b16 %v2126
      %v2490 = vunpack.c.l.b16 %v2127
      %v2491 = vunpack.c.l.b16 %v2128
      %v2492 = vunpack.c.l.b16 %v2129
      %v2493 = vunpack.c.l.b16 %v2130
      %v2494 = vunpack.c.l.b16 %v2131
      %v2495 = vunpack.c.l.b16 %v2132
      %v2496 = vunpack.c.l.b16 %v2133
      %v2497 = vunpack.c.l.b16 %v2134
      %v2498 = vunpack.c.l.b16 %v2135
      %v2499 = vunpack.c.l.b16 %v2136
      %v2500 = vunpack.c.l.b16 %v2137
      %v2501 = vunpack.c.l.b16 %v2138
      %v2502 = vunpack.c.l.b16 %v2139
      %v2503 = vunpack.c.l.b16 %v2140
      %v2504 = vunpack.c.l.b16 %v2141
      %v2505 = vunpack.c.l.b16 %v2142
      %v2506 = vunpack.c.l.b16 %v2143
      %v2507 = vunpack.c.l.b16 %v2144
      %v2508 = vunpack.c.l.b16 %v2145
      %v2509 = vunpack.c.l.b16 %v2146
      %v2510 = vpack.c.b16 %v2487, %v2486
      %v2511 = vpack.c.b16 %v2489, %v2488
      %v2512 = vpack.c.b16 %v2491, %v2490
      %v2513 = vpack.c.b16 %v2493, %v2492
      %v2514 = vpack.c.b16 %v2495, %v2494
      %v2515 = vpack.c.b16 %v2497, %v2496
      %v2516 = vpack.c.b16 %v2499, %v2498
      %v2517 = vpack.c.b16 %v2501, %v2500
      %v2518 = vpack.c.b16 %v2503, %v2502
      %v2519 = vpack.c.b16 %v2505, %v2504
      %v2520 = vpack.c.b16 %v2507, %v2506
      %v2521 = vpack.c.b16 %v2509, %v2508
      %v2535 = vsel %vm456, %v2171, 0
      %v2538 = vsel %vm456, %v2187, 0
      %v2541 = vsel %vm456, %v2203, 0
      %v2544 = vsel %vm456, %v2219, 0
      %v2547 = vsel %vm456, %v2235, 0
      %v2550 = vsel %vm456, %v2251, 0
      %v2553 = vsel %vm456, %v2267, 0
      %v2556 = vsel %vm456, %v2283, 0
      %v2559 = vsel %vm456, %v2299, 0
      %v2562 = vsel %vm456, %v2315, 0
      %v2565 = vsel %vm456, %v2331, 0
      %v2568 = vsel %vm456, %v2347, 0
      %v2571 = vsel %vm456, %v2363, 0
      %v2574 = vsel %vm456, %v2379, 0
      %v2577 = vsel %vm456, %v2395, 0
      %v2580 = vsel %vm456, %v2411, 0
      %v2583 = vsel %vm456, %v2427, 0
      %v2586 = vsel %vm456, %v2443, 0
      %2588 = vmatprep.subr.bf16.mxu0 0
      %2589 = vmatpush1.bf16.msra.mxu0 %v2510
      %2590 = vmatprep.subr.bf16.mxu0 0
      %2591 = vmatpush1.bf16.msra.mxu0 %v2511
      %2592 = vmatprep.subr.bf16.mxu0 0
      %2593 = vmatpush1.bf16.msra.mxu0 %v2512
      %2594 = vmatprep.subr.bf16.mxu0 0
      %2595 = vmatpush1.bf16.msra.mxu0 %v2513
      %2596 = vmatprep.subr.bf16.mxu0 0
      %2597 = vmatpush1.bf16.msra.mxu0 %v2514
      %2598 = vmatprep.subr.bf16.mxu0 0
      %2599 = vmatpush1.bf16.msra.mxu0 %v2515
      %2600 = vmatprep.subr.bf16.mxu0 0
      %2601 = vmatpush1.bf16.msra.mxu0 %v2516
      %2602 = vmatprep.subr.bf16.mxu0 0
      %2603 = vmatpush1.bf16.msra.mxu0 %v2517
      %2604 = vmatprep.subr.bf16.mxu0 0
      %2605 = vmatpush1.bf16.msra.mxu0 %v2518
      %2606 = vmatprep.subr.bf16.mxu0 0
      %2607 = vmatpush1.bf16.msra.mxu0 %v2519
      %2608 = vmatprep.subr.bf16.mxu0 0
      %2609 = vmatpush1.bf16.msra.mxu0 %v2520
      %2610 = vmatprep.subr.bf16.mxu0 0
      %2611 = vmatpush1.bf16.msra.mxu0 %v2521
      %2612 = vmatprep.subr.bf16.mxu0 0
      %2613 = vmatpush1.bf16.msra.mxu0 0
      %2614 = vmatprep.subr.bf16.mxu0 0
      %2615 = vmatpush1.bf16.msra.mxu0 0
      %2616 = vmatprep.subr.bf16.mxu0 0
      %2617 = vmatpush1.bf16.msra.mxu0 0
      %2618 = vmatprep.subr.bf16.mxu0 0
      %2619 = vmatpush1.bf16.msra.mxu0 0
      %2620 = vmatprep.mubr.bf16.mxu0 %v2535
      %2621 = vmatmul.mubr.bf16.gmra.mrb[0].mxu0 %v2159
      %v2622 = vpop.f32.mrb[0].mxu0
      %v2623 = vadd.f32 0.0, %v2622
      %v2624 = vpop.f32.mrb[0].mxu0
      %v2625 = vpop.f32.mrb[0].mxu0
      %v2626 = vadd.f32 0.0, %v2625
      %v2627 = vpop.f32.mrb[0].mxu0
      %2628 = vmatprep.mubr.bf16.mxu0 %v2538
      %2629 = vmatmul.mubr.bf16.gmra.mrb[0].mxu0 %v2179
      %v2630 = vpop.f32.mrb[0].mxu0
      %v2631 = vadd.f32 0.0, %v2630
      %v2632 = vpop.f32.mrb[0].mxu0
      %v2633 = vpop.f32.mrb[0].mxu0
      %v2634 = vadd.f32 0.0, %v2633
      %v2635 = vpop.f32.mrb[0].mxu0
      %2636 = vmatprep.mubr.bf16.mxu0 %v2541
      %2637 = vmatmul.mubr.bf16.gmra.mrb[0].mxu0 %v2195
      %v2638 = vpop.f32.mrb[0].mxu0
      %v2639 = vadd.f32 0.0, %v2638
      %v2640 = vpop.f32.mrb[0].mxu0
      %v2641 = vpop.f32.mrb[0].mxu0
      %v2642 = vadd.f32 0.0, %v2641
      %v2643 = vpop.f32.mrb[0].mxu0
      %2644 = vmatprep.mubr.bf16.mxu0 %v2544
      %2645 = vmatmul.mubr.bf16.gmra.mrb[0].mxu0 %v2211
      %v2646 = vpop.f32.mrb[0].mxu0
      %v2647 = vadd.f32 0.0, %v2646
      %v2648 = vpop.f32.mrb[0].mxu0
      %v2649 = vpop.f32.mrb[0].mxu0
      %v2650 = vadd.f32 0.0, %v2649
      %v2651 = vpop.f32.mrb[0].mxu0
      %2652 = vmatprep.mubr.bf16.mxu0 %v2547
      %2653 = vmatmul.mubr.bf16.gmra.mrb[0].mxu0 %v2227
      %v2654 = vpop.f32.mrb[0].mxu0
      %v2655 = vadd.f32 0.0, %v2654
      %v2656 = vpop.f32.mrb[0].mxu0
      %v2657 = vpop.f32.mrb[0].mxu0
      %v2658 = vadd.f32 0.0, %v2657
      %v2659 = vpop.f32.mrb[0].mxu0
      %2660 = vmatprep.mubr.bf16.mxu0 %v2550
      %2661 = vmatmul.mubr.bf16.gmra.mrb[0].mxu0 %v2243
      %v2662 = vpop.f32.mrb[0].mxu0
      %v2663 = vadd.f32 0.0, %v2662
      %v2664 = vpop.f32.mrb[0].mxu0
      %v2665 = vpop.f32.mrb[0].mxu0
      %v2666 = vadd.f32 0.0, %v2665
      %v2667 = vpop.f32.mrb[0].mxu0
      %2668 = vmatprep.mubr.bf16.mxu0 %v2553
      %2669 = vmatmul.mubr.bf16.gmra.mrb[0].mxu0 %v2259
      %v2670 = vpop.f32.mrb[0].mxu0
      %v2671 = vadd.f32 0.0, %v2670
      %v2672 = vpop.f32.mrb[0].mxu0
      %v2673 = vpop.f32.mrb[0].mxu0
      %v2674 = vadd.f32 0.0, %v2673
      %v2675 = vpop.f32.mrb[0].mxu0
      %2676 = vmatprep.mubr.bf16.mxu0 %v2556
      %2677 = vmatmul.mubr.bf16.gmra.mrb[0].mxu0 %v2275
      %v2678 = vpop.f32.mrb[0].mxu0
      %v2679 = vadd.f32 0.0, %v2678
      %v2680 = vpop.f32.mrb[0].mxu0
      %v2681 = vpop.f32.mrb[0].mxu0
      %v2682 = vadd.f32 0.0, %v2681
      %v2683 = vpop.f32.mrb[0].mxu0
      %2684 = vmatprep.mubr.bf16.mxu0 %v2559
      %2685 = vmatmul.mubr.bf16.gmra.mrb[0].mxu0 %v2291
      %v2686 = vpop.f32.mrb[0].mxu0
      %v2687 = vadd.f32 0.0, %v2686
      %v2688 = vpop.f32.mrb[0].mxu0
      %v2689 = vpop.f32.mrb[0].mxu0
      %v2690 = vadd.f32 0.0, %v2689
      %v2691 = vpop.f32.mrb[0].mxu0
      %2692 = vmatprep.mubr.bf16.mxu0 %v2562
      %2693 = vmatmul.mubr.bf16.gmra.mrb[0].mxu0 %v2307
      %v2694 = vpop.f32.mrb[0].mxu0
      %v2695 = vadd.f32 0.0, %v2694
      %v2696 = vpop.f32.mrb[0].mxu0
      %v2697 = vpop.f32.mrb[0].mxu0
      %v2698 = vadd.f32 0.0, %v2697
      %v2699 = vpop.f32.mrb[0].mxu0
      %2700 = vmatprep.mubr.bf16.mxu0 %v2565
      %2701 = vmatmul.mubr.bf16.gmra.mrb[0].mxu0 %v2323
      %v2702 = vpop.f32.mrb[0].mxu0
      %v2703 = vadd.f32 0.0, %v2702
      %v2704 = vpop.f32.mrb[0].mxu0
      %v2705 = vpop.f32.mrb[0].mxu0
      %v2706 = vadd.f32 0.0, %v2705
      %v2707 = vpop.f32.mrb[0].mxu0
      %2708 = vmatprep.mubr.bf16.mxu0 %v2568
      %2709 = vmatmul.mubr.bf16.gmra.mrb[0].mxu0 %v2339
      %v2710 = vpop.f32.mrb[0].mxu0
      %v2711 = vadd.f32 0.0, %v2710
      %v2712 = vpop.f32.mrb[0].mxu0
      %v2713 = vpop.f32.mrb[0].mxu0
      %v2714 = vadd.f32 0.0, %v2713
      %v2715 = vpop.f32.mrb[0].mxu0
      %2716 = vmatprep.mubr.bf16.mxu0 %v2571
      %2717 = vmatmul.mubr.bf16.gmra.mrb[0].mxu0 %v2355
      %v2718 = vpop.f32.mrb[0].mxu0
      %v2719 = vadd.f32 0.0, %v2718
      %v2720 = vpop.f32.mrb[0].mxu0
      %v2721 = vpop.f32.mrb[0].mxu0
      %v2722 = vadd.f32 0.0, %v2721
      %v2723 = vpop.f32.mrb[0].mxu0
      %2724 = vmatprep.mubr.bf16.mxu0 %v2574
      %2725 = vmatmul.mubr.bf16.gmra.mrb[0].mxu0 %v2371
      %v2726 = vpop.f32.mrb[0].mxu0
      %v2727 = vadd.f32 0.0, %v2726
      %v2728 = vpop.f32.mrb[0].mxu0
      %v2729 = vpop.f32.mrb[0].mxu0
      %v2730 = vadd.f32 0.0, %v2729
      %v2731 = vpop.f32.mrb[0].mxu0
      %2732 = vmatprep.mubr.bf16.mxu0 %v2577
      %2733 = vmatmul.mubr.bf16.gmra.mrb[0].mxu0 %v2387
      %v2734 = vpop.f32.mrb[0].mxu0
      %v2735 = vadd.f32 0.0, %v2734
      %v2736 = vpop.f32.mrb[0].mxu0
      %v2737 = vpop.f32.mrb[0].mxu0
      %v2738 = vadd.f32 0.0, %v2737
      %v2739 = vpop.f32.mrb[0].mxu0
      %2740 = vmatprep.mubr.bf16.mxu0 %v2580
      %2741 = vmatmul.mubr.bf16.gmra.mrb[0].mxu0 %v2403
      %v2742 = vpop.f32.mrb[0].mxu0
      %v2743 = vadd.f32 0.0, %v2742
      %v2744 = vpop.f32.mrb[0].mxu0
      %v2745 = vpop.f32.mrb[0].mxu0
      %v2746 = vadd.f32 0.0, %v2745
      %v2747 = vpop.f32.mrb[0].mxu0
      %2748 = vmatprep.mubr.bf16.mxu0 %v2583
      %2749 = vmatmul.mubr.bf16.gmra.mrb[0].mxu0 %v2419
      %v2750 = vpop.f32.mrb[0].mxu0
      %v2751 = vadd.f32 0.0, %v2750
      %v2752 = vpop.f32.mrb[0].mxu0
      %v2753 = vpop.f32.mrb[0].mxu0
      %v2754 = vadd.f32 0.0, %v2753
      %v2755 = vpop.f32.mrb[0].mxu0
      %2756 = vmatprep.mubr.bf16.mxu0 %v2586
      %2757 = vmatmul.mubr.bf16.gmra.mrb[0].mxu0 %v2435
      %v2758 = vpop.f32.mrb[0].mxu0
      %v2759 = vadd.f32 0.0, %v2758
      %v2760 = vpop.f32.mrb[0].mxu0
      %v2761 = vpop.f32.mrb[0].mxu0
      %v2762 = vadd.f32 0.0, %v2761
      %v2763 = vpop.f32.mrb[0].mxu0
      %2764 = vdwg.mxu0
      %v2789 = vunpack.c.l.b16 %v2096
      %v2790 = vunpack.c.l.b16 %v2097
      %v2791 = vunpack.c.l.b16 %v2098
      %v2792 = vunpack.c.l.b16 %v2099
      %v2793 = vunpack.c.l.b16 %v2100
      %v2794 = vunpack.c.l.b16 %v2101
      %v2795 = vunpack.c.l.b16 %v2102
      %v2796 = vunpack.c.l.b16 %v2103
      %v2797 = vunpack.c.l.b16 %v2104
      %v2798 = vunpack.c.l.b16 %v2105
      %v2799 = vunpack.c.l.b16 %v2106
      %v2800 = vunpack.c.l.b16 %v2107
      %v2801 = vunpack.c.l.b16 %v2108
      %v2802 = vunpack.c.l.b16 %v2109
      %v2803 = vunpack.c.l.b16 %v2110
      %v2804 = vunpack.c.l.b16 %v2111
      %v2805 = vunpack.c.l.b16 %v2112
      %v2806 = vunpack.c.l.b16 %v2113
      %v2807 = vunpack.c.l.b16 %v2114
      %v2808 = vunpack.c.l.b16 %v2115
      %v2809 = vunpack.c.l.b16 %v2116
      %v2810 = vunpack.c.l.b16 %v2117
      %v2811 = vunpack.c.l.b16 %v2118
      %v2812 = vunpack.c.l.b16 %v2119
      %v2813 = vpack.c.b16 %v2790, %v2789
      %v2814 = vpack.c.b16 %v2792, %v2791
      %v2815 = vpack.c.b16 %v2794, %v2793
      %v2816 = vpack.c.b16 %v2796, %v2795
      %v2817 = vpack.c.b16 %v2798, %v2797
      %v2818 = vpack.c.b16 %v2800, %v2799
      %v2819 = vpack.c.b16 %v2802, %v2801
      %v2820 = vpack.c.b16 %v2804, %v2803
      %v2821 = vpack.c.b16 %v2806, %v2805
      %v2822 = vpack.c.b16 %v2808, %v2807
      %v2823 = vpack.c.b16 %v2810, %v2809
      %v2824 = vpack.c.b16 %v2812, %v2811
      %v2837 = vsel %vm456, %v2061, 0
      %v2839 = vsel %vm456, %v2063, 0
      %v2841 = vsel %vm456, %v2065, 0
      %v2843 = vsel %vm456, %v2067, 0
      %v2845 = vsel %vm456, %v2069, 0
      %v2847 = vsel %vm456, %v2071, 0
      %v2849 = vsel %vm456, %v2073, 0
      %v2851 = vsel %vm456, %v2075, 0
      %v2853 = vsel %vm456, %v2077, 0
      %v2855 = vsel %vm456, %v2079, 0
      %v2857 = vsel %vm456, %v2081, 0
      %v2859 = vsel %vm456, %v2083, 0
      %v2861 = vsel %vm456, %v2085, 0
      %v2863 = vsel %vm456, %v2087, 0
      %v2865 = vsel %vm456, %v2089, 0
      %v2867 = vsel %vm456, %v2091, 0
      %v2869 = vsel %vm456, %v2093, 0
      %v2871 = vsel %vm456, %v2095, 0
      %2873 = vmatprep.subr.bf16.mxu0 0
      %2874 = vmatpush1.bf16.msra.mxu0 %v2813
      %2875 = vmatprep.subr.bf16.mxu0 0
      %2876 = vmatpush1.bf16.msra.mxu0 %v2814
      %2877 = vmatprep.subr.bf16.mxu0 0
      %2878 = vmatpush1.bf16.msra.mxu0 %v2815
      %2879 = vmatprep.subr.bf16.mxu0 0
      %2880 = vmatpush1.bf16.msra.mxu0 %v2816
      %2881 = vmatprep.subr.bf16.mxu0 0
      %2882 = vmatpush1.bf16.msra.mxu0 %v2817
      %2883 = vmatprep.subr.bf16.mxu0 0
      %2884 = vmatpush1.bf16.msra.mxu0 %v2818
      %2885 = vmatprep.subr.bf16.mxu0 0
      %2886 = vmatpush1.bf16.msra.mxu0 %v2819
      %2887 = vmatprep.subr.bf16.mxu0 0
      %2888 = vmatpush1.bf16.msra.mxu0 %v2820
      %2889 = vmatprep.subr.bf16.mxu0 0
      %2890 = vmatpush1.bf16.msra.mxu0 %v2821
      %2891 = vmatprep.subr.bf16.mxu0 0
      %2892 = vmatpush1.bf16.msra.mxu0 %v2822
      %2893 = vmatprep.subr.bf16.mxu0 0
      %2894 = vmatpush1.bf16.msra.mxu0 %v2823
      %2895 = vmatprep.subr.bf16.mxu0 0
      %2896 = vmatpush1.bf16.msra.mxu0 %v2824
      %2897 = vmatprep.subr.bf16.mxu0 0
      %2898 = vmatpush1.bf16.msra.mxu0 0
      %2899 = vmatprep.subr.bf16.mxu0 0
      %2900 = vmatpush1.bf16.msra.mxu0 0
      %2901 = vmatprep.subr.bf16.mxu0 0
      %2902 = vmatpush1.bf16.msra.mxu0 0
      %2903 = vmatprep.subr.bf16.mxu0 0
      %2904 = vmatpush1.bf16.msra.mxu0 0
      %2905 = vmatprep.mubr.bf16.mxu0 %v2837
      %2906 = vmatmul.mubr.bf16.gmra.mrb[0].mxu0 %v2060
      %v2907 = vpop.f32.mrb[0].mxu0
      %v2908 = vadd.f32 %v2623, %v2907
      %v2909 = vpop.f32.mrb[0].mxu0
      %v2910 = vpop.f32.mrb[0].mxu0
      %v2911 = vadd.f32 %v2626, %v2910
      %v2912 = vpop.f32.mrb[0].mxu0
      %2913 = vmatprep.mubr.bf16.mxu0 %v2839
      %2914 = vmatmul.mubr.bf16.gmra.mrb[0].mxu0 %v2062
      %v2915 = vpop.f32.mrb[0].mxu0
      %v2916 = vadd.f32 %v2631, %v2915
      %v2917 = vpop.f32.mrb[0].mxu0
      %v2918 = vpop.f32.mrb[0].mxu0
      %v2919 = vadd.f32 %v2634, %v2918
      %v2920 = vpop.f32.mrb[0].mxu0
      %2921 = vmatprep.mubr.bf16.mxu0 %v2841
      %2922 = vmatmul.mubr.bf16.gmra.mrb[0].mxu0 %v2064
      %v2923 = vpop.f32.mrb[0].mxu0
      %v2924 = vadd.f32 %v2639, %v2923
      %v2925 = vpop.f32.mrb[0].mxu0
      %v2926 = vpop.f32.mrb[0].mxu0
      %v2927 = vadd.f32 %v2642, %v2926
      %v2928 = vpop.f32.mrb[0].mxu0
      %2929 = vmatprep.mubr.bf16.mxu0 %v2843
      %2930 = vmatmul.mubr.bf16.gmra.mrb[0].mxu0 %v2066
      %v2931 = vpop.f32.mrb[0].mxu0
      %v2932 = vadd.f32 %v2647, %v2931
      %v2933 = vpop.f32.mrb[0].mxu0
      %v2934 = vpop.f32.mrb[0].mxu0
      %v2935 = vadd.f32 %v2650, %v2934
      %v2936 = vpop.f32.mrb[0].mxu0
      %2937 = vmatprep.mubr.bf16.mxu0 %v2845
      %2938 = vmatmul.mubr.bf16.gmra.mrb[0].mxu0 %v2068
      %v2939 = vpop.f32.mrb[0].mxu0
      %v2940 = vadd.f32 %v2655, %v2939
      %v2941 = vpop.f32.mrb[0].mxu0
      %v2942 = vpop.f32.mrb[0].mxu0
      %v2943 = vadd.f32 %v2658, %v2942
      %v2944 = vpop.f32.mrb[0].mxu0
      %2945 = vmatprep.mubr.bf16.mxu0 %v2847
      %2946 = vmatmul.mubr.bf16.gmra.mrb[0].mxu0 %v2070
      %v2947 = vpop.f32.mrb[0].mxu0
      %v2948 = vadd.f32 %v2663, %v2947
      %v2949 = vpop.f32.mrb[0].mxu0
      %v2950 = vpop.f32.mrb[0].mxu0
      %v2951 = vadd.f32 %v2666, %v2950
      %v2952 = vpop.f32.mrb[0].mxu0
      %2953 = vmatprep.mubr.bf16.mxu0 %v2849
      %2954 = vmatmul.mubr.bf16.gmra.mrb[0].mxu0 %v2072
      %v2955 = vpop.f32.mrb[0].mxu0
      %v2956 = vadd.f32 %v2671, %v2955
      %v2957 = vpop.f32.mrb[0].mxu0
      %v2958 = vpop.f32.mrb[0].mxu0
      %v2959 = vadd.f32 %v2674, %v2958
      %v2960 = vpop.f32.mrb[0].mxu0
      %2961 = vmatprep.mubr.bf16.mxu0 %v2851
      %2962 = vmatmul.mubr.bf16.gmra.mrb[0].mxu0 %v2074
      %v2963 = vpop.f32.mrb[0].mxu0
      %v2964 = vadd.f32 %v2679, %v2963
      %v2965 = vpop.f32.mrb[0].mxu0
      %v2966 = vpop.f32.mrb[0].mxu0
      %v2967 = vadd.f32 %v2682, %v2966
      %v2968 = vpop.f32.mrb[0].mxu0
      %2969 = vmatprep.mubr.bf16.mxu0 %v2853
      %2970 = vmatmul.mubr.bf16.gmra.mrb[0].mxu0 %v2076
      %v2971 = vpop.f32.mrb[0].mxu0
      %v2972 = vadd.f32 %v2687, %v2971
      %v2973 = vpop.f32.mrb[0].mxu0
      %v2974 = vpop.f32.mrb[0].mxu0
      %v2975 = vadd.f32 %v2690, %v2974
      %v2976 = vpop.f32.mrb[0].mxu0
      %2977 = vmatprep.mubr.bf16.mxu0 %v2855
      %2978 = vmatmul.mubr.bf16.gmra.mrb[0].mxu0 %v2078
      %v2979 = vpop.f32.mrb[0].mxu0
      %v2980 = vadd.f32 %v2695, %v2979
      %v2981 = vpop.f32.mrb[0].mxu0
      %v2982 = vpop.f32.mrb[0].mxu0
      %v2983 = vadd.f32 %v2698, %v2982
      %v2984 = vpop.f32.mrb[0].mxu0
      %2985 = vmatprep.mubr.bf16.mxu0 %v2857
      %2986 = vmatmul.mubr.bf16.gmra.mrb[0].mxu0 %v2080
      %v2987 = vpop.f32.mrb[0].mxu0
      %v2988 = vadd.f32 %v2703, %v2987
      %v2989 = vpop.f32.mrb[0].mxu0
      %v2990 = vpop.f32.mrb[0].mxu0
      %v2991 = vadd.f32 %v2706, %v2990
      %v2992 = vpop.f32.mrb[0].mxu0
      %2993 = vmatprep.mubr.bf16.mxu0 %v2859
      %2994 = vmatmul.mubr.bf16.gmra.mrb[0].mxu0 %v2082
      %v2995 = vpop.f32.mrb[0].mxu0
      %v2996 = vadd.f32 %v2711, %v2995
      %v2997 = vpop.f32.mrb[0].mxu0
      %v2998 = vpop.f32.mrb[0].mxu0
      %v2999 = vadd.f32 %v2714, %v2998
      %v3000 = vpop.f32.mrb[0].mxu0
      %3001 = vmatprep.mubr.bf16.mxu0 %v2861
      %3002 = vmatmul.mubr.bf16.gmra.mrb[0].mxu0 %v2084
      %v3003 = vpop.f32.mrb[0].mxu0
      %v3004 = vadd.f32 %v2719, %v3003
      %v3005 = vpop.f32.mrb[0].mxu0
      %v3006 = vpop.f32.mrb[0].mxu0
      %v3007 = vadd.f32 %v2722, %v3006
      %v3008 = vpop.f32.mrb[0].mxu0
      %3009 = vmatprep.mubr.bf16.mxu0 %v2863
      %3010 = vmatmul.mubr.bf16.gmra.mrb[0].mxu0 %v2086
      %v3011 = vpop.f32.mrb[0].mxu0
      %v3012 = vadd.f32 %v2727, %v3011
      %v3013 = vpop.f32.mrb[0].mxu0
      %v3014 = vpop.f32.mrb[0].mxu0
      %v3015 = vadd.f32 %v2730, %v3014
      %v3016 = vpop.f32.mrb[0].mxu0
      %3017 = vmatprep.mubr.bf16.mxu0 %v2865
      %3018 = vmatmul.mubr.bf16.gmra.mrb[0].mxu0 %v2088
      %v3019 = vpop.f32.mrb[0].mxu0
      %v3020 = vadd.f32 %v2735, %v3019
      %v3021 = vpop.f32.mrb[0].mxu0
      %v3022 = vpop.f32.mrb[0].mxu0
      %v3023 = vadd.f32 %v2738, %v3022
      %v3024 = vpop.f32.mrb[0].mxu0
      %3025 = vmatprep.mubr.bf16.mxu0 %v2867
      %3026 = vmatmul.mubr.bf16.gmra.mrb[0].mxu0 %v2090
      %v3027 = vpop.f32.mrb[0].mxu0
      %v3028 = vadd.f32 %v2743, %v3027
      %v3029 = vpop.f32.mrb[0].mxu0
      %v3030 = vpop.f32.mrb[0].mxu0
      %v3031 = vadd.f32 %v2746, %v3030
      %v3032 = vpop.f32.mrb[0].mxu0
      %3033 = vmatprep.mubr.bf16.mxu0 %v2869
      %3034 = vmatmul.mubr.bf16.gmra.mrb[0].mxu0 %v2092
      %v3035 = vpop.f32.mrb[0].mxu0
      %v3036 = vadd.f32 %v2751, %v3035
      %v3037 = vpop.f32.mrb[0].mxu0
      %v3038 = vpop.f32.mrb[0].mxu0
      %v3039 = vadd.f32 %v2754, %v3038
      %v3040 = vpop.f32.mrb[0].mxu0
      %3041 = vmatprep.mubr.bf16.mxu0 %v2871
      %3042 = vmatmul.mubr.bf16.gmra.mrb[0].mxu0 %v2094
      %v3043 = vpop.f32.mrb[0].mxu0
      %v3044 = vadd.f32 %v2759, %v3043
      %v3045 = vpop.f32.mrb[0].mxu0
      %v3046 = vpop.f32.mrb[0].mxu0
      %v3047 = vadd.f32 %v2762, %v3046
      %v3048 = vpop.f32.mrb[0].mxu0
      %3049 = vdwg.mxu0
      %v3050 = vld [vmem:[#allocation2] sm:$0xfe]
      %v3051 = vld [vmem:[#allocation2 + $0x8] sm:$0xfe]
      %s3052 = scalar_lea.vmem %s1, 192
      %v3053 = vld [vmem:[%s3052] sm:$0xf]
      %v3054 = vld [vmem:[%s3052 + $0x4] sm:$0xf]
      %v3055 = vld [vmem:[%s3052 + $0x8] sm:$0xf]
      %v3056 = vld [vmem:[%s3052 + $0xc] sm:$0xf]
      %v3057 = vld [vmem:[%s3052 + $0x10] sm:$0xf]
      %v3058 = vld [vmem:[%s3052 + $0x14] sm:$0xf]
      %v3059 = vld [vmem:[%s3052 + $0x18] sm:$0xf]
      %v3060 = vld [vmem:[%s3052 + $0x1c] sm:$0xf]
      %v3061 = vld [vmem:[%s3052 + $0x20] sm:$0xf]
      %v3062 = vld [vmem:[%s3052 + $0x24] sm:$0xf]
      %v3063 = vld [vmem:[%s3052 + $0x28] sm:$0xf]
      %v3064 = vld [vmem:[%s3052 + $0x2c] sm:$0xf]
      %v3065 = vld [vmem:[%s3052 + $0x30] sm:$0xf]
      %v3066 = vld [vmem:[%s3052 + $0x34] sm:$0xf]
      %v3067 = vld [vmem:[%s3052 + $0x38] sm:$0xf]
      %v3068 = vld [vmem:[%s3052 + $0x3c] sm:$0xf]
      %v3069 = vld [vmem:[%s3052 + $0x40] sm:$0xf]
      %v3070 = vld [vmem:[%s3052 + $0x44] sm:$0xf]
      %v3071 = vld [vmem:[%s3052 + $0x48] sm:$0xf]
      %v3072 = vld [vmem:[%s3052 + $0x4c] sm:$0xf]
      %v3073 = vld [vmem:[%s3052 + $0x50] sm:$0xf]
      %v3074 = vld [vmem:[%s3052 + $0x54] sm:$0xf]
      %v3075 = vld [vmem:[%s3052 + $0x58] sm:$0xf]
      %v3076 = vld [vmem:[%s3052 + $0x5c] sm:$0xf]
      %v3115 = vrot.slane %v3050, 1
      %v3116 = vrot.slane %v2062, 1
      %v3117 = vsel %vm607, %v3115, %v3116
      %v3118 = vrot.slane %v3051, 1
      %v3119 = vrot.slane %v2063, 1
      %v3120 = vsel %vm607, %v3118, %v3119
      %v3121 = vrot.slane %v2064, 1
      %v3122 = vsel %vm607, %v3116, %v3121
      %v3123 = vrot.slane %v2065, 1
      %v3124 = vsel %vm607, %v3119, %v3123
      %v3125 = vrot.slane %v2066, 1
      %v3126 = vsel %vm607, %v3121, %v3125
      %v3127 = vrot.slane %v2067, 1
      %v3128 = vsel %vm607, %v3123, %v3127
      %v3129 = vrot.slane %v2068, 1
      %v3130 = vsel %vm607, %v3125, %v3129
      %v3131 = vrot.slane %v2069, 1
      %v3132 = vsel %vm607, %v3127, %v3131
      %v3133 = vrot.slane %v2070, 1
      %v3134 = vsel %vm607, %v3129, %v3133
      %v3135 = vrot.slane %v2071, 1
      %v3136 = vsel %vm607, %v3131, %v3135
      %v3137 = vrot.slane %v2072, 1
      %v3138 = vsel %vm607, %v3133, %v3137
      %v3139 = vrot.slane %v2073, 1
      %v3140 = vsel %vm607, %v3135, %v3139
      %v3141 = vrot.slane %v2074, 1
      %v3142 = vsel %vm607, %v3137, %v3141
      %v3143 = vrot.slane %v2075, 1
      %v3144 = vsel %vm607, %v3139, %v3143
      %v3145 = vrot.slane %v2076, 1
      %v3146 = vsel %vm607, %v3141, %v3145
      %v3147 = vrot.slane %v2077, 1
      %v3148 = vsel %vm607, %v3143, %v3147
      %v3149 = vrot.slane %v2078, 1
      %v3150 = vsel %vm607, %v3145, %v3149
      %v3151 = vrot.slane %v2079, 1
      %v3152 = vsel %vm607, %v3147, %v3151
      %v3153 = vrot.slane %v2080, 1
      %v3154 = vsel %vm607, %v3149, %v3153
      %v3155 = vrot.slane %v2081, 1
      %v3156 = vsel %vm607, %v3151, %v3155
      %v3157 = vrot.slane %v2082, 1
      %v3158 = vsel %vm607, %v3153, %v3157
      %v3159 = vrot.slane %v2083, 1
      %v3160 = vsel %vm607, %v3155, %v3159
      %v3161 = vrot.slane %v2084, 1
      %v3162 = vsel %vm607, %v3157, %v3161
      %v3163 = vrot.slane %v2085, 1
      %v3164 = vsel %vm607, %v3159, %v3163
      %v3165 = vrot.slane %v2086, 1
      %v3166 = vsel %vm607, %v3161, %v3165
      %v3167 = vrot.slane %v2087, 1
      %v3168 = vsel %vm607, %v3163, %v3167
      %v3169 = vrot.slane %v2088, 1
      %v3170 = vsel %vm607, %v3165, %v3169
      %v3171 = vrot.slane %v2089, 1
      %v3172 = vsel %vm607, %v3167, %v3171
      %v3173 = vrot.slane %v2090, 1
      %v3174 = vsel %vm607, %v3169, %v3173
      %v3175 = vrot.slane %v2091, 1
      %v3176 = vsel %vm607, %v3171, %v3175
      %v3177 = vrot.slane %v2092, 1
      %v3178 = vsel %vm607, %v3173, %v3177
      %v3179 = vrot.slane %v2093, 1
      %v3180 = vsel %vm607, %v3175, %v3179
      %v3181 = vrot.slane %v2094, 1
      %v3182 = vsel %vm607, %v3177, %v3181
      %v3183 = vrot.slane %v2095, 1
      %v3184 = vsel %vm607, %v3179, %v3183
      %v3185 = vrot.slane %v2120, 1
      %v3186 = vsel %vm607, %v3181, %v3185
      %v3187 = vrot.slane %v2121, 1
      %v3188 = vsel %vm607, %v3183, %v3187
      %v3231 = vunpack.c.l.b16 %v3053
      %v3232 = vunpack.c.l.b16 %v3054
      %v3233 = vunpack.c.l.b16 %v3055
      %v3234 = vunpack.c.l.b16 %v3056
      %v3235 = vunpack.c.l.b16 %v3057
      %v3236 = vunpack.c.l.b16 %v3058
      %v3237 = vunpack.c.l.b16 %v3059
      %v3238 = vunpack.c.l.b16 %v3060
      %v3239 = vunpack.c.l.b16 %v3061
      %v3240 = vunpack.c.l.b16 %v3062
      %v3241 = vunpack.c.l.b16 %v3063
      %v3242 = vunpack.c.l.b16 %v3064
      %v3243 = vunpack.c.l.b16 %v3065
      %v3244 = vunpack.c.l.b16 %v3066
      %v3245 = vunpack.c.l.b16 %v3067
      %v3246 = vunpack.c.l.b16 %v3068
      %v3247 = vunpack.c.l.b16 %v3069
      %v3248 = vunpack.c.l.b16 %v3070
      %v3249 = vunpack.c.l.b16 %v3071
      %v3250 = vunpack.c.l.b16 %v3072
      %v3251 = vunpack.c.l.b16 %v3073
      %v3252 = vunpack.c.l.b16 %v3074
      %v3253 = vunpack.c.l.b16 %v3075
      %v3254 = vunpack.c.l.b16 %v3076
      %v3255 = vpack.c.b16 %v3232, %v3231
      %v3256 = vpack.c.b16 %v3234, %v3233
      %v3257 = vpack.c.b16 %v3236, %v3235
      %v3258 = vpack.c.b16 %v3238, %v3237
      %v3259 = vpack.c.b16 %v3240, %v3239
      %v3260 = vpack.c.b16 %v3242, %v3241
      %v3261 = vpack.c.b16 %v3244, %v3243
      %v3262 = vpack.c.b16 %v3246, %v3245
      %v3263 = vpack.c.b16 %v3248, %v3247
      %v3264 = vpack.c.b16 %v3250, %v3249
      %v3265 = vpack.c.b16 %v3252, %v3251
      %v3266 = vpack.c.b16 %v3254, %v3253
      %v3280 = vsel %vm456, %v3120, 0
      %v3283 = vsel %vm456, %v3124, 0
      %v3286 = vsel %vm456, %v3128, 0
      %v3289 = vsel %vm456, %v3132, 0
      %v3292 = vsel %vm456, %v3136, 0
      %v3295 = vsel %vm456, %v3140, 0
      %v3298 = vsel %vm456, %v3144, 0
      %v3301 = vsel %vm456, %v3148, 0
      %v3304 = vsel %vm456, %v3152, 0
      %v3307 = vsel %vm456, %v3156, 0
      %v3310 = vsel %vm456, %v3160, 0
      %v3313 = vsel %vm456, %v3164, 0
      %v3316 = vsel %vm456, %v3168, 0
      %v3319 = vsel %vm456, %v3172, 0
      %v3322 = vsel %vm456, %v3176, 0
      %v3325 = vsel %vm456, %v3180, 0
      %v3328 = vsel %vm456, %v3184, 0
      %v3331 = vsel %vm456, %v3188, 0
      %3333 = vmatprep.subr.bf16.mxu0 0
      %3334 = vmatpush1.bf16.msra.mxu0 %v3255
      %3335 = vmatprep.subr.bf16.mxu0 0
      %3336 = vmatpush1.bf16.msra.mxu0 %v3256
      %3337 = vmatprep.subr.bf16.mxu0 0
      %3338 = vmatpush1.bf16.msra.mxu0 %v3257
      %3339 = vmatprep.subr.bf16.mxu0 0
      %3340 = vmatpush1.bf16.msra.mxu0 %v3258
      %3341 = vmatprep.subr.bf16.mxu0 0
      %3342 = vmatpush1.bf16.msra.mxu0 %v3259
      %3343 = vmatprep.subr.bf16.mxu0 0
      %3344 = vmatpush1.bf16.msra.mxu0 %v3260
      %3345 = vmatprep.subr.bf16.mxu0 0
      %3346 = vmatpush1.bf16.msra.mxu0 %v3261
      %3347 = vmatprep.subr.bf16.mxu0 0
      %3348 = vmatpush1.bf16.msra.mxu0 %v3262
      %3349 = vmatprep.subr.bf16.mxu0 0
      %3350 = vmatpush1.bf16.msra.mxu0 %v3263
      %3351 = vmatprep.subr.bf16.mxu0 0
      %3352 = vmatpush1.bf16.msra.mxu0 %v3264
      %3353 = vmatprep.subr.bf16.mxu0 0
      %3354 = vmatpush1.bf16.msra.mxu0 %v3265
      %3355 = vmatprep.subr.bf16.mxu0 0
      %3356 = vmatpush1.bf16.msra.mxu0 %v3266
      %3357 = vmatprep.subr.bf16.mxu0 0
      %3358 = vmatpush1.bf16.msra.mxu0 0
      %3359 = vmatprep.subr.bf16.mxu0 0
      %3360 = vmatpush1.bf16.msra.mxu0 0
      %3361 = vmatprep.subr.bf16.mxu0 0
      %3362 = vmatpush1.bf16.msra.mxu0 0
      %3363 = vmatprep.subr.bf16.mxu0 0
      %3364 = vmatpush1.bf16.msra.mxu0 0
      %3365 = vmatprep.mubr.bf16.mxu0 %v3280
      %3366 = vmatmul.mubr.bf16.gmra.mrb[0].mxu0 %v3117
      %v3367 = vpop.f32.mrb[0].mxu0
      %v3368 = vadd.f32 0.0, %v3367
      %v3369 = vpop.f32.mrb[0].mxu0
      %v3370 = vpop.f32.mrb[0].mxu0
      %v3371 = vadd.f32 0.0, %v3370
      %v3372 = vpop.f32.mrb[0].mxu0
      %3373 = vmatprep.mubr.bf16.mxu0 %v3283
      %3374 = vmatmul.mubr.bf16.gmra.mrb[0].mxu0 %v3122
      %v3375 = vpop.f32.mrb[0].mxu0
      %v3376 = vadd.f32 0.0, %v3375
      %v3377 = vpop.f32.mrb[0].mxu0
      %v3378 = vpop.f32.mrb[0].mxu0
      %v3379 = vadd.f32 0.0, %v3378
      %v3380 = vpop.f32.mrb[0].mxu0
      %3381 = vmatprep.mubr.bf16.mxu0 %v3286
      %3382 = vmatmul.mubr.bf16.gmra.mrb[0].mxu0 %v3126
      %v3383 = vpop.f32.mrb[0].mxu0
      %v3384 = vadd.f32 0.0, %v3383
      %v3385 = vpop.f32.mrb[0].mxu0
      %v3386 = vpop.f32.mrb[0].mxu0
      %v3387 = vadd.f32 0.0, %v3386
      %v3388 = vpop.f32.mrb[0].mxu0
      %3389 = vmatprep.mubr.bf16.mxu0 %v3289
      %3390 = vmatmul.mubr.bf16.gmra.mrb[0].mxu0 %v3130
      %v3391 = vpop.f32.mrb[0].mxu0
      %v3392 = vadd.f32 0.0, %v3391
      %v3393 = vpop.f32.mrb[0].mxu0
      %v3394 = vpop.f32.mrb[0].mxu0
      %v3395 = vadd.f32 0.0, %v3394
      %v3396 = vpop.f32.mrb[0].mxu0
      %3397 = vmatprep.mubr.bf16.mxu0 %v3292
      %3398 = vmatmul.mubr.bf16.gmra.mrb[0].mxu0 %v3134
      %v3399 = vpop.f32.mrb[0].mxu0
      %v3400 = vadd.f32 0.0, %v3399
      %v3401 = vpop.f32.mrb[0].mxu0
      %v3402 = vpop.f32.mrb[0].mxu0
      %v3403 = vadd.f32 0.0, %v3402
      %v3404 = vpop.f32.mrb[0].mxu0
      %3405 = vmatprep.mubr.bf16.mxu0 %v3295
      %3406 = vmatmul.mubr.bf16.gmra.mrb[0].mxu0 %v3138
      %v3407 = vpop.f32.mrb[0].mxu0
      %v3408 = vadd.f32 0.0, %v3407
      %v3409 = vpop.f32.mrb[0].mxu0
      %v3410 = vpop.f32.mrb[0].mxu0
      %v3411 = vadd.f32 0.0, %v3410
      %v3412 = vpop.f32.mrb[0].mxu0
      %3413 = vmatprep.mubr.bf16.mxu0 %v3298
      %3414 = vmatmul.mubr.bf16.gmra.mrb[0].mxu0 %v3142
      %v3415 = vpop.f32.mrb[0].mxu0
      %v3416 = vadd.f32 0.0, %v3415
      %v3417 = vpop.f32.mrb[0].mxu0
      %v3418 = vpop.f32.mrb[0].mxu0
      %v3419 = vadd.f32 0.0, %v3418
      %v3420 = vpop.f32.mrb[0].mxu0
      %3421 = vmatprep.mubr.bf16.mxu0 %v3301
      %3422 = vmatmul.mubr.bf16.gmra.mrb[0].mxu0 %v3146
      %v3423 = vpop.f32.mrb[0].mxu0
      %v3424 = vadd.f32 0.0, %v3423
      %v3425 = vpop.f32.mrb[0].mxu0
      %v3426 = vpop.f32.mrb[0].mxu0
      %v3427 = vadd.f32 0.0, %v3426
      %v3428 = vpop.f32.mrb[0].mxu0
      %3429 = vmatprep.mubr.bf16.mxu0 %v3304
      %3430 = vmatmul.mubr.bf16.gmra.mrb[0].mxu0 %v3150
      %v3431 = vpop.f32.mrb[0].mxu0
      %v3432 = vadd.f32 0.0, %v3431
      %v3433 = vpop.f32.mrb[0].mxu0
      %v3434 = vpop.f32.mrb[0].mxu0
      %v3435 = vadd.f32 0.0, %v3434
      %v3436 = vpop.f32.mrb[0].mxu0
      %3437 = vmatprep.mubr.bf16.mxu0 %v3307
      %3438 = vmatmul.mubr.bf16.gmra.mrb[0].mxu0 %v3154
      %v3439 = vpop.f32.mrb[0].mxu0
      %v3440 = vadd.f32 0.0, %v3439
      %v3441 = vpop.f32.mrb[0].mxu0
      %v3442 = vpop.f32.mrb[0].mxu0
      %v3443 = vadd.f32 0.0, %v3442
      %v3444 = vpop.f32.mrb[0].mxu0
      %3445 = vmatprep.mubr.bf16.mxu0 %v3310
      %3446 = vmatmul.mubr.bf16.gmra.mrb[0].mxu0 %v3158
      %v3447 = vpop.f32.mrb[0].mxu0
      %v3448 = vadd.f32 0.0, %v3447
      %v3449 = vpop.f32.mrb[0].mxu0
      %v3450 = vpop.f32.mrb[0].mxu0
      %v3451 = vadd.f32 0.0, %v3450
      %v3452 = vpop.f32.mrb[0].mxu0
      %3453 = vmatprep.mubr.bf16.mxu0 %v3313
      %3454 = vmatmul.mubr.bf16.gmra.mrb[0].mxu0 %v3162
      %v3455 = vpop.f32.mrb[0].mxu0
      %v3456 = vadd.f32 0.0, %v3455
      %v3457 = vpop.f32.mrb[0].mxu0
      %v3458 = vpop.f32.mrb[0].mxu0
      %v3459 = vadd.f32 0.0, %v3458
      %v3460 = vpop.f32.mrb[0].mxu0
      %3461 = vmatprep.mubr.bf16.mxu0 %v3316
      %3462 = vmatmul.mubr.bf16.gmra.mrb[0].mxu0 %v3166
      %v3463 = vpop.f32.mrb[0].mxu0
      %v3464 = vadd.f32 0.0, %v3463
      %v3465 = vpop.f32.mrb[0].mxu0
      %v3466 = vpop.f32.mrb[0].mxu0
      %v3467 = vadd.f32 0.0, %v3466
      %v3468 = vpop.f32.mrb[0].mxu0
      %3469 = vmatprep.mubr.bf16.mxu0 %v3319
      %3470 = vmatmul.mubr.bf16.gmra.mrb[0].mxu0 %v3170
      %v3471 = vpop.f32.mrb[0].mxu0
      %v3472 = vadd.f32 0.0, %v3471
      %v3473 = vpop.f32.mrb[0].mxu0
      %v3474 = vpop.f32.mrb[0].mxu0
      %v3475 = vadd.f32 0.0, %v3474
      %v3476 = vpop.f32.mrb[0].mxu0
      %3477 = vmatprep.mubr.bf16.mxu0 %v3322
      %3478 = vmatmul.mubr.bf16.gmra.mrb[0].mxu0 %v3174
      %v3479 = vpop.f32.mrb[0].mxu0
      %v3480 = vadd.f32 0.0, %v3479
      %v3481 = vpop.f32.mrb[0].mxu0
      %v3482 = vpop.f32.mrb[0].mxu0
      %v3483 = vadd.f32 0.0, %v3482
      %v3484 = vpop.f32.mrb[0].mxu0
      %3485 = vmatprep.mubr.bf16.mxu0 %v3325
      %3486 = vmatmul.mubr.bf16.gmra.mrb[0].mxu0 %v3178
      %v3487 = vpop.f32.mrb[0].mxu0
      %v3488 = vadd.f32 0.0, %v3487
      %v3489 = vpop.f32.mrb[0].mxu0
      %v3490 = vpop.f32.mrb[0].mxu0
      %v3491 = vadd.f32 0.0, %v3490
      %v3492 = vpop.f32.mrb[0].mxu0
      %3493 = vmatprep.mubr.bf16.mxu0 %v3328
      %3494 = vmatmul.mubr.bf16.gmra.mrb[0].mxu0 %v3182
      %v3495 = vpop.f32.mrb[0].mxu0
      %v3496 = vadd.f32 0.0, %v3495
      %v3497 = vpop.f32.mrb[0].mxu0
      %v3498 = vpop.f32.mrb[0].mxu0
      %v3499 = vadd.f32 0.0, %v3498
      %v3500 = vpop.f32.mrb[0].mxu0
      %3501 = vmatprep.mubr.bf16.mxu0 %v3331
      %3502 = vmatmul.mubr.bf16.gmra.mrb[0].mxu0 %v3186
      %v3503 = vpop.f32.mrb[0].mxu0
      %v3504 = vadd.f32 0.0, %v3503
      %v3505 = vpop.f32.mrb[0].mxu0
      %v3506 = vpop.f32.mrb[0].mxu0
      %v3507 = vadd.f32 0.0, %v3506
      %v3508 = vpop.f32.mrb[0].mxu0
      %3509 = vdwg.mxu0
      %v3510 = vadd.f32 %v2908, %v3368
      %v3511 = vadd.f32 %v2911, %v3371
      %v3512 = vadd.f32 %v2916, %v3376
      %v3513 = vadd.f32 %v2919, %v3379
      %v3514 = vadd.f32 %v2924, %v3384
      %v3515 = vadd.f32 %v2927, %v3387
      %v3516 = vadd.f32 %v2932, %v3392
      %v3517 = vadd.f32 %v2935, %v3395
      %v3518 = vadd.f32 %v2940, %v3400
      %v3519 = vadd.f32 %v2943, %v3403
      %v3520 = vadd.f32 %v2948, %v3408
      %v3521 = vadd.f32 %v2951, %v3411
      %v3522 = vadd.f32 %v2956, %v3416
      %v3523 = vadd.f32 %v2959, %v3419
      %v3524 = vadd.f32 %v2964, %v3424
      %v3525 = vadd.f32 %v2967, %v3427
      %v3526 = vadd.f32 %v2972, %v3432
      %v3527 = vadd.f32 %v2975, %v3435
      %v3528 = vadd.f32 %v2980, %v3440
      %v3529 = vadd.f32 %v2983, %v3443
      %v3530 = vadd.f32 %v2988, %v3448
      %v3531 = vadd.f32 %v2991, %v3451
      %v3532 = vadd.f32 %v2996, %v3456
      %v3533 = vadd.f32 %v2999, %v3459
      %v3534 = vadd.f32 %v3004, %v3464
      %v3535 = vadd.f32 %v3007, %v3467
      %v3536 = vadd.f32 %v3012, %v3472
      %v3537 = vadd.f32 %v3015, %v3475
      %v3538 = vadd.f32 %v3020, %v3480
      %v3539 = vadd.f32 %v3023, %v3483
      %v3540 = vadd.f32 %v3028, %v3488
      %v3541 = vadd.f32 %v3031, %v3491
      %v3542 = vadd.f32 %v3036, %v3496
      %v3543 = vadd.f32 %v3039, %v3499
      %v3544 = vadd.f32 %v3044, %v3504
      %v3545 = vadd.f32 %v3047, %v3507
      %v3546 = vld [vmem:[%s3] sm:$0x1]
      %v3547 = vadd.f32 %v3546, %v2055
      %v3549 = vlaneseq
      %v3550 = vshrl.u32 %v3549, 7
      %v3551 = vsub.s32 0, %v3550
      %v3552 = vrot.slane %v3547, %v3551
      %v3554 = vadd.f32 %v3510, %v3552
      %v3555 = vadd.f32 %v3511, %v3552
      %v3556 = vadd.f32 %v3512, %v3552
      %v3557 = vadd.f32 %v3513, %v3552
      %v3558 = vadd.f32 %v3514, %v3552
      %v3559 = vadd.f32 %v3515, %v3552
      %v3560 = vadd.f32 %v3516, %v3552
      %v3561 = vadd.f32 %v3517, %v3552
      %v3562 = vadd.f32 %v3518, %v3552
      %v3563 = vadd.f32 %v3519, %v3552
      %v3564 = vadd.f32 %v3520, %v3552
      %v3565 = vadd.f32 %v3521, %v3552
      %v3566 = vadd.f32 %v3522, %v3552
      %v3567 = vadd.f32 %v3523, %v3552
      %v3568 = vadd.f32 %v3524, %v3552
      %v3569 = vadd.f32 %v3525, %v3552
      %v3570 = vadd.f32 %v3526, %v3552
      %v3571 = vadd.f32 %v3527, %v3552
      %v3572 = vadd.f32 %v3528, %v3552
      %v3573 = vadd.f32 %v3529, %v3552
      %v3574 = vadd.f32 %v3530, %v3552
      %v3575 = vadd.f32 %v3531, %v3552
      %v3576 = vadd.f32 %v3532, %v3552
      %v3577 = vadd.f32 %v3533, %v3552
      %v3578 = vadd.f32 %v3534, %v3552
      %v3579 = vadd.f32 %v3535, %v3552
      %v3580 = vadd.f32 %v3536, %v3552
      %v3581 = vadd.f32 %v3537, %v3552
      %v3582 = vadd.f32 %v3538, %v3552
      %v3583 = vadd.f32 %v3539, %v3552
      %v3584 = vadd.f32 %v3540, %v3552
      %v3585 = vadd.f32 %v3541, %v3552
      %v3586 = vadd.f32 %v3542, %v3552
      %v3587 = vadd.f32 %v3543, %v3552
      %v3588 = vadd.f32 %v3544, %v3552
      %v3589 = vadd.f32 %v3545, %v3552
      %v3590 = vxor.u32 %v3554, 2147483648
      %v3591 = vxor.u32 %v3555, 2147483648
      %v3592 = vxor.u32 %v3556, 2147483648
      %v3593 = vxor.u32 %v3557, 2147483648
      %v3594 = vxor.u32 %v3558, 2147483648
      %v3595 = vxor.u32 %v3559, 2147483648
      %v3596 = vxor.u32 %v3560, 2147483648
      %v3597 = vxor.u32 %v3561, 2147483648
      %v3598 = vxor.u32 %v3562, 2147483648
      %v3599 = vxor.u32 %v3563, 2147483648
      %v3600 = vxor.u32 %v3564, 2147483648
      %v3601 = vxor.u32 %v3565, 2147483648
      %v3602 = vxor.u32 %v3566, 2147483648
      %v3603 = vxor.u32 %v3567, 2147483648
      %v3604 = vxor.u32 %v3568, 2147483648
      %v3605 = vxor.u32 %v3569, 2147483648
      %v3606 = vxor.u32 %v3570, 2147483648
      %v3607 = vxor.u32 %v3571, 2147483648
      %v3608 = vxor.u32 %v3572, 2147483648
      %v3609 = vxor.u32 %v3573, 2147483648
      %v3610 = vxor.u32 %v3574, 2147483648
      %v3611 = vxor.u32 %v3575, 2147483648
      %v3612 = vxor.u32 %v3576, 2147483648
      %v3613 = vxor.u32 %v3577, 2147483648
      %v3614 = vxor.u32 %v3578, 2147483648
      %v3615 = vxor.u32 %v3579, 2147483648
      %v3616 = vxor.u32 %v3580, 2147483648
      %v3617 = vxor.u32 %v3581, 2147483648
      %v3618 = vxor.u32 %v3582, 2147483648
      %v3619 = vxor.u32 %v3583, 2147483648
      %v3620 = vxor.u32 %v3584, 2147483648
      %v3621 = vxor.u32 %v3585, 2147483648
      %v3622 = vxor.u32 %v3586, 2147483648
      %v3623 = vxor.u32 %v3587, 2147483648
      %v3624 = vxor.u32 %v3588, 2147483648
      %v3625 = vxor.u32 %v3589, 2147483648
      %v3626 = vmul.f32 %v3590, 1.442695
      %v3627 = vpow.pop %v3626
      %v3628 = vmul.f32 %v3591, 1.442695
      %v3629 = vpow.pop %v3628
      %v3630 = vmul.f32 %v3592, 1.442695
      %v3631 = vpow.pop %v3630
      %v3632 = vmul.f32 %v3593, 1.442695
      %v3633 = vpow.pop %v3632
      %v3634 = vmul.f32 %v3594, 1.442695
      %v3635 = vpow.pop %v3634
      %v3636 = vmul.f32 %v3595, 1.442695
      %v3637 = vpow.pop %v3636
      %v3638 = vmul.f32 %v3596, 1.442695
      %v3639 = vpow.pop %v3638
      %v3640 = vmul.f32 %v3597, 1.442695
      %v3641 = vpow.pop %v3640
      %v3642 = vmul.f32 %v3598, 1.442695
      %v3643 = vpow.pop %v3642
      %v3644 = vmul.f32 %v3599, 1.442695
      %v3645 = vpow.pop %v3644
      %v3646 = vmul.f32 %v3600, 1.442695
      %v3647 = vpow.pop %v3646
      %v3648 = vmul.f32 %v3601, 1.442695
      %v3649 = vpow.pop %v3648
      %v3650 = vmul.f32 %v3602, 1.442695
      %v3651 = vpow.pop %v3650
      %v3652 = vmul.f32 %v3603, 1.442695
      %v3653 = vpow.pop %v3652
      %v3654 = vmul.f32 %v3604, 1.442695
      %v3655 = vpow.pop %v3654
      %v3656 = vmul.f32 %v3605, 1.442695
      %v3657 = vpow.pop %v3656
      %v3658 = vmul.f32 %v3606, 1.442695
      %v3659 = vpow.pop %v3658
      %v3660 = vmul.f32 %v3607, 1.442695
      %v3661 = vpow.pop %v3660
      %v3662 = vmul.f32 %v3608, 1.442695
      %v3663 = vpow.pop %v3662
      %v3664 = vmul.f32 %v3609, 1.442695
      %v3665 = vpow.pop %v3664
      %v3666 = vmul.f32 %v3610, 1.442695
      %v3667 = vpow.pop %v3666
      %v3668 = vmul.f32 %v3611, 1.442695
      %v3669 = vpow.pop %v3668
      %v3670 = vmul.f32 %v3612, 1.442695
      %v3671 = vpow.pop %v3670
      %v3672 = vmul.f32 %v3613, 1.442695
      %v3673 = vpow.pop %v3672
      %v3674 = vmul.f32 %v3614, 1.442695
      %v3675 = vpow.pop %v3674
      %v3676 = vmul.f32 %v3615, 1.442695
      %v3677 = vpow.pop %v3676
      %v3678 = vmul.f32 %v3616, 1.442695
      %v3679 = vpow.pop %v3678
      %v3680 = vmul.f32 %v3617, 1.442695
      %v3681 = vpow.pop %v3680
      %v3682 = vmul.f32 %v3618, 1.442695
      %v3683 = vpow.pop %v3682
      %v3684 = vmul.f32 %v3619, 1.442695
      %v3685 = vpow.pop %v3684
      %v3686 = vmul.f32 %v3620, 1.442695
      %v3687 = vpow.pop %v3686
      %v3688 = vmul.f32 %v3621, 1.442695
      %v3689 = vpow.pop %v3688
      %v3690 = vmul.f32 %v3622, 1.442695
      %v3691 = vpow.pop %v3690
      %v3692 = vmul.f32 %v3623, 1.442695
      %v3693 = vpow.pop %v3692
      %v3694 = vmul.f32 %v3624, 1.442695
      %v3695 = vpow.pop %v3694
      %v3696 = vmul.f32 %v3625, 1.442695
      %v3697 = vpow.pop %v3696
      %v3698 = vadd.f32 %v3627, 1.0
      %v3699 = vadd.f32 %v3629, 1.0
      %v3700 = vadd.f32 %v3631, 1.0
      %v3701 = vadd.f32 %v3633, 1.0
      %v3702 = vadd.f32 %v3635, 1.0
      %v3703 = vadd.f32 %v3637, 1.0
      %v3704 = vadd.f32 %v3639, 1.0
      %v3705 = vadd.f32 %v3641, 1.0
      %v3706 = vadd.f32 %v3643, 1.0
      %v3707 = vadd.f32 %v3645, 1.0
      %v3708 = vadd.f32 %v3647, 1.0
      %v3709 = vadd.f32 %v3649, 1.0
      %v3710 = vadd.f32 %v3651, 1.0
      %v3711 = vadd.f32 %v3653, 1.0
      %v3712 = vadd.f32 %v3655, 1.0
      %v3713 = vadd.f32 %v3657, 1.0
      %v3714 = vadd.f32 %v3659, 1.0
      %v3715 = vadd.f32 %v3661, 1.0
      %v3716 = vadd.f32 %v3663, 1.0
      %v3717 = vadd.f32 %v3665, 1.0
      %v3718 = vadd.f32 %v3667, 1.0
      %v3719 = vadd.f32 %v3669, 1.0
      %v3720 = vadd.f32 %v3671, 1.0
      %v3721 = vadd.f32 %v3673, 1.0
      %v3722 = vadd.f32 %v3675, 1.0
      %v3723 = vadd.f32 %v3677, 1.0
      %v3724 = vadd.f32 %v3679, 1.0
      %v3725 = vadd.f32 %v3681, 1.0
      %v3726 = vadd.f32 %v3683, 1.0
      %v3727 = vadd.f32 %v3685, 1.0
      %v3728 = vadd.f32 %v3687, 1.0
      %v3729 = vadd.f32 %v3689, 1.0
      %v3730 = vadd.f32 %v3691, 1.0
      %v3731 = vadd.f32 %v3693, 1.0
      %v3732 = vadd.f32 %v3695, 1.0
      %v3733 = vadd.f32 %v3697, 1.0
      %v3734 = vrcp.pop %v3698
      %v3735 = vmul.f32 1.0, %v3734
      %v3736 = vrcp.pop %v3699
      %v3737 = vmul.f32 1.0, %v3736
      %v3738 = vrcp.pop %v3700
      %v3739 = vmul.f32 1.0, %v3738
      %v3740 = vrcp.pop %v3701
      %v3741 = vmul.f32 1.0, %v3740
      %v3742 = vrcp.pop %v3702
      %v3743 = vmul.f32 1.0, %v3742
      %v3744 = vrcp.pop %v3703
      %v3745 = vmul.f32 1.0, %v3744
      %v3746 = vrcp.pop %v3704
      %v3747 = vmul.f32 1.0, %v3746
      %v3748 = vrcp.pop %v3705
      %v3749 = vmul.f32 1.0, %v3748
      %v3750 = vrcp.pop %v3706
      %v3751 = vmul.f32 1.0, %v3750
      %v3752 = vrcp.pop %v3707
      %v3753 = vmul.f32 1.0, %v3752
      %v3754 = vrcp.pop %v3708
      %v3755 = vmul.f32 1.0, %v3754
      %v3756 = vrcp.pop %v3709
      %v3757 = vmul.f32 1.0, %v3756
      %v3758 = vrcp.pop %v3710
      %v3759 = vmul.f32 1.0, %v3758
      %v3760 = vrcp.pop %v3711
      %v3761 = vmul.f32 1.0, %v3760
      %v3762 = vrcp.pop %v3712
      %v3763 = vmul.f32 1.0, %v3762
      %v3764 = vrcp.pop %v3713
      %v3765 = vmul.f32 1.0, %v3764
      %v3766 = vrcp.pop %v3714
      %v3767 = vmul.f32 1.0, %v3766
      %v3768 = vrcp.pop %v3715
      %v3769 = vmul.f32 1.0, %v3768
      %v3770 = vrcp.pop %v3716
      %v3771 = vmul.f32 1.0, %v3770
      %v3772 = vrcp.pop %v3717
      %v3773 = vmul.f32 1.0, %v3772
      %v3774 = vrcp.pop %v3718
      %v3775 = vmul.f32 1.0, %v3774
      %v3776 = vrcp.pop %v3719
      %v3777 = vmul.f32 1.0, %v3776
      %v3778 = vrcp.pop %v3720
      %v3779 = vmul.f32 1.0, %v3778
      %v3780 = vrcp.pop %v3721
      %v3781 = vmul.f32 1.0, %v3780
      %v3782 = vrcp.pop %v3722
      %v3783 = vmul.f32 1.0, %v3782
      %v3784 = vrcp.pop %v3723
      %v3785 = vmul.f32 1.0, %v3784
      %v3786 = vrcp.pop %v3724
      %v3787 = vmul.f32 1.0, %v3786
      %v3788 = vrcp.pop %v3725
      %v3789 = vmul.f32 1.0, %v3788
      %v3790 = vrcp.pop %v3726
      %v3791 = vmul.f32 1.0, %v3790
      %v3792 = vrcp.pop %v3727
      %v3793 = vmul.f32 1.0, %v3792
      %v3794 = vrcp.pop %v3728
      %v3795 = vmul.f32 1.0, %v3794
      %v3796 = vrcp.pop %v3729
      %v3797 = vmul.f32 1.0, %v3796
      %v3798 = vrcp.pop %v3730
      %v3799 = vmul.f32 1.0, %v3798
      %v3800 = vrcp.pop %v3731
      %v3801 = vmul.f32 1.0, %v3800
      %v3802 = vrcp.pop %v3732
      %v3803 = vmul.f32 1.0, %v3802
      %v3804 = vrcp.pop %v3733
      %v3805 = vmul.f32 1.0, %v3804
      %3806 = vrot.lane.b32.xlu0 %v1778, 32
      %v3807 = vpop.permute.xlu0 %3806
      %3808 = vrot.lane.b32.xlu0 %v1780, 32
      %v3809 = vpop.permute.xlu0 %3808
      %3810 = vrot.lane.b32.xlu0 %v1782, 32
      %v3811 = vpop.permute.xlu0 %3810
      %3812 = vrot.lane.b32.xlu0 %v1784, 32
      %v3813 = vpop.permute.xlu0 %3812
      %3814 = vrot.lane.b32.xlu0 %v1786, 32
      %v3815 = vpop.permute.xlu0 %3814
      %3816 = vrot.lane.b32.xlu0 %v1788, 32
      %v3817 = vpop.permute.xlu0 %3816
      %3818 = vrot.lane.b32.xlu0 %v1790, 32
      %v3819 = vpop.permute.xlu0 %3818
      %3820 = vrot.lane.b32.xlu0 %v1792, 32
      %v3821 = vpop.permute.xlu0 %3820
      %3822 = vrot.lane.b32.xlu0 %v1794, 32
      %v3823 = vpop.permute.xlu0 %3822
      %3824 = vrot.lane.b32.xlu0 %v1796, 32
      %v3825 = vpop.permute.xlu0 %3824
      %3826 = vrot.lane.b32.xlu0 %v1798, 32
      %v3827 = vpop.permute.xlu0 %3826
      %3828 = vrot.lane.b32.xlu0 %v1800, 32
      %v3829 = vpop.permute.xlu0 %3828
      %3830 = vrot.lane.b32.xlu0 %v1802, 32
      %v3831 = vpop.permute.xlu0 %3830
      %3832 = vrot.lane.b32.xlu0 %v1804, 32
      %v3833 = vpop.permute.xlu0 %3832
      %3834 = vrot.lane.b32.xlu0 %v1806, 32
      %v3835 = vpop.permute.xlu0 %3834
      %3836 = vrot.lane.b32.xlu0 %v1808, 32
      %v3837 = vpop.permute.xlu0 %3836
      %3838 = vrot.lane.b32.xlu0 %v1810, 32
      %v3839 = vpop.permute.xlu0 %3838
      %3840 = vrot.lane.b32.xlu0 %v1812, 32
      %v3841 = vpop.permute.xlu0 %3840
      %3842 = vrot.lane.b32.xlu0 %v1814, 32
      %v3843 = vpop.permute.xlu0 %3842
      %3844 = vrot.lane.b32.xlu0 %v1816, 32
      %v3845 = vpop.permute.xlu0 %3844
      %3846 = vrot.lane.b32.xlu0 %v1818, 32
      %v3847 = vpop.permute.xlu0 %3846
      %3848 = vrot.lane.b32.xlu0 %v1820, 32
      %v3849 = vpop.permute.xlu0 %3848
      %3850 = vrot.lane.b32.xlu0 %v1822, 32
      %v3851 = vpop.permute.xlu0 %3850
      %3852 = vrot.lane.b32.xlu0 %v1824, 32
      %v3853 = vpop.permute.xlu0 %3852
      %3854 = vrot.lane.b32.xlu0 %v1826, 32
      %v3855 = vpop.permute.xlu0 %3854
      %3856 = vrot.lane.b32.xlu0 %v1828, 32
      %v3857 = vpop.permute.xlu0 %3856
      %3858 = vrot.lane.b32.xlu0 %v1830, 32
      %v3859 = vpop.permute.xlu0 %3858
      %3860 = vrot.lane.b32.xlu0 %v1832, 32
      %v3861 = vpop.permute.xlu0 %3860
      %3862 = vrot.lane.b32.xlu0 %v1834, 32
      %v3863 = vpop.permute.xlu0 %3862
      %3864 = vrot.lane.b32.xlu0 %v1836, 32
      %v3865 = vpop.permute.xlu0 %3864
      %3866 = vrot.lane.b32.xlu0 %v1838, 32
      %v3867 = vpop.permute.xlu0 %3866
      %3868 = vrot.lane.b32.xlu0 %v1840, 32
      %v3869 = vpop.permute.xlu0 %3868
      %3870 = vrot.lane.b32.xlu0 %v1842, 32
      %v3871 = vpop.permute.xlu0 %3870
      %3872 = vrot.lane.b32.xlu0 %v1844, 32
      %v3873 = vpop.permute.xlu0 %3872
      %3874 = vrot.lane.b32.xlu0 %v1846, 32
      %v3875 = vpop.permute.xlu0 %3874
      %3876 = vrot.lane.b32.xlu0 %v1848, 32
      %v3877 = vpop.permute.xlu0 %3876
      %v3914 = vmul.f32 %v3735, %v3807
      %v3915 = vmul.f32 %v3737, %v3809
      %v3916 = vmul.f32 %v3739, %v3811
      %v3917 = vmul.f32 %v3741, %v3813
      %v3918 = vmul.f32 %v3743, %v3815
      %v3919 = vmul.f32 %v3745, %v3817
      %v3920 = vmul.f32 %v3747, %v3819
      %v3921 = vmul.f32 %v3749, %v3821
      %v3922 = vmul.f32 %v3751, %v3823
      %v3923 = vmul.f32 %v3753, %v3825
      %v3924 = vmul.f32 %v3755, %v3827
      %v3925 = vmul.f32 %v3757, %v3829
      %v3926 = vmul.f32 %v3759, %v3831
      %v3927 = vmul.f32 %v3761, %v3833
      %v3928 = vmul.f32 %v3763, %v3835
      %v3929 = vmul.f32 %v3765, %v3837
      %v3930 = vmul.f32 %v3767, %v3839
      %v3931 = vmul.f32 %v3769, %v3841
      %v3932 = vmul.f32 %v3771, %v3843
      %v3933 = vmul.f32 %v3773, %v3845
      %v3934 = vmul.f32 %v3775, %v3847
      %v3935 = vmul.f32 %v3777, %v3849
      %v3936 = vmul.f32 %v3779, %v3851
      %v3937 = vmul.f32 %v3781, %v3853
      %v3938 = vmul.f32 %v3783, %v3855
      %v3939 = vmul.f32 %v3785, %v3857
      %v3940 = vmul.f32 %v3787, %v3859
      %v3941 = vmul.f32 %v3789, %v3861
      %v3942 = vmul.f32 %v3791, %v3863
      %v3943 = vmul.f32 %v3793, %v3865
      %v3944 = vmul.f32 %v3795, %v3867
      %v3945 = vmul.f32 %v3797, %v3869
      %v3946 = vmul.f32 %v3799, %v3871
      %v3947 = vmul.f32 %v3801, %v3873
      %v3948 = vmul.f32 %v3803, %v3875
      %v3949 = vmul.f32 %v3805, %v3877
      %v3950 = vpack.c.bf16 %v3915, %v3914
      %v3951 = vpack.c.bf16 %v3917, %v3916
      %v3952 = vpack.c.bf16 %v3919, %v3918
      %v3953 = vpack.c.bf16 %v3921, %v3920
      %v3954 = vpack.c.bf16 %v3923, %v3922
      %v3955 = vpack.c.bf16 %v3925, %v3924
      %v3956 = vpack.c.bf16 %v3927, %v3926
      %v3957 = vpack.c.bf16 %v3929, %v3928
      %v3958 = vpack.c.bf16 %v3931, %v3930
      %v3959 = vpack.c.bf16 %v3933, %v3932
      %v3960 = vpack.c.bf16 %v3935, %v3934
      %v3961 = vpack.c.bf16 %v3937, %v3936
      %v3962 = vpack.c.bf16 %v3939, %v3938
      %v3963 = vpack.c.bf16 %v3941, %v3940
      %v3964 = vpack.c.bf16 %v3943, %v3942
      %v3965 = vpack.c.bf16 %v3945, %v3944
      %v3966 = vpack.c.bf16 %v3947, %v3946
      %v3967 = vpack.c.bf16 %v3949, %v3948
      %3968 = vst.msk [vmem:[#allocation3] sm:$0xff] %vm1290, 0
      %vm3969 = vcmask 254976
      %vm3970 = vsmask.f32 1280
      %vm3971 = vmand %vm3969, %vm3970
      %v3972 = vld [vmem:[#allocation3 + $0x8] sm:$0x3]
      %v3973 = vsel %vm3971, 0, %v3972
      %3974 = vst [vmem:[#allocation3 + $0x8] sm:$0x3] %v3973
      %vm3975 = vcmask 516352
      %vm3976 = vsmask.f32 256
      %vm3977 = vmand %vm3975, %vm3976
      %v3978 = vld [vmem:[#allocation3] sm:$0x1]
      %v3979 = vsel %vm3977, 0, %v3978
      %3980 = vst [vmem:[#allocation3] sm:$0x1] %v3979
      %vm3981 = vsmask.f32 7938
      %vm3982 = vmand %vm3975, %vm3981
      %v3983 = vld [vmem:[#allocation3 + $0x90] sm:$0x1]
      %v3984 = vsel %vm3982, 0, %v3983
      %3985 = vst [vmem:[#allocation3 + $0x90] sm:$0x1] %v3984
      %vm3986 = vcmask 785927
      %vm3987 = vsmask.f32 7966
      %vm3988 = vmand %vm3986, %vm3987
      %v3989 = vld [vmem:[#allocation3 + $0x80] sm:$0x80]
      %v3990 = vsel %vm3988, 0, %v3989
      %3991 = vst [vmem:[#allocation3 + $0x80] sm:$0x80] %v3990
      %vm3992 = vcmask 785920
      %3993 = vst.msk [vmem:[#allocation3 + $0x88] sm:$0xff] %vm3992, 0
      %vm3994 = vcmask 778752
      %3995 = vst.msk [vmem:[#allocation3 + $0x90] sm:$0x1] %vm3994, 0
      %v3997 = vshrl.u32 %v3950, 16
      %v3999 = vrot.slane %v3997, 6
      %v4000 = vshll.u32 %v3950, 16
      %v4002 = vrot.slane %v4000, 7
      %v4003 = vor.u32 %v3999, %v4002
      %v4005 = vshrl.u32 %v3951, 16
      %v4007 = vrot.slane %v4005, 6
      %v4008 = vshll.u32 %v3951, 16
      %v4010 = vrot.slane %v4008, 7
      %v4011 = vor.u32 %v4007, %v4010
      %v4012 = vsel %vm3970, %v4003, %v4011
      %v4014 = vshrl.u32 %v3952, 16
      %v4016 = vrot.slane %v4014, 6
      %v4017 = vshll.u32 %v3952, 16
      %v4019 = vrot.slane %v4017, 7
      %v4020 = vor.u32 %v4016, %v4019
      %v4021 = vsel %vm3970, %v4011, %v4020
      %v4023 = vshrl.u32 %v3953, 16
      %v4025 = vrot.slane %v4023, 6
      %v4026 = vshll.u32 %v3953, 16
      %v4028 = vrot.slane %v4026, 7
      %v4029 = vor.u32 %v4025, %v4028
      %v4030 = vsel %vm3970, %v4020, %v4029
      %v4032 = vshrl.u32 %v3954, 16
      %v4034 = vrot.slane %v4032, 6
      %v4035 = vshll.u32 %v3954, 16
      %v4037 = vrot.slane %v4035, 7
      %v4038 = vor.u32 %v4034, %v4037
      %v4039 = vsel %vm3970, %v4029, %v4038
      %v4041 = vshrl.u32 %v3955, 16
      %v4043 = vrot.slane %v4041, 6
      %v4044 = vshll.u32 %v3955, 16
      %v4046 = vrot.slane %v4044, 7
      %v4047 = vor.u32 %v4043, %v4046
      %v4048 = vsel %vm3970, %v4038, %v4047
      %v4050 = vshrl.u32 %v3956, 16
      %v4052 = vrot.slane %v4050, 6
      %v4053 = vshll.u32 %v3956, 16
      %v4055 = vrot.slane %v4053, 7
      %v4056 = vor.u32 %v4052, %v4055
      %v4057 = vsel %vm3970, %v4047, %v4056
      %v4059 = vshrl.u32 %v3957, 16
      %v4061 = vrot.slane %v4059, 6
      %v4062 = vshll.u32 %v3957, 16
      %v4064 = vrot.slane %v4062, 7
      %v4065 = vor.u32 %v4061, %v4064
      %v4066 = vsel %vm3970, %v4056, %v4065
      %v4068 = vshrl.u32 %v3958, 16
      %v4070 = vrot.slane %v4068, 6
      %v4071 = vshll.u32 %v3958, 16
      %v4073 = vrot.slane %v4071, 7
      %v4074 = vor.u32 %v4070, %v4073
      %v4075 = vsel %vm3970, %v4065, %v4074
      %v4077 = vshrl.u32 %v3959, 16
      %v4079 = vrot.slane %v4077, 6
      %v4080 = vshll.u32 %v3959, 16
      %v4082 = vrot.slane %v4080, 7
      %v4083 = vor.u32 %v4079, %v4082
      %v4084 = vsel %vm3970, %v4074, %v4083
      %v4086 = vshrl.u32 %v3960, 16
      %v4088 = vrot.slane %v4086, 6
      %v4089 = vshll.u32 %v3960, 16
      %v4091 = vrot.slane %v4089, 7
      %v4092 = vor.u32 %v4088, %v4091
      %v4093 = vsel %vm3970, %v4083, %v4092
      %v4095 = vshrl.u32 %v3961, 16
      %v4097 = vrot.slane %v4095, 6
      %v4098 = vshll.u32 %v3961, 16
      %v4100 = vrot.slane %v4098, 7
      %v4101 = vor.u32 %v4097, %v4100
      %v4102 = vsel %vm3970, %v4092, %v4101
      %v4104 = vshrl.u32 %v3962, 16
      %v4106 = vrot.slane %v4104, 6
      %v4107 = vshll.u32 %v3962, 16
      %v4109 = vrot.slane %v4107, 7
      %v4110 = vor.u32 %v4106, %v4109
      %v4111 = vsel %vm3970, %v4101, %v4110
      %v4113 = vshrl.u32 %v3963, 16
      %v4115 = vrot.slane %v4113, 6
      %v4116 = vshll.u32 %v3963, 16
      %v4118 = vrot.slane %v4116, 7
      %v4119 = vor.u32 %v4115, %v4118
      %v4120 = vsel %vm3970, %v4110, %v4119
      %v4122 = vshrl.u32 %v3964, 16
      %v4124 = vrot.slane %v4122, 6
      %v4125 = vshll.u32 %v3964, 16
      %v4127 = vrot.slane %v4125, 7
      %v4128 = vor.u32 %v4124, %v4127
      %v4129 = vsel %vm3970, %v4119, %v4128
      %v4131 = vshrl.u32 %v3965, 16
      %v4133 = vrot.slane %v4131, 6
      %v4134 = vshll.u32 %v3965, 16
      %v4136 = vrot.slane %v4134, 7
      %v4137 = vor.u32 %v4133, %v4136
      %v4138 = vsel %vm3970, %v4128, %v4137
      %v4140 = vshrl.u32 %v3966, 16
      %v4142 = vrot.slane %v4140, 6
      %v4143 = vshll.u32 %v3966, 16
      %v4145 = vrot.slane %v4143, 7
      %v4146 = vor.u32 %v4142, %v4145
      %v4147 = vsel %vm3970, %v4137, %v4146
      %4148 = vrot.lane.b32.xlu0 %v4003, 96
      %v4149 = vpop.permute.xlu0 %4148
      %4150 = vrot.lane.b32.xlu0 %v4012, 96
      %v4151 = vpop.permute.xlu0 %4150
      %4152 = vrot.lane.b32.xlu0 %v4021, 96
      %v4153 = vpop.permute.xlu0 %4152
      %4154 = vrot.lane.b32.xlu0 %v4030, 96
      %v4155 = vpop.permute.xlu0 %4154
      %4156 = vrot.lane.b32.xlu0 %v4039, 96
      %v4157 = vpop.permute.xlu0 %4156
      %4158 = vrot.lane.b32.xlu0 %v4048, 96
      %v4159 = vpop.permute.xlu0 %4158
      %4160 = vrot.lane.b32.xlu0 %v4057, 96
      %v4161 = vpop.permute.xlu0 %4160
      %4162 = vrot.lane.b32.xlu0 %v4066, 96
      %v4163 = vpop.permute.xlu0 %4162
      %4164 = vrot.lane.b32.xlu0 %v4075, 96
      %v4165 = vpop.permute.xlu0 %4164
      %4166 = vrot.lane.b32.xlu0 %v4084, 96
      %v4167 = vpop.permute.xlu0 %4166
      %4168 = vrot.lane.b32.xlu0 %v4093, 96
      %v4169 = vpop.permute.xlu0 %4168
      %4170 = vrot.lane.b32.xlu0 %v4102, 96
      %v4171 = vpop.permute.xlu0 %4170
      %4172 = vrot.lane.b32.xlu0 %v4111, 96
      %v4173 = vpop.permute.xlu0 %4172
      %4174 = vrot.lane.b32.xlu0 %v4120, 96
      %v4175 = vpop.permute.xlu0 %4174
      %4176 = vrot.lane.b32.xlu0 %v4129, 96
      %v4177 = vpop.permute.xlu0 %4176
      %4178 = vrot.lane.b32.xlu0 %v4138, 96
      %v4179 = vpop.permute.xlu0 %4178
      %4180 = vrot.lane.b32.xlu0 %v4147, 96
      %v4181 = vpop.permute.xlu0 %4180
      %4182 = vrot.lane.b32.xlu0 %v4146, 96
      %v4183 = vpop.permute.xlu0 %4182
      %vm4202 = vcmask 261121
      %vm4203 = vsmask.f32 7942
      %vm4204 = vmand %vm4202, %vm4203
      %v4205 = vld [vmem:[#allocation3 + $0x8] sm:$0xfe]
      %v4206 = vsel %vm4204, %v4149, %v4205
      %4207 = vst [vmem:[#allocation3 + $0x8] sm:$0xfe] %v4206
      %4208 = vst.msk [vmem:[#allocation3 + $0x10] sm:$0xff] %vm1290, %v4151
      %4209 = vst.msk [vmem:[#allocation3 + $0x18] sm:$0xff] %vm1290, %v4153
      %4210 = vst.msk [vmem:[#allocation3 + $0x20] sm:$0xff] %vm1290, %v4155
      %4211 = vst.msk [vmem:[#allocation3 + $0x28] sm:$0xff] %vm1290, %v4157
      %4212 = vst.msk [vmem:[#allocation3 + $0x30] sm:$0xff] %vm1290, %v4159
      %4213 = vst.msk [vmem:[#allocation3 + $0x38] sm:$0xff] %vm1290, %v4161
      %4214 = vst.msk [vmem:[#allocation3 + $0x40] sm:$0xff] %vm1290, %v4163
      %4215 = vst.msk [vmem:[#allocation3 + $0x48] sm:$0xff] %vm1290, %v4165
      %4216 = vst.msk [vmem:[#allocation3 + $0x50] sm:$0xff] %vm1290, %v4167
      %4217 = vst.msk [vmem:[#allocation3 + $0x58] sm:$0xff] %vm1290, %v4169
      %4218 = vst.msk [vmem:[#allocation3 + $0x60] sm:$0xff] %vm1290, %v4171
      %4219 = vst.msk [vmem:[#allocation3 + $0x68] sm:$0xff] %vm1290, %v4173
      %4220 = vst.msk [vmem:[#allocation3 + $0x70] sm:$0xff] %vm1290, %v4175
      %4221 = vst.msk [vmem:[#allocation3 + $0x78] sm:$0xff] %vm1290, %v4177
      %4222 = vst.msk [vmem:[#allocation3 + $0x80] sm:$0xff] %vm1290, %v4179
      %4223 = vst.msk [vmem:[#allocation3 + $0x88] sm:$0xff] %vm1290, %v4181
      %vm4224 = vcmask 253952
      %4225 = vst.msk [vmem:[#allocation3 + $0x90] sm:$0x1] %vm4224, %v4183
      %v4226 = vrot.slane %v3997, 7
      %v4227 = vor.u32 %v4226, %v4000
      %v4228 = vrot.slane %v4005, 7
      %v4229 = vor.u32 %v4228, %v4008
      %v4230 = vsel %vm3976, %v4226, %v4229
      %v4231 = vrot.slane %v4014, 7
      %v4232 = vor.u32 %v4231, %v4017
      %v4233 = vsel %vm3976, %v4228, %v4232
      %v4234 = vrot.slane %v4023, 7
      %v4235 = vor.u32 %v4234, %v4026
      %v4236 = vsel %vm3976, %v4231, %v4235
      %v4237 = vrot.slane %v4032, 7
      %v4238 = vor.u32 %v4237, %v4035
      %v4239 = vsel %vm3976, %v4234, %v4238
      %v4240 = vrot.slane %v4041, 7
      %v4241 = vor.u32 %v4240, %v4044
      %v4242 = vsel %vm3976, %v4237, %v4241
      %v4243 = vrot.slane %v4050, 7
      %v4244 = vor.u32 %v4243, %v4053
      %v4245 = vsel %vm3976, %v4240, %v4244
      %v4246 = vrot.slane %v4059, 7
      %v4247 = vor.u32 %v4246, %v4062
      %v4248 = vsel %vm3976, %v4243, %v4247
      %v4249 = vrot.slane %v4068, 7
      %v4250 = vor.u32 %v4249, %v4071
      %v4251 = vsel %vm3976, %v4246, %v4250
      %v4252 = vrot.slane %v4077, 7
      %v4253 = vor.u32 %v4252, %v4080
      %v4254 = vsel %vm3976, %v4249, %v4253
      %v4255 = vrot.slane %v4086, 7
      %v4256 = vor.u32 %v4255, %v4089
      %v4257 = vsel %vm3976, %v4252, %v4256
      %v4258 = vrot.slane %v4095, 7
      %v4259 = vor.u32 %v4258, %v4098
      %v4260 = vsel %vm3976, %v4255, %v4259
      %v4261 = vrot.slane %v4104, 7
      %v4262 = vor.u32 %v4261, %v4107
      %v4263 = vsel %vm3976, %v4258, %v4262
      %v4264 = vrot.slane %v4113, 7
      %v4265 = vor.u32 %v4264, %v4116
      %v4266 = vsel %vm3976, %v4261, %v4265
      %v4267 = vrot.slane %v4122, 7
      %v4268 = vor.u32 %v4267, %v4125
      %v4269 = vsel %vm3976, %v4264, %v4268
      %v4270 = vrot.slane %v4131, 7
      %v4271 = vor.u32 %v4270, %v4134
      %v4272 = vsel %vm3976, %v4267, %v4271
      %v4273 = vrot.slane %v4140, 7
      %v4274 = vor.u32 %v4273, %v4143
      %v4275 = vsel %vm3976, %v4270, %v4274
      %v4277 = vshrl.u32 %v3967, 16
      %v4279 = vrot.slane %v4277, 7
      %v4280 = vshll.u32 %v3967, 16
      %v4282 = vor.u32 %v4279, %v4280
      %v4283 = vsel %vm3976, %v4273, %v4282
      %vm4303 = vcmask 523520
      %vm4304 = vmand %vm4303, %vm3981
      %v4305 = vld [vmem:[#allocation3] sm:$0xff]
      %v4306 = vsel %vm4304, %v4227, %v4305
      %4307 = vst [vmem:[#allocation3] sm:$0xff] %v4306
      %vm4308 = vcmask 523520
      %4309 = vst.msk [vmem:[#allocation3 + $0x8] sm:$0xff] %vm4308, %v4230
      %4310 = vst.msk [vmem:[#allocation3 + $0x10] sm:$0xff] %vm4308, %v4233
      %4311 = vst.msk [vmem:[#allocation3 + $0x18] sm:$0xff] %vm4308, %v4236
      %4312 = vst.msk [vmem:[#allocation3 + $0x20] sm:$0xff] %vm4308, %v4239
      %4313 = vst.msk [vmem:[#allocation3 + $0x28] sm:$0xff] %vm4308, %v4242
      %4314 = vst.msk [vmem:[#allocation3 + $0x30] sm:$0xff] %vm4308, %v4245
      %4315 = vst.msk [vmem:[#allocation3 + $0x38] sm:$0xff] %vm4308, %v4248
      %4316 = vst.msk [vmem:[#allocation3 + $0x40] sm:$0xff] %vm4308, %v4251
      %4317 = vst.msk [vmem:[#allocation3 + $0x48] sm:$0xff] %vm4308, %v4254
      %4318 = vst.msk [vmem:[#allocation3 + $0x50] sm:$0xff] %vm4308, %v4257
      %4319 = vst.msk [vmem:[#allocation3 + $0x58] sm:$0xff] %vm4308, %v4260
      %4320 = vst.msk [vmem:[#allocation3 + $0x60] sm:$0xff] %vm4308, %v4263
      %4321 = vst.msk [vmem:[#allocation3 + $0x68] sm:$0xff] %vm4308, %v4266
      %4322 = vst.msk [vmem:[#allocation3 + $0x70] sm:$0xff] %vm4308, %v4269
      %4323 = vst.msk [vmem:[#allocation3 + $0x78] sm:$0xff] %vm4308, %v4272
      %4324 = vst.msk [vmem:[#allocation3 + $0x80] sm:$0xff] %vm4308, %v4275
      %4325 = vst.msk [vmem:[#allocation3 + $0x88] sm:$0xff] %vm4308, %v4283
      %v4326 = vld [vmem:[#allocation3 + $0x90] sm:$0x1]
      %v4327 = vsel %vm3977, %v4279, %v4326
      %4328 = vst [vmem:[#allocation3 + $0x90] sm:$0x1] %v4327
      %v4329 = vrot.slane %v4008, 1
      %v4330 = vor.u32 %v4005, %v4329
      %v4331 = vrot.slane %v4017, 1
      %v4332 = vsel %vm2147, %v4330, %v4331
      %v4333 = vor.u32 %v4014, %v4331
      %v4334 = vrot.slane %v4026, 1
      %v4335 = vsel %vm2147, %v4333, %v4334
      %v4336 = vor.u32 %v4023, %v4334
      %v4337 = vrot.slane %v4035, 1
      %v4338 = vsel %vm2147, %v4336, %v4337
      %v4339 = vor.u32 %v4032, %v4337
      %v4340 = vrot.slane %v4044, 1
      %v4341 = vsel %vm2147, %v4339, %v4340
      %v4342 = vor.u32 %v4041, %v4340
      %v4343 = vrot.slane %v4053, 1
      %v4344 = vsel %vm2147, %v4342, %v4343
      %v4345 = vor.u32 %v4050, %v4343
      %v4346 = vrot.slane %v4062, 1
      %v4347 = vsel %vm2147, %v4345, %v4346
      %v4348 = vor.u32 %v4059, %v4346
      %v4349 = vrot.slane %v4071, 1
      %v4350 = vsel %vm2147, %v4348, %v4349
      %v4351 = vor.u32 %v4068, %v4349
      %v4352 = vrot.slane %v4080, 1
      %v4353 = vsel %vm2147, %v4351, %v4352
      %v4354 = vor.u32 %v4077, %v4352
      %v4355 = vrot.slane %v4089, 1
      %v4356 = vsel %vm2147, %v4354, %v4355
      %v4357 = vor.u32 %v4086, %v4355
      %v4358 = vrot.slane %v4098, 1
      %v4359 = vsel %vm2147, %v4357, %v4358
      %v4360 = vor.u32 %v4095, %v4358
      %v4361 = vrot.slane %v4107, 1
      %v4362 = vsel %vm2147, %v4360, %v4361
      %v4363 = vor.u32 %v4104, %v4361
      %v4364 = vrot.slane %v4116, 1
      %v4365 = vsel %vm2147, %v4363, %v4364
      %v4366 = vor.u32 %v4113, %v4364
      %v4367 = vrot.slane %v4125, 1
      %v4368 = vsel %vm2147, %v4366, %v4367
      %v4369 = vor.u32 %v4122, %v4367
      %v4370 = vrot.slane %v4134, 1
      %v4371 = vsel %vm2147, %v4369, %v4370
      %v4372 = vor.u32 %v4131, %v4370
      %v4373 = vrot.slane %v4143, 1
      %v4374 = vsel %vm2147, %v4372, %v4373
      %v4375 = vor.u32 %v4140, %v4373
      %v4376 = vrot.slane %v4280, 1
      %v4377 = vsel %vm2147, %v4375, %v4376
      %v4378 = vor.u32 %v4277, %v4376
      %4379 = vrot.lane.b32.xlu0 %v4332, 32
      %v4380 = vpop.permute.xlu0 %4379
      %4381 = vrot.lane.b32.xlu0 %v4335, 32
      %v4382 = vpop.permute.xlu0 %4381
      %4383 = vrot.lane.b32.xlu0 %v4338, 32
      %v4384 = vpop.permute.xlu0 %4383
      %4385 = vrot.lane.b32.xlu0 %v4341, 32
      %v4386 = vpop.permute.xlu0 %4385
      %4387 = vrot.lane.b32.xlu0 %v4344, 32
      %v4388 = vpop.permute.xlu0 %4387
      %4389 = vrot.lane.b32.xlu0 %v4347, 32
      %v4390 = vpop.permute.xlu0 %4389
      %4391 = vrot.lane.b32.xlu0 %v4350, 32
      %v4392 = vpop.permute.xlu0 %4391
      %4393 = vrot.lane.b32.xlu0 %v4353, 32
      %v4394 = vpop.permute.xlu0 %4393
      %4395 = vrot.lane.b32.xlu0 %v4356, 32
      %v4396 = vpop.permute.xlu0 %4395
      %4397 = vrot.lane.b32.xlu0 %v4359, 32
      %v4398 = vpop.permute.xlu0 %4397
      %4399 = vrot.lane.b32.xlu0 %v4362, 32
      %v4400 = vpop.permute.xlu0 %4399
      %4401 = vrot.lane.b32.xlu0 %v4365, 32
      %v4402 = vpop.permute.xlu0 %4401
      %4403 = vrot.lane.b32.xlu0 %v4368, 32
      %v4404 = vpop.permute.xlu0 %4403
      %4405 = vrot.lane.b32.xlu0 %v4371, 32
      %v4406 = vpop.permute.xlu0 %4405
      %4407 = vrot.lane.b32.xlu0 %v4374, 32
      %v4408 = vpop.permute.xlu0 %4407
      %4409 = vrot.lane.b32.xlu0 %v4377, 32
      %v4410 = vpop.permute.xlu0 %4409
      %4411 = vrot.lane.b32.xlu0 %v4378, 32
      %v4412 = vpop.permute.xlu0 %4411
      %4430 = vst.msk [vmem:[#allocation3] sm:$0xff] %vm3992, %v4380
      %4431 = vst.msk [vmem:[#allocation3 + $0x8] sm:$0xff] %vm3992, %v4382
      %4432 = vst.msk [vmem:[#allocation3 + $0x10] sm:$0xff] %vm3992, %v4384
      %4433 = vst.msk [vmem:[#allocation3 + $0x18] sm:$0xff] %vm3992, %v4386
      %4434 = vst.msk [vmem:[#allocation3 + $0x20] sm:$0xff] %vm3992, %v4388
      %4435 = vst.msk [vmem:[#allocation3 + $0x28] sm:$0xff] %vm3992, %v4390
      %4436 = vst.msk [vmem:[#allocation3 + $0x30] sm:$0xff] %vm3992, %v4392
      %4437 = vst.msk [vmem:[#allocation3 + $0x38] sm:$0xff] %vm3992, %v4394
      %4438 = vst.msk [vmem:[#allocation3 + $0x40] sm:$0xff] %vm3992, %v4396
      %4439 = vst.msk [vmem:[#allocation3 + $0x48] sm:$0xff] %vm3992, %v4398
      %4440 = vst.msk [vmem:[#allocation3 + $0x50] sm:$0xff] %vm3992, %v4400
      %4441 = vst.msk [vmem:[#allocation3 + $0x58] sm:$0xff] %vm3992, %v4402
      %4442 = vst.msk [vmem:[#allocation3 + $0x60] sm:$0xff] %vm3992, %v4404
      %4443 = vst.msk [vmem:[#allocation3 + $0x68] sm:$0xff] %vm3992, %v4406
      %4444 = vst.msk [vmem:[#allocation3 + $0x70] sm:$0xff] %vm3992, %v4408
      %4445 = vst.msk [vmem:[#allocation3 + $0x78] sm:$0xff] %vm3992, %v4410
      %vm4446 = vcmask 785920
      %vm4447 = vmand %vm4446, %vm2147
      %v4448 = vld [vmem:[#allocation3 + $0x80] sm:$0xff]
      %v4449 = vsel %vm4447, %v4412, %v4448
      %4450 = vst [vmem:[#allocation3 + $0x80] sm:$0xff] %v4449
      %v4451 = vld [vmem:[#allocation3] sm:$0xff]
      %v4452 = vld [vmem:[#allocation3 + $0x8] sm:$0xff]
      %v4453 = vld [vmem:[#allocation3 + $0x10] sm:$0xff]
      %v4454 = vld [vmem:[#allocation3 + $0x18] sm:$0xff]
      %v4455 = vld [vmem:[#allocation3 + $0x20] sm:$0xff]
      %v4456 = vld [vmem:[#allocation3 + $0x28] sm:$0xff]
      %v4457 = vld [vmem:[#allocation3 + $0x30] sm:$0xff]
      %v4458 = vld [vmem:[#allocation3 + $0x38] sm:$0xff]
      %v4459 = vld [vmem:[#allocation3 + $0x40] sm:$0xff]
      %v4460 = vld [vmem:[#allocation3 + $0x48] sm:$0xff]
      %v4461 = vld [vmem:[#allocation3 + $0x50] sm:$0xff]
      %v4462 = vld [vmem:[#allocation3 + $0x58] sm:$0xff]
      %v4463 = vld [vmem:[#allocation3 + $0x60] sm:$0xff]
      %v4464 = vld [vmem:[#allocation3 + $0x68] sm:$0xff]
      %v4465 = vld [vmem:[#allocation3 + $0x70] sm:$0xff]
      %v4466 = vld [vmem:[#allocation3 + $0x78] sm:$0xff]
      %v4467 = vld [vmem:[#allocation3 + $0x80] sm:$0xff]
      %v4468 = vld [vmem:[#allocation3 + $0x88] sm:$0xff]
      %v4469 = vld [vmem:[%s2] sm:$0xf]
      %v4470 = vld [vmem:[%s2 + $0x4] sm:$0xf]
      %v4471 = vld [vmem:[%s2 + $0x8] sm:$0xf]
      %v4472 = vld [vmem:[%s2 + $0xc] sm:$0xf]
      %v4473 = vld [vmem:[%s2 + $0x10] sm:$0xf]
      %v4474 = vld [vmem:[%s2 + $0x14] sm:$0xf]
      %v4475 = vld [vmem:[%s2 + $0x18] sm:$0xf]
      %v4476 = vld [vmem:[%s2 + $0x1c] sm:$0xf]
      %v4477 = vld [vmem:[%s2 + $0x20] sm:$0xf]
      %v4478 = vld [vmem:[%s2 + $0x24] sm:$0xf]
      %v4479 = vld [vmem:[%s2 + $0x28] sm:$0xf]
      %v4480 = vld [vmem:[%s2 + $0x2c] sm:$0xf]
      %v4493 = vunpack.c.l.b16 %v4469
      %v4494 = vunpack.c.l.b16 %v4470
      %v4495 = vunpack.c.l.b16 %v4471
      %v4496 = vunpack.c.l.b16 %v4472
      %v4497 = vunpack.c.l.b16 %v4473
      %v4498 = vunpack.c.l.b16 %v4474
      %v4499 = vunpack.c.l.b16 %v4475
      %v4500 = vunpack.c.l.b16 %v4476
      %v4501 = vunpack.c.l.b16 %v4477
      %v4502 = vunpack.c.l.b16 %v4478
      %v4503 = vunpack.c.l.b16 %v4479
      %v4504 = vunpack.c.l.b16 %v4480
      %v4505 = vpack.c.b16 %v4494, %v4493
      %v4506 = vpack.c.b16 %v4496, %v4495
      %v4507 = vpack.c.b16 %v4498, %v4497
      %v4508 = vpack.c.b16 %v4500, %v4499
      %v4509 = vpack.c.b16 %v4502, %v4501
      %v4510 = vpack.c.b16 %v4504, %v4503
      %vm4517 = vcmask 785408
      %v4519 = vsel %vm4517, %v4451, 0
      %v4522 = vsel %vm4517, %v4452, 0
      %v4525 = vsel %vm4517, %v4453, 0
      %v4528 = vsel %vm4517, %v4454, 0
      %v4531 = vsel %vm4517, %v4455, 0
      %v4534 = vsel %vm4517, %v4456, 0
      %v4537 = vsel %vm4517, %v4457, 0
      %v4540 = vsel %vm4517, %v4458, 0
      %v4543 = vsel %vm4517, %v4459, 0
      %v4546 = vsel %vm4517, %v4460, 0
      %v4549 = vsel %vm4517, %v4461, 0
      %v4552 = vsel %vm4517, %v4462, 0
      %v4555 = vsel %vm4517, %v4463, 0
      %v4558 = vsel %vm4517, %v4464, 0
      %v4561 = vsel %vm4517, %v4465, 0
      %v4564 = vsel %vm4517, %v4466, 0
      %v4567 = vsel %vm4517, %v4467, 0
      %v4570 = vsel %vm4517, %v4468, 0
      %4572 = vmatprep.subr.bf16.mxu0 0
      %4573 = vmatpush1.bf16.msra.mxu0 %v4505
      %4574 = vmatprep.subr.bf16.mxu0 0
      %4575 = vmatpush1.bf16.msra.mxu0 %v4506
      %4576 = vmatprep.subr.bf16.mxu0 0
      %4577 = vmatpush1.bf16.msra.mxu0 %v4507
      %4578 = vmatprep.subr.bf16.mxu0 0
      %4579 = vmatpush1.bf16.msra.mxu0 %v4508
      %4580 = vmatprep.subr.bf16.mxu0 0
      %4581 = vmatpush1.bf16.msra.mxu0 %v4509
      %4582 = vmatprep.subr.bf16.mxu0 0
      %4583 = vmatpush1.bf16.msra.mxu0 %v4510
      %4584 = vmatprep.subr.bf16.mxu0 0
      %4585 = vmatpush1.bf16.msra.mxu0 0
      %4586 = vmatprep.subr.bf16.mxu0 0
      %4587 = vmatpush1.bf16.msra.mxu0 0
      %4588 = vmatprep.subr.bf16.mxu0 0
      %4589 = vmatpush1.bf16.msra.mxu0 0
      %4590 = vmatprep.subr.bf16.mxu0 0
      %4591 = vmatpush1.bf16.msra.mxu0 0
      %4592 = vmatprep.subr.bf16.mxu0 0
      %4593 = vmatpush1.bf16.msra.mxu0 0
      %4594 = vmatprep.subr.bf16.mxu0 0
      %4595 = vmatpush1.bf16.msra.mxu0 0
      %4596 = vmatprep.subr.bf16.mxu0 0
      %4597 = vmatpush1.bf16.msra.mxu0 0
      %4598 = vmatprep.subr.bf16.mxu0 0
      %4599 = vmatpush1.bf16.msra.mxu0 0
      %4600 = vmatprep.subr.bf16.mxu0 0
      %4601 = vmatpush1.bf16.msra.mxu0 0
      %4602 = vmatprep.subr.bf16.mxu0 0
      %4603 = vmatpush1.bf16.msra.mxu0 0
      %4604 = vmatprep.mubr.bf16.mxu0 0
      %4605 = vmatmul.mubr.bf16.gmra.mrb[0].mxu0 %v4519
      %v4606 = vpop.f32.mrb[0].mxu0
      %v4607 = vadd.f32 0.0, %v4606
      %v4608 = vpop.f32.mrb[0].mxu0
      %v4609 = vpop.f32.mrb[0].mxu0
      %v4610 = vadd.f32 0.0, %v4609
      %v4611 = vpop.f32.mrb[0].mxu0
      %4612 = vmatprep.mubr.bf16.mxu0 0
      %4613 = vmatmul.mubr.bf16.gmra.mrb[0].mxu0 %v4522
      %v4614 = vpop.f32.mrb[0].mxu0
      %v4615 = vadd.f32 0.0, %v4614
      %v4616 = vpop.f32.mrb[0].mxu0
      %v4617 = vpop.f32.mrb[0].mxu0
      %v4618 = vadd.f32 0.0, %v4617
      %v4619 = vpop.f32.mrb[0].mxu0
      %4620 = vmatprep.mubr.bf16.mxu0 0
      %4621 = vmatmul.mubr.bf16.gmra.mrb[0].mxu0 %v4525
      %v4622 = vpop.f32.mrb[0].mxu0
      %v4623 = vadd.f32 0.0, %v4622
      %v4624 = vpop.f32.mrb[0].mxu0
      %v4625 = vpop.f32.mrb[0].mxu0
      %v4626 = vadd.f32 0.0, %v4625
      %v4627 = vpop.f32.mrb[0].mxu0
      %4628 = vmatprep.mubr.bf16.mxu0 0
      %4629 = vmatmul.mubr.bf16.gmra.mrb[0].mxu0 %v4528
      %v4630 = vpop.f32.mrb[0].mxu0
      %v4631 = vadd.f32 0.0, %v4630
      %v4632 = vpop.f32.mrb[0].mxu0
      %v4633 = vpop.f32.mrb[0].mxu0
      %v4634 = vadd.f32 0.0, %v4633
      %v4635 = vpop.f32.mrb[0].mxu0
      %4636 = vmatprep.mubr.bf16.mxu0 0
      %4637 = vmatmul.mubr.bf16.gmra.mrb[0].mxu0 %v4531
      %v4638 = vpop.f32.mrb[0].mxu0
      %v4639 = vadd.f32 0.0, %v4638
      %v4640 = vpop.f32.mrb[0].mxu0
      %v4641 = vpop.f32.mrb[0].mxu0
      %v4642 = vadd.f32 0.0, %v4641
      %v4643 = vpop.f32.mrb[0].mxu0
      %4644 = vmatprep.mubr.bf16.mxu0 0
      %4645 = vmatmul.mubr.bf16.gmra.mrb[0].mxu0 %v4534
      %v4646 = vpop.f32.mrb[0].mxu0
      %v4647 = vadd.f32 0.0, %v4646
      %v4648 = vpop.f32.mrb[0].mxu0
      %v4649 = vpop.f32.mrb[0].mxu0
      %v4650 = vadd.f32 0.0, %v4649
      %v4651 = vpop.f32.mrb[0].mxu0
      %4652 = vmatprep.mubr.bf16.mxu0 0
      %4653 = vmatmul.mubr.bf16.gmra.mrb[0].mxu0 %v4537
      %v4654 = vpop.f32.mrb[0].mxu0
      %v4655 = vadd.f32 0.0, %v4654
      %v4656 = vpop.f32.mrb[0].mxu0
      %v4657 = vpop.f32.mrb[0].mxu0
      %v4658 = vadd.f32 0.0, %v4657
      %v4659 = vpop.f32.mrb[0].mxu0
      %4660 = vmatprep.mubr.bf16.mxu0 0
      %4661 = vmatmul.mubr.bf16.gmra.mrb[0].mxu0 %v4540
      %v4662 = vpop.f32.mrb[0].mxu0
      %v4663 = vadd.f32 0.0, %v4662
      %v4664 = vpop.f32.mrb[0].mxu0
      %v4665 = vpop.f32.mrb[0].mxu0
      %v4666 = vadd.f32 0.0, %v4665
      %v4667 = vpop.f32.mrb[0].mxu0
      %4668 = vmatprep.mubr.bf16.mxu0 0
      %4669 = vmatmul.mubr.bf16.gmra.mrb[0].mxu0 %v4543
      %v4670 = vpop.f32.mrb[0].mxu0
      %v4671 = vadd.f32 0.0, %v4670
      %v4672 = vpop.f32.mrb[0].mxu0
      %v4673 = vpop.f32.mrb[0].mxu0
      %v4674 = vadd.f32 0.0, %v4673
      %v4675 = vpop.f32.mrb[0].mxu0
      %4676 = vmatprep.mubr.bf16.mxu0 0
      %4677 = vmatmul.mubr.bf16.gmra.mrb[0].mxu0 %v4546
      %v4678 = vpop.f32.mrb[0].mxu0
      %v4679 = vadd.f32 0.0, %v4678
      %v4680 = vpop.f32.mrb[0].mxu0
      %v4681 = vpop.f32.mrb[0].mxu0
      %v4682 = vadd.f32 0.0, %v4681
      %v4683 = vpop.f32.mrb[0].mxu0
      %4684 = vmatprep.mubr.bf16.mxu0 0
      %4685 = vmatmul.mubr.bf16.gmra.mrb[0].mxu0 %v4549
      %v4686 = vpop.f32.mrb[0].mxu0
      %v4687 = vadd.f32 0.0, %v4686
      %v4688 = vpop.f32.mrb[0].mxu0
      %v4689 = vpop.f32.mrb[0].mxu0
      %v4690 = vadd.f32 0.0, %v4689
      %v4691 = vpop.f32.mrb[0].mxu0
      %4692 = vmatprep.mubr.bf16.mxu0 0
      %4693 = vmatmul.mubr.bf16.gmra.mrb[0].mxu0 %v4552
      %v4694 = vpop.f32.mrb[0].mxu0
      %v4695 = vadd.f32 0.0, %v4694
      %v4696 = vpop.f32.mrb[0].mxu0
      %v4697 = vpop.f32.mrb[0].mxu0
      %v4698 = vadd.f32 0.0, %v4697
      %v4699 = vpop.f32.mrb[0].mxu0
      %4700 = vmatprep.mubr.bf16.mxu0 0
      %4701 = vmatmul.mubr.bf16.gmra.mrb[0].mxu0 %v4555
      %v4702 = vpop.f32.mrb[0].mxu0
      %v4703 = vadd.f32 0.0, %v4702
      %v4704 = vpop.f32.mrb[0].mxu0
      %v4705 = vpop.f32.mrb[0].mxu0
      %v4706 = vadd.f32 0.0, %v4705
      %v4707 = vpop.f32.mrb[0].mxu0
      %4708 = vmatprep.mubr.bf16.mxu0 0
      %4709 = vmatmul.mubr.bf16.gmra.mrb[0].mxu0 %v4558
      %v4710 = vpop.f32.mrb[0].mxu0
      %v4711 = vadd.f32 0.0, %v4710
      %v4712 = vpop.f32.mrb[0].mxu0
      %v4713 = vpop.f32.mrb[0].mxu0
      %v4714 = vadd.f32 0.0, %v4713
      %v4715 = vpop.f32.mrb[0].mxu0
      %4716 = vmatprep.mubr.bf16.mxu0 0
      %4717 = vmatmul.mubr.bf16.gmra.mrb[0].mxu0 %v4561
      %v4718 = vpop.f32.mrb[0].mxu0
      %v4719 = vadd.f32 0.0, %v4718
      %v4720 = vpop.f32.mrb[0].mxu0
      %v4721 = vpop.f32.mrb[0].mxu0
      %v4722 = vadd.f32 0.0, %v4721
      %v4723 = vpop.f32.mrb[0].mxu0
      %4724 = vmatprep.mubr.bf16.mxu0 0
      %4725 = vmatmul.mubr.bf16.gmra.mrb[0].mxu0 %v4564
      %v4726 = vpop.f32.mrb[0].mxu0
      %v4727 = vadd.f32 0.0, %v4726
      %v4728 = vpop.f32.mrb[0].mxu0
      %v4729 = vpop.f32.mrb[0].mxu0
      %v4730 = vadd.f32 0.0, %v4729
      %v4731 = vpop.f32.mrb[0].mxu0
      %4732 = vmatprep.mubr.bf16.mxu0 0
      %4733 = vmatmul.mubr.bf16.gmra.mrb[0].mxu0 %v4567
      %v4734 = vpop.f32.mrb[0].mxu0
      %v4735 = vadd.f32 0.0, %v4734
      %v4736 = vpop.f32.mrb[0].mxu0
      %v4737 = vpop.f32.mrb[0].mxu0
      %v4738 = vadd.f32 0.0, %v4737
      %v4739 = vpop.f32.mrb[0].mxu0
      %4740 = vmatprep.mubr.bf16.mxu0 0
      %4741 = vmatmul.mubr.bf16.gmra.mrb[0].mxu0 %v4570
      %v4742 = vpop.f32.mrb[0].mxu0
      %v4743 = vadd.f32 0.0, %v4742
      %v4744 = vpop.f32.mrb[0].mxu0
      %v4745 = vpop.f32.mrb[0].mxu0
      %v4746 = vadd.f32 0.0, %v4745
      %v4747 = vpop.f32.mrb[0].mxu0
      %4748 = vdwg.mxu0
      %4785 = vrot.lane.b32.xlu0 %v4607, 64
      %v4786 = vpop.permute.xlu0 %4785
      %4787 = vrot.lane.b32.xlu0 %v4610, 64
      %v4788 = vpop.permute.xlu0 %4787
      %4789 = vrot.lane.b32.xlu0 %v4615, 64
      %v4790 = vpop.permute.xlu0 %4789
      %4791 = vrot.lane.b32.xlu0 %v4618, 64
      %v4792 = vpop.permute.xlu0 %4791
      %4793 = vrot.lane.b32.xlu0 %v4623, 64
      %v4794 = vpop.permute.xlu0 %4793
      %4795 = vrot.lane.b32.xlu0 %v4626, 64
      %v4796 = vpop.permute.xlu0 %4795
      %4797 = vrot.lane.b32.xlu0 %v4631, 64
      %v4798 = vpop.permute.xlu0 %4797
      %4799 = vrot.lane.b32.xlu0 %v4634, 64
      %v4800 = vpop.permute.xlu0 %4799
      %4801 = vrot.lane.b32.xlu0 %v4639, 64
      %v4802 = vpop.permute.xlu0 %4801
      %4803 = vrot.lane.b32.xlu0 %v4642, 64
      %v4804 = vpop.permute.xlu0 %4803
      %4805 = vrot.lane.b32.xlu0 %v4647, 64
      %v4806 = vpop.permute.xlu0 %4805
      %4807 = vrot.lane.b32.xlu0 %v4650, 64
      %v4808 = vpop.permute.xlu0 %4807
      %4809 = vrot.lane.b32.xlu0 %v4655, 64
      %v4810 = vpop.permute.xlu0 %4809
      %4811 = vrot.lane.b32.xlu0 %v4658, 64
      %v4812 = vpop.permute.xlu0 %4811
      %4813 = vrot.lane.b32.xlu0 %v4663, 64
      %v4814 = vpop.permute.xlu0 %4813
      %4815 = vrot.lane.b32.xlu0 %v4666, 64
      %v4816 = vpop.permute.xlu0 %4815
      %4817 = vrot.lane.b32.xlu0 %v4671, 64
      %v4818 = vpop.permute.xlu0 %4817
      %4819 = vrot.lane.b32.xlu0 %v4674, 64
      %v4820 = vpop.permute.xlu0 %4819
      %4821 = vrot.lane.b32.xlu0 %v4679, 64
      %v4822 = vpop.permute.xlu0 %4821
      %4823 = vrot.lane.b32.xlu0 %v4682, 64
      %v4824 = vpop.permute.xlu0 %4823
      %4825 = vrot.lane.b32.xlu0 %v4687, 64
      %v4826 = vpop.permute.xlu0 %4825
      %4827 = vrot.lane.b32.xlu0 %v4690, 64
      %v4828 = vpop.permute.xlu0 %4827
      %4829 = vrot.lane.b32.xlu0 %v4695, 64
      %v4830 = vpop.permute.xlu0 %4829
      %4831 = vrot.lane.b32.xlu0 %v4698, 64
      %v4832 = vpop.permute.xlu0 %4831
      %4833 = vrot.lane.b32.xlu0 %v4703, 64
      %v4834 = vpop.permute.xlu0 %4833
      %4835 = vrot.lane.b32.xlu0 %v4706, 64
      %v4836 = vpop.permute.xlu0 %4835
      %4837 = vrot.lane.b32.xlu0 %v4711, 64
      %v4838 = vpop.permute.xlu0 %4837
      %4839 = vrot.lane.b32.xlu0 %v4714, 64
      %v4840 = vpop.permute.xlu0 %4839
      %4841 = vrot.lane.b32.xlu0 %v4719, 64
      %v4842 = vpop.permute.xlu0 %4841
      %4843 = vrot.lane.b32.xlu0 %v4722, 64
      %v4844 = vpop.permute.xlu0 %4843
      %4845 = vrot.lane.b32.xlu0 %v4727, 64
      %v4846 = vpop.permute.xlu0 %4845
      %4847 = vrot.lane.b32.xlu0 %v4730, 64
      %v4848 = vpop.permute.xlu0 %4847
      %4849 = vrot.lane.b32.xlu0 %v4735, 64
      %v4850 = vpop.permute.xlu0 %4849
      %4851 = vrot.lane.b32.xlu0 %v4738, 64
      %v4852 = vpop.permute.xlu0 %4851
      %4853 = vrot.lane.b32.xlu0 %v4743, 64
      %v4854 = vpop.permute.xlu0 %4853
      %4855 = vrot.lane.b32.xlu0 %v4746, 64
      %v4856 = vpop.permute.xlu0 %4855
      %v4893 = vadd.f32 %v3554, %v4786
      %v4894 = vadd.f32 %v3555, %v4788
      %v4895 = vadd.f32 %v3556, %v4790
      %v4896 = vadd.f32 %v3557, %v4792
      %v4897 = vadd.f32 %v3558, %v4794
      %v4898 = vadd.f32 %v3559, %v4796
      %v4899 = vadd.f32 %v3560, %v4798
      %v4900 = vadd.f32 %v3561, %v4800
      %v4901 = vadd.f32 %v3562, %v4802
      %v4902 = vadd.f32 %v3563, %v4804
      %v4903 = vadd.f32 %v3564, %v4806
      %v4904 = vadd.f32 %v3565, %v4808
      %v4905 = vadd.f32 %v3566, %v4810
      %v4906 = vadd.f32 %v3567, %v4812
      %v4907 = vadd.f32 %v3568, %v4814
      %v4908 = vadd.f32 %v3569, %v4816
      %v4909 = vadd.f32 %v3570, %v4818
      %v4910 = vadd.f32 %v3571, %v4820
      %v4911 = vadd.f32 %v3572, %v4822
      %v4912 = vadd.f32 %v3573, %v4824
      %v4913 = vadd.f32 %v3574, %v4826
      %v4914 = vadd.f32 %v3575, %v4828
      %v4915 = vadd.f32 %v3576, %v4830
      %v4916 = vadd.f32 %v3577, %v4832
      %v4917 = vadd.f32 %v3578, %v4834
      %v4918 = vadd.f32 %v3579, %v4836
      %v4919 = vadd.f32 %v3580, %v4838
      %v4920 = vadd.f32 %v3581, %v4840
      %v4921 = vadd.f32 %v3582, %v4842
      %v4922 = vadd.f32 %v3583, %v4844
      %v4923 = vadd.f32 %v3584, %v4846
      %v4924 = vadd.f32 %v3585, %v4848
      %v4925 = vadd.f32 %v3586, %v4850
      %v4926 = vadd.f32 %v3587, %v4852
      %v4927 = vadd.f32 %v3588, %v4854
      %v4928 = vadd.f32 %v3589, %v4856
      %v4929 = vld [vmem:[#allocation3] sm:$0xff]
      %v4930 = vld [vmem:[#allocation3 + $0x8] sm:$0xff]
      %v4931 = vld [vmem:[#allocation3 + $0x10] sm:$0xff]
      %v4932 = vld [vmem:[#allocation3 + $0x18] sm:$0xff]
      %v4933 = vld [vmem:[#allocation3 + $0x20] sm:$0xff]
      %v4934 = vld [vmem:[#allocation3 + $0x28] sm:$0xff]
      %v4935 = vld [vmem:[#allocation3 + $0x30] sm:$0xff]
      %v4936 = vld [vmem:[#allocation3 + $0x38] sm:$0xff]
      %v4937 = vld [vmem:[#allocation3 + $0x40] sm:$0xff]
      %v4938 = vld [vmem:[#allocation3 + $0x48] sm:$0xff]
      %v4939 = vld [vmem:[#allocation3 + $0x50] sm:$0xff]
      %v4940 = vld [vmem:[#allocation3 + $0x58] sm:$0xff]
      %v4941 = vld [vmem:[#allocation3 + $0x60] sm:$0xff]
      %v4942 = vld [vmem:[#allocation3 + $0x68] sm:$0xff]
      %v4943 = vld [vmem:[#allocation3 + $0x70] sm:$0xff]
      %v4944 = vld [vmem:[#allocation3 + $0x78] sm:$0xff]
      %v4945 = vld [vmem:[#allocation3 + $0x80] sm:$0xff]
      %v4946 = vld [vmem:[#allocation3 + $0x88] sm:$0xff]
      %v4947 = vld [vmem:[#allocation3 + $0x90] sm:$0x1]
      %s4948 = scalar_lea.vmem %s2, 48
      %v4949 = vld [vmem:[%s4948] sm:$0xf]
      %v4950 = vld [vmem:[%s4948 + $0x4] sm:$0xf]
      %v4951 = vld [vmem:[%s4948 + $0x8] sm:$0xf]
      %v4952 = vld [vmem:[%s4948 + $0xc] sm:$0xf]
      %v4953 = vld [vmem:[%s4948 + $0x10] sm:$0xf]
      %v4954 = vld [vmem:[%s4948 + $0x14] sm:$0xf]
      %v4955 = vld [vmem:[%s4948 + $0x18] sm:$0xf]
      %v4956 = vld [vmem:[%s4948 + $0x1c] sm:$0xf]
      %v4957 = vld [vmem:[%s4948 + $0x20] sm:$0xf]
      %v4958 = vld [vmem:[%s4948 + $0x24] sm:$0xf]
      %v4959 = vld [vmem:[%s4948 + $0x28] sm:$0xf]
      %v4960 = vld [vmem:[%s4948 + $0x2c] sm:$0xf]
      %v4962 = vshrl.u32 %v4929, 16
      %v4964 = vshll.u32 %v4929, 16
      %v4966 = vrot.slane %v4964, 1
      %v4967 = vor.u32 %v4962, %v4966
      %v4969 = vshll.u32 %v4930, 16
      %v4971 = vrot.slane %v4969, 1
      %v4972 = vsel %vm2147, %v4967, %v4971
      %v4973 = vshrl.u32 %v4930, 16
      %v4975 = vor.u32 %v4973, %v4971
      %v4977 = vshll.u32 %v4931, 16
      %v4979 = vrot.slane %v4977, 1
      %v4980 = vsel %vm2147, %v4975, %v4979
      %v4981 = vshrl.u32 %v4931, 16
      %v4983 = vor.u32 %v4981, %v4979
      %v4985 = vshll.u32 %v4932, 16
      %v4987 = vrot.slane %v4985, 1
      %v4988 = vsel %vm2147, %v4983, %v4987
      %v4989 = vshrl.u32 %v4932, 16
      %v4991 = vor.u32 %v4989, %v4987
      %v4993 = vshll.u32 %v4933, 16
      %v4995 = vrot.slane %v4993, 1
      %v4996 = vsel %vm2147, %v4991, %v4995
      %v4997 = vshrl.u32 %v4933, 16
      %v4999 = vor.u32 %v4997, %v4995
      %v5001 = vshll.u32 %v4934, 16
      %v5003 = vrot.slane %v5001, 1
      %v5004 = vsel %vm2147, %v4999, %v5003
      %v5005 = vshrl.u32 %v4934, 16
      %v5007 = vor.u32 %v5005, %v5003
      %v5009 = vshll.u32 %v4935, 16
      %v5011 = vrot.slane %v5009, 1
      %v5012 = vsel %vm2147, %v5007, %v5011
      %v5013 = vshrl.u32 %v4935, 16
      %v5015 = vor.u32 %v5013, %v5011
      %v5017 = vshll.u32 %v4936, 16
      %v5019 = vrot.slane %v5017, 1
      %v5020 = vsel %vm2147, %v5015, %v5019
      %v5021 = vshrl.u32 %v4936, 16
      %v5023 = vor.u32 %v5021, %v5019
      %v5025 = vshll.u32 %v4937, 16
      %v5027 = vrot.slane %v5025, 1
      %v5028 = vsel %vm2147, %v5023, %v5027
      %v5029 = vshrl.u32 %v4937, 16
      %v5031 = vor.u32 %v5029, %v5027
      %v5033 = vshll.u32 %v4938, 16
      %v5035 = vrot.slane %v5033, 1
      %v5036 = vsel %vm2147, %v5031, %v5035
      %v5037 = vshrl.u32 %v4938, 16
      %v5039 = vor.u32 %v5037, %v5035
      %v5041 = vshll.u32 %v4939, 16
      %v5043 = vrot.slane %v5041, 1
      %v5044 = vsel %vm2147, %v5039, %v5043
      %v5045 = vshrl.u32 %v4939, 16
      %v5047 = vor.u32 %v5045, %v5043
      %v5049 = vshll.u32 %v4940, 16
      %v5051 = vrot.slane %v5049, 1
      %v5052 = vsel %vm2147, %v5047, %v5051
      %v5053 = vshrl.u32 %v4940, 16
      %v5055 = vor.u32 %v5053, %v5051
      %v5057 = vshll.u32 %v4941, 16
      %v5059 = vrot.slane %v5057, 1
      %v5060 = vsel %vm2147, %v5055, %v5059
      %v5061 = vshrl.u32 %v4941, 16
      %v5063 = vor.u32 %v5061, %v5059
      %v5065 = vshll.u32 %v4942, 16
      %v5067 = vrot.slane %v5065, 1
      %v5068 = vsel %vm2147, %v5063, %v5067
      %v5069 = vshrl.u32 %v4942, 16
      %v5071 = vor.u32 %v5069, %v5067
      %v5073 = vshll.u32 %v4943, 16
      %v5075 = vrot.slane %v5073, 1
      %v5076 = vsel %vm2147, %v5071, %v5075
      %v5077 = vshrl.u32 %v4943, 16
      %v5079 = vor.u32 %v5077, %v5075
      %v5081 = vshll.u32 %v4944, 16
      %v5083 = vrot.slane %v5081, 1
      %v5084 = vsel %vm2147, %v5079, %v5083
      %v5085 = vshrl.u32 %v4944, 16
      %v5087 = vor.u32 %v5085, %v5083
      %v5089 = vshll.u32 %v4945, 16
      %v5091 = vrot.slane %v5089, 1
      %v5092 = vsel %vm2147, %v5087, %v5091
      %v5093 = vshrl.u32 %v4945, 16
      %v5095 = vor.u32 %v5093, %v5091
      %v5097 = vshll.u32 %v4946, 16
      %v5099 = vrot.slane %v5097, 1
      %v5100 = vsel %vm2147, %v5095, %v5099
      %v5101 = vshrl.u32 %v4946, 16
      %v5103 = vor.u32 %v5101, %v5099
      %v5105 = vshll.u32 %v4947, 16
      %v5107 = vrot.slane %v5105, 1
      %v5108 = vsel %vm2147, %v5103, %v5107
      %v5121 = vunpack.c.l.b16 %v4949
      %v5122 = vunpack.c.l.b16 %v4950
      %v5123 = vunpack.c.l.b16 %v4951
      %v5124 = vunpack.c.l.b16 %v4952
      %v5125 = vunpack.c.l.b16 %v4953
      %v5126 = vunpack.c.l.b16 %v4954
      %v5127 = vunpack.c.l.b16 %v4955
      %v5128 = vunpack.c.l.b16 %v4956
      %v5129 = vunpack.c.l.b16 %v4957
      %v5130 = vunpack.c.l.b16 %v4958
      %v5131 = vunpack.c.l.b16 %v4959
      %v5132 = vunpack.c.l.b16 %v4960
      %v5133 = vpack.c.b16 %v5122, %v5121
      %v5134 = vpack.c.b16 %v5124, %v5123
      %v5135 = vpack.c.b16 %v5126, %v5125
      %v5136 = vpack.c.b16 %v5128, %v5127
      %v5137 = vpack.c.b16 %v5130, %v5129
      %v5138 = vpack.c.b16 %v5132, %v5131
      %v5146 = vsel %vm4517, %v4972, 0
      %v5149 = vsel %vm4517, %v4980, 0
      %v5152 = vsel %vm4517, %v4988, 0
      %v5155 = vsel %vm4517, %v4996, 0
      %v5158 = vsel %vm4517, %v5004, 0
      %v5161 = vsel %vm4517, %v5012, 0
      %v5164 = vsel %vm4517, %v5020, 0
      %v5167 = vsel %vm4517, %v5028, 0
      %v5170 = vsel %vm4517, %v5036, 0
      %v5173 = vsel %vm4517, %v5044, 0
      %v5176 = vsel %vm4517, %v5052, 0
      %v5179 = vsel %vm4517, %v5060, 0
      %v5182 = vsel %vm4517, %v5068, 0
      %v5185 = vsel %vm4517, %v5076, 0
      %v5188 = vsel %vm4517, %v5084, 0
      %v5191 = vsel %vm4517, %v5092, 0
      %v5194 = vsel %vm4517, %v5100, 0
      %v5197 = vsel %vm4517, %v5108, 0
      %5199 = vmatprep.subr.bf16.mxu0 0
      %5200 = vmatpush1.bf16.msra.mxu0 %v5133
      %5201 = vmatprep.subr.bf16.mxu0 0
      %5202 = vmatpush1.bf16.msra.mxu0 %v5134
      %5203 = vmatprep.subr.bf16.mxu0 0
      %5204 = vmatpush1.bf16.msra.mxu0 %v5135
      %5205 = vmatprep.subr.bf16.mxu0 0
      %5206 = vmatpush1.bf16.msra.mxu0 %v5136
      %5207 = vmatprep.subr.bf16.mxu0 0
      %5208 = vmatpush1.bf16.msra.mxu0 %v5137
      %5209 = vmatprep.subr.bf16.mxu0 0
      %5210 = vmatpush1.bf16.msra.mxu0 %v5138
      %5211 = vmatprep.subr.bf16.mxu0 0
      %5212 = vmatpush1.bf16.msra.mxu0 0
      %5213 = vmatprep.subr.bf16.mxu0 0
      %5214 = vmatpush1.bf16.msra.mxu0 0
      %5215 = vmatprep.subr.bf16.mxu0 0
      %5216 = vmatpush1.bf16.msra.mxu0 0
      %5217 = vmatprep.subr.bf16.mxu0 0
      %5218 = vmatpush1.bf16.msra.mxu0 0
      %5219 = vmatprep.subr.bf16.mxu0 0
      %5220 = vmatpush1.bf16.msra.mxu0 0
      %5221 = vmatprep.subr.bf16.mxu0 0
      %5222 = vmatpush1.bf16.msra.mxu0 0
      %5223 = vmatprep.subr.bf16.mxu0 0
      %5224 = vmatpush1.bf16.msra.mxu0 0
      %5225 = vmatprep.subr.bf16.mxu0 0
      %5226 = vmatpush1.bf16.msra.mxu0 0
      %5227 = vmatprep.subr.bf16.mxu0 0
      %5228 = vmatpush1.bf16.msra.mxu0 0
      %5229 = vmatprep.subr.bf16.mxu0 0
      %5230 = vmatpush1.bf16.msra.mxu0 0
      %5231 = vmatprep.mubr.bf16.mxu0 0
      %5232 = vmatmul.mubr.bf16.gmra.mrb[0].mxu0 %v5146
      %v5233 = vpop.f32.mrb[0].mxu0
      %v5234 = vadd.f32 0.0, %v5233
      %v5235 = vpop.f32.mrb[0].mxu0
      %v5236 = vpop.f32.mrb[0].mxu0
      %v5237 = vadd.f32 0.0, %v5236
      %v5238 = vpop.f32.mrb[0].mxu0
      %5239 = vmatprep.mubr.bf16.mxu0 0
      %5240 = vmatmul.mubr.bf16.gmra.mrb[0].mxu0 %v5149
      %v5241 = vpop.f32.mrb[0].mxu0
      %v5242 = vadd.f32 0.0, %v5241
      %v5243 = vpop.f32.mrb[0].mxu0
      %v5244 = vpop.f32.mrb[0].mxu0
      %v5245 = vadd.f32 0.0, %v5244
      %v5246 = vpop.f32.mrb[0].mxu0
      %5247 = vmatprep.mubr.bf16.mxu0 0
      %5248 = vmatmul.mubr.bf16.gmra.mrb[0].mxu0 %v5152
      %v5249 = vpop.f32.mrb[0].mxu0
      %v5250 = vadd.f32 0.0, %v5249
      %v5251 = vpop.f32.mrb[0].mxu0
      %v5252 = vpop.f32.mrb[0].mxu0
      %v5253 = vadd.f32 0.0, %v5252
      %v5254 = vpop.f32.mrb[0].mxu0
      %5255 = vmatprep.mubr.bf16.mxu0 0
      %5256 = vmatmul.mubr.bf16.gmra.mrb[0].mxu0 %v5155
      %v5257 = vpop.f32.mrb[0].mxu0
      %v5258 = vadd.f32 0.0, %v5257
      %v5259 = vpop.f32.mrb[0].mxu0
      %v5260 = vpop.f32.mrb[0].mxu0
      %v5261 = vadd.f32 0.0, %v5260
      %v5262 = vpop.f32.mrb[0].mxu0
      %5263 = vmatprep.mubr.bf16.mxu0 0
      %5264 = vmatmul.mubr.bf16.gmra.mrb[0].mxu0 %v5158
      %v5265 = vpop.f32.mrb[0].mxu0
      %v5266 = vadd.f32 0.0, %v5265
      %v5267 = vpop.f32.mrb[0].mxu0
      %v5268 = vpop.f32.mrb[0].mxu0
      %v5269 = vadd.f32 0.0, %v5268
      %v5270 = vpop.f32.mrb[0].mxu0
      %5271 = vmatprep.mubr.bf16.mxu0 0
      %5272 = vmatmul.mubr.bf16.gmra.mrb[0].mxu0 %v5161
      %v5273 = vpop.f32.mrb[0].mxu0
      %v5274 = vadd.f32 0.0, %v5273
      %v5275 = vpop.f32.mrb[0].mxu0
      %v5276 = vpop.f32.mrb[0].mxu0
      %v5277 = vadd.f32 0.0, %v5276
      %v5278 = vpop.f32.mrb[0].mxu0
      %5279 = vmatprep.mubr.bf16.mxu0 0
      %5280 = vmatmul.mubr.bf16.gmra.mrb[0].mxu0 %v5164
      %v5281 = vpop.f32.mrb[0].mxu0
      %v5282 = vadd.f32 0.0, %v5281
      %v5283 = vpop.f32.mrb[0].mxu0
      %v5284 = vpop.f32.mrb[0].mxu0
      %v5285 = vadd.f32 0.0, %v5284
      %v5286 = vpop.f32.mrb[0].mxu0
      %5287 = vmatprep.mubr.bf16.mxu0 0
      %5288 = vmatmul.mubr.bf16.gmra.mrb[0].mxu0 %v5167
      %v5289 = vpop.f32.mrb[0].mxu0
      %v5290 = vadd.f32 0.0, %v5289
      %v5291 = vpop.f32.mrb[0].mxu0
      %v5292 = vpop.f32.mrb[0].mxu0
      %v5293 = vadd.f32 0.0, %v5292
      %v5294 = vpop.f32.mrb[0].mxu0
      %5295 = vmatprep.mubr.bf16.mxu0 0
      %5296 = vmatmul.mubr.bf16.gmra.mrb[0].mxu0 %v5170
      %v5297 = vpop.f32.mrb[0].mxu0
      %v5298 = vadd.f32 0.0, %v5297
      %v5299 = vpop.f32.mrb[0].mxu0
      %v5300 = vpop.f32.mrb[0].mxu0
      %v5301 = vadd.f32 0.0, %v5300
      %v5302 = vpop.f32.mrb[0].mxu0
      %5303 = vmatprep.mubr.bf16.mxu0 0
      %5304 = vmatmul.mubr.bf16.gmra.mrb[0].mxu0 %v5173
      %v5305 = vpop.f32.mrb[0].mxu0
      %v5306 = vadd.f32 0.0, %v5305
      %v5307 = vpop.f32.mrb[0].mxu0
      %v5308 = vpop.f32.mrb[0].mxu0
      %v5309 = vadd.f32 0.0, %v5308
      %v5310 = vpop.f32.mrb[0].mxu0
      %5311 = vmatprep.mubr.bf16.mxu0 0
      %5312 = vmatmul.mubr.bf16.gmra.mrb[0].mxu0 %v5176
      %v5313 = vpop.f32.mrb[0].mxu0
      %v5314 = vadd.f32 0.0, %v5313
      %v5315 = vpop.f32.mrb[0].mxu0
      %v5316 = vpop.f32.mrb[0].mxu0
      %v5317 = vadd.f32 0.0, %v5316
      %v5318 = vpop.f32.mrb[0].mxu0
      %5319 = vmatprep.mubr.bf16.mxu0 0
      %5320 = vmatmul.mubr.bf16.gmra.mrb[0].mxu0 %v5179
      %v5321 = vpop.f32.mrb[0].mxu0
      %v5322 = vadd.f32 0.0, %v5321
      %v5323 = vpop.f32.mrb[0].mxu0
      %v5324 = vpop.f32.mrb[0].mxu0
      %v5325 = vadd.f32 0.0, %v5324
      %v5326 = vpop.f32.mrb[0].mxu0
      %5327 = vmatprep.mubr.bf16.mxu0 0
      %5328 = vmatmul.mubr.bf16.gmra.mrb[0].mxu0 %v5182
      %v5329 = vpop.f32.mrb[0].mxu0
      %v5330 = vadd.f32 0.0, %v5329
      %v5331 = vpop.f32.mrb[0].mxu0
      %v5332 = vpop.f32.mrb[0].mxu0
      %v5333 = vadd.f32 0.0, %v5332
      %v5334 = vpop.f32.mrb[0].mxu0
      %5335 = vmatprep.mubr.bf16.mxu0 0
      %5336 = vmatmul.mubr.bf16.gmra.mrb[0].mxu0 %v5185
      %v5337 = vpop.f32.mrb[0].mxu0
      %v5338 = vadd.f32 0.0, %v5337
      %v5339 = vpop.f32.mrb[0].mxu0
      %v5340 = vpop.f32.mrb[0].mxu0
      %v5341 = vadd.f32 0.0, %v5340
      %v5342 = vpop.f32.mrb[0].mxu0
      %5343 = vmatprep.mubr.bf16.mxu0 0
      %5344 = vmatmul.mubr.bf16.gmra.mrb[0].mxu0 %v5188
      %v5345 = vpop.f32.mrb[0].mxu0
      %v5346 = vadd.f32 0.0, %v5345
      %v5347 = vpop.f32.mrb[0].mxu0
      %v5348 = vpop.f32.mrb[0].mxu0
      %v5349 = vadd.f32 0.0, %v5348
      %v5350 = vpop.f32.mrb[0].mxu0
      %5351 = vmatprep.mubr.bf16.mxu0 0
      %5352 = vmatmul.mubr.bf16.gmra.mrb[0].mxu0 %v5191
      %v5353 = vpop.f32.mrb[0].mxu0
      %v5354 = vadd.f32 0.0, %v5353
      %v5355 = vpop.f32.mrb[0].mxu0
      %v5356 = vpop.f32.mrb[0].mxu0
      %v5357 = vadd.f32 0.0, %v5356
      %v5358 = vpop.f32.mrb[0].mxu0
      %5359 = vmatprep.mubr.bf16.mxu0 0
      %5360 = vmatmul.mubr.bf16.gmra.mrb[0].mxu0 %v5194
      %v5361 = vpop.f32.mrb[0].mxu0
      %v5362 = vadd.f32 0.0, %v5361
      %v5363 = vpop.f32.mrb[0].mxu0
      %v5364 = vpop.f32.mrb[0].mxu0
      %v5365 = vadd.f32 0.0, %v5364
      %v5366 = vpop.f32.mrb[0].mxu0
      %5367 = vmatprep.mubr.bf16.mxu0 0
      %5368 = vmatmul.mubr.bf16.gmra.mrb[0].mxu0 %v5197
      %v5369 = vpop.f32.mrb[0].mxu0
      %v5370 = vadd.f32 0.0, %v5369
      %v5371 = vpop.f32.mrb[0].mxu0
      %v5372 = vpop.f32.mrb[0].mxu0
      %v5373 = vadd.f32 0.0, %v5372
      %v5374 = vpop.f32.mrb[0].mxu0
      %5375 = vdwg.mxu0
      %5412 = vrot.lane.b32.xlu0 %v5234, 64
      %v5413 = vpop.permute.xlu0 %5412
      %5414 = vrot.lane.b32.xlu0 %v5237, 64
      %v5415 = vpop.permute.xlu0 %5414
      %5416 = vrot.lane.b32.xlu0 %v5242, 64
      %v5417 = vpop.permute.xlu0 %5416
      %5418 = vrot.lane.b32.xlu0 %v5245, 64
      %v5419 = vpop.permute.xlu0 %5418
      %5420 = vrot.lane.b32.xlu0 %v5250, 64
      %v5421 = vpop.permute.xlu0 %5420
      %5422 = vrot.lane.b32.xlu0 %v5253, 64
      %v5423 = vpop.permute.xlu0 %5422
      %5424 = vrot.lane.b32.xlu0 %v5258, 64
      %v5425 = vpop.permute.xlu0 %5424
      %5426 = vrot.lane.b32.xlu0 %v5261, 64
      %v5427 = vpop.permute.xlu0 %5426
      %5428 = vrot.lane.b32.xlu0 %v5266, 64
      %v5429 = vpop.permute.xlu0 %5428
      %5430 = vrot.lane.b32.xlu0 %v5269, 64
      %v5431 = vpop.permute.xlu0 %5430
      %5432 = vrot.lane.b32.xlu0 %v5274, 64
      %v5433 = vpop.permute.xlu0 %5432
      %5434 = vrot.lane.b32.xlu0 %v5277, 64
      %v5435 = vpop.permute.xlu0 %5434
      %5436 = vrot.lane.b32.xlu0 %v5282, 64
      %v5437 = vpop.permute.xlu0 %5436
      %5438 = vrot.lane.b32.xlu0 %v5285, 64
      %v5439 = vpop.permute.xlu0 %5438
      %5440 = vrot.lane.b32.xlu0 %v5290, 64
      %v5441 = vpop.permute.xlu0 %5440
      %5442 = vrot.lane.b32.xlu0 %v5293, 64
      %v5443 = vpop.permute.xlu0 %5442
      %5444 = vrot.lane.b32.xlu0 %v5298, 64
      %v5445 = vpop.permute.xlu0 %5444
      %5446 = vrot.lane.b32.xlu0 %v5301, 64
      %v5447 = vpop.permute.xlu0 %5446
      %5448 = vrot.lane.b32.xlu0 %v5306, 64
      %v5449 = vpop.permute.xlu0 %5448
      %5450 = vrot.lane.b32.xlu0 %v5309, 64
      %v5451 = vpop.permute.xlu0 %5450
      %5452 = vrot.lane.b32.xlu0 %v5314, 64
      %v5453 = vpop.permute.xlu0 %5452
      %5454 = vrot.lane.b32.xlu0 %v5317, 64
      %v5455 = vpop.permute.xlu0 %5454
      %5456 = vrot.lane.b32.xlu0 %v5322, 64
      %v5457 = vpop.permute.xlu0 %5456
      %5458 = vrot.lane.b32.xlu0 %v5325, 64
      %v5459 = vpop.permute.xlu0 %5458
      %5460 = vrot.lane.b32.xlu0 %v5330, 64
      %v5461 = vpop.permute.xlu0 %5460
      %5462 = vrot.lane.b32.xlu0 %v5333, 64
      %v5463 = vpop.permute.xlu0 %5462
      %5464 = vrot.lane.b32.xlu0 %v5338, 64
      %v5465 = vpop.permute.xlu0 %5464
      %5466 = vrot.lane.b32.xlu0 %v5341, 64
      %v5467 = vpop.permute.xlu0 %5466
      %5468 = vrot.lane.b32.xlu0 %v5346, 64
      %v5469 = vpop.permute.xlu0 %5468
      %5470 = vrot.lane.b32.xlu0 %v5349, 64
      %v5471 = vpop.permute.xlu0 %5470
      %5472 = vrot.lane.b32.xlu0 %v5354, 64
      %v5473 = vpop.permute.xlu0 %5472
      %5474 = vrot.lane.b32.xlu0 %v5357, 64
      %v5475 = vpop.permute.xlu0 %5474
      %5476 = vrot.lane.b32.xlu0 %v5362, 64
      %v5477 = vpop.permute.xlu0 %5476
      %5478 = vrot.lane.b32.xlu0 %v5365, 64
      %v5479 = vpop.permute.xlu0 %5478
      %5480 = vrot.lane.b32.xlu0 %v5370, 64
      %v5481 = vpop.permute.xlu0 %5480
      %5482 = vrot.lane.b32.xlu0 %v5373, 64
      %v5483 = vpop.permute.xlu0 %5482
      %v5520 = vadd.f32 %v4893, %v5413
      %v5521 = vadd.f32 %v4894, %v5415
      %v5522 = vadd.f32 %v4895, %v5417
      %v5523 = vadd.f32 %v4896, %v5419
      %v5524 = vadd.f32 %v4897, %v5421
      %v5525 = vadd.f32 %v4898, %v5423
      %v5526 = vadd.f32 %v4899, %v5425
      %v5527 = vadd.f32 %v4900, %v5427
      %v5528 = vadd.f32 %v4901, %v5429
      %v5529 = vadd.f32 %v4902, %v5431
      %v5530 = vadd.f32 %v4903, %v5433
      %v5531 = vadd.f32 %v4904, %v5435
      %v5532 = vadd.f32 %v4905, %v5437
      %v5533 = vadd.f32 %v4906, %v5439
      %v5534 = vadd.f32 %v4907, %v5441
      %v5535 = vadd.f32 %v4908, %v5443
      %v5536 = vadd.f32 %v4909, %v5445
      %v5537 = vadd.f32 %v4910, %v5447
      %v5538 = vadd.f32 %v4911, %v5449
      %v5539 = vadd.f32 %v4912, %v5451
      %v5540 = vadd.f32 %v4913, %v5453
      %v5541 = vadd.f32 %v4914, %v5455
      %v5542 = vadd.f32 %v4915, %v5457
      %v5543 = vadd.f32 %v4916, %v5459
      %v5544 = vadd.f32 %v4917, %v5461
      %v5545 = vadd.f32 %v4918, %v5463
      %v5546 = vadd.f32 %v4919, %v5465
      %v5547 = vadd.f32 %v4920, %v5467
      %v5548 = vadd.f32 %v4921, %v5469
      %v5549 = vadd.f32 %v4922, %v5471
      %v5550 = vadd.f32 %v4923, %v5473
      %v5551 = vadd.f32 %v4924, %v5475
      %v5552 = vadd.f32 %v4925, %v5477
      %v5553 = vadd.f32 %v4926, %v5479
      %v5554 = vadd.f32 %v4927, %v5481
      %v5555 = vadd.f32 %v4928, %v5483
      %v5556 = vld [vmem:[#allocation3] sm:$0xfe]
      %s5557 = scalar_lea.vmem %s2, 96
      %v5558 = vld [vmem:[%s5557] sm:$0xf]
      %v5559 = vld [vmem:[%s5557 + $0x4] sm:$0xf]
      %v5560 = vld [vmem:[%s5557 + $0x8] sm:$0xf]
      %v5561 = vld [vmem:[%s5557 + $0xc] sm:$0xf]
      %v5562 = vld [vmem:[%s5557 + $0x10] sm:$0xf]
      %v5563 = vld [vmem:[%s5557 + $0x14] sm:$0xf]
      %v5564 = vld [vmem:[%s5557 + $0x18] sm:$0xf]
      %v5565 = vld [vmem:[%s5557 + $0x1c] sm:$0xf]
      %v5566 = vld [vmem:[%s5557 + $0x20] sm:$0xf]
      %v5567 = vld [vmem:[%s5557 + $0x24] sm:$0xf]
      %v5568 = vld [vmem:[%s5557 + $0x28] sm:$0xf]
      %v5569 = vld [vmem:[%s5557 + $0x2c] sm:$0xf]
      %v5589 = vrot.slane %v5556, 1
      %v5590 = vrot.slane %v4930, 1
      %v5591 = vsel %vm607, %v5589, %v5590
      %v5592 = vrot.slane %v4931, 1
      %v5593 = vsel %vm607, %v5590, %v5592
      %v5594 = vrot.slane %v4932, 1
      %v5595 = vsel %vm607, %v5592, %v5594
      %v5596 = vrot.slane %v4933, 1
      %v5597 = vsel %vm607, %v5594, %v5596
      %v5598 = vrot.slane %v4934, 1
      %v5599 = vsel %vm607, %v5596, %v5598
      %v5600 = vrot.slane %v4935, 1
      %v5601 = vsel %vm607, %v5598, %v5600
      %v5602 = vrot.slane %v4936, 1
      %v5603 = vsel %vm607, %v5600, %v5602
      %v5604 = vrot.slane %v4937, 1
      %v5605 = vsel %vm607, %v5602, %v5604
      %v5606 = vrot.slane %v4938, 1
      %v5607 = vsel %vm607, %v5604, %v5606
      %v5608 = vrot.slane %v4939, 1
      %v5609 = vsel %vm607, %v5606, %v5608
      %v5610 = vrot.slane %v4940, 1
      %v5611 = vsel %vm607, %v5608, %v5610
      %v5612 = vrot.slane %v4941, 1
      %v5613 = vsel %vm607, %v5610, %v5612
      %v5614 = vrot.slane %v4942, 1
      %v5615 = vsel %vm607, %v5612, %v5614
      %v5616 = vrot.slane %v4943, 1
      %v5617 = vsel %vm607, %v5614, %v5616
      %v5618 = vrot.slane %v4944, 1
      %v5619 = vsel %vm607, %v5616, %v5618
      %v5620 = vrot.slane %v4945, 1
      %v5621 = vsel %vm607, %v5618, %v5620
      %v5622 = vrot.slane %v4946, 1
      %v5623 = vsel %vm607, %v5620, %v5622
      %v5624 = vrot.slane %v4947, 1
      %v5625 = vsel %vm607, %v5622, %v5624
      %v5638 = vunpack.c.l.b16 %v5558
      %v5639 = vunpack.c.l.b16 %v5559
      %v5640 = vunpack.c.l.b16 %v5560
      %v5641 = vunpack.c.l.b16 %v5561
      %v5642 = vunpack.c.l.b16 %v5562
      %v5643 = vunpack.c.l.b16 %v5563
      %v5644 = vunpack.c.l.b16 %v5564
      %v5645 = vunpack.c.l.b16 %v5565
      %v5646 = vunpack.c.l.b16 %v5566
      %v5647 = vunpack.c.l.b16 %v5567
      %v5648 = vunpack.c.l.b16 %v5568
      %v5649 = vunpack.c.l.b16 %v5569
      %v5650 = vpack.c.b16 %v5639, %v5638
      %v5651 = vpack.c.b16 %v5641, %v5640
      %v5652 = vpack.c.b16 %v5643, %v5642
      %v5653 = vpack.c.b16 %v5645, %v5644
      %v5654 = vpack.c.b16 %v5647, %v5646
      %v5655 = vpack.c.b16 %v5649, %v5648
      %v5663 = vsel %vm4517, %v5591, 0
      %v5666 = vsel %vm4517, %v5593, 0
      %v5669 = vsel %vm4517, %v5595, 0
      %v5672 = vsel %vm4517, %v5597, 0
      %v5675 = vsel %vm4517, %v5599, 0
      %v5678 = vsel %vm4517, %v5601, 0
      %v5681 = vsel %vm4517, %v5603, 0
      %v5684 = vsel %vm4517, %v5605, 0
      %v5687 = vsel %vm4517, %v5607, 0
      %v5690 = vsel %vm4517, %v5609, 0
      %v5693 = vsel %vm4517, %v5611, 0
      %v5696 = vsel %vm4517, %v5613, 0
      %v5699 = vsel %vm4517, %v5615, 0
      %v5702 = vsel %vm4517, %v5617, 0
      %v5705 = vsel %vm4517, %v5619, 0
      %v5708 = vsel %vm4517, %v5621, 0
      %v5711 = vsel %vm4517, %v5623, 0
      %v5714 = vsel %vm4517, %v5625, 0
      %5716 = vmatprep.subr.bf16.mxu0 0
      %5717 = vmatpush1.bf16.msra.mxu0 %v5650
      %5718 = vmatprep.subr.bf16.mxu0 0
      %5719 = vmatpush1.bf16.msra.mxu0 %v5651
      %5720 = vmatprep.subr.bf16.mxu0 0
      %5721 = vmatpush1.bf16.msra.mxu0 %v5652
      %5722 = vmatprep.subr.bf16.mxu0 0
      %5723 = vmatpush1.bf16.msra.mxu0 %v5653
      %5724 = vmatprep.subr.bf16.mxu0 0
      %5725 = vmatpush1.bf16.msra.mxu0 %v5654
      %5726 = vmatprep.subr.bf16.mxu0 0
      %5727 = vmatpush1.bf16.msra.mxu0 %v5655
      %5728 = vmatprep.subr.bf16.mxu0 0
      %5729 = vmatpush1.bf16.msra.mxu0 0
      %5730 = vmatprep.subr.bf16.mxu0 0
      %5731 = vmatpush1.bf16.msra.mxu0 0
      %5732 = vmatprep.subr.bf16.mxu0 0
      %5733 = vmatpush1.bf16.msra.mxu0 0
      %5734 = vmatprep.subr.bf16.mxu0 0
      %5735 = vmatpush1.bf16.msra.mxu0 0
      %5736 = vmatprep.subr.bf16.mxu0 0
      %5737 = vmatpush1.bf16.msra.mxu0 0
      %5738 = vmatprep.subr.bf16.mxu0 0
      %5739 = vmatpush1.bf16.msra.mxu0 0
      %5740 = vmatprep.subr.bf16.mxu0 0
      %5741 = vmatpush1.bf16.msra.mxu0 0
      %5742 = vmatprep.subr.bf16.mxu0 0
      %5743 = vmatpush1.bf16.msra.mxu0 0
      %5744 = vmatprep.subr.bf16.mxu0 0
      %5745 = vmatpush1.bf16.msra.mxu0 0
      %5746 = vmatprep.subr.bf16.mxu0 0
      %5747 = vmatpush1.bf16.msra.mxu0 0
      %5748 = vmatprep.mubr.bf16.mxu0 0
      %5749 = vmatmul.mubr.bf16.gmra.mrb[0].mxu0 %v5663
      %v5750 = vpop.f32.mrb[0].mxu0
      %v5751 = vadd.f32 0.0, %v5750
      %v5752 = vpop.f32.mrb[0].mxu0
      %v5753 = vpop.f32.mrb[0].mxu0
      %v5754 = vadd.f32 0.0, %v5753
      %v5755 = vpop.f32.mrb[0].mxu0
      %5756 = vmatprep.mubr.bf16.mxu0 0
      %5757 = vmatmul.mubr.bf16.gmra.mrb[0].mxu0 %v5666
      %v5758 = vpop.f32.mrb[0].mxu0
      %v5759 = vadd.f32 0.0, %v5758
      %v5760 = vpop.f32.mrb[0].mxu0
      %v5761 = vpop.f32.mrb[0].mxu0
      %v5762 = vadd.f32 0.0, %v5761
      %v5763 = vpop.f32.mrb[0].mxu0
      %5764 = vmatprep.mubr.bf16.mxu0 0
      %5765 = vmatmul.mubr.bf16.gmra.mrb[0].mxu0 %v5669
      %v5766 = vpop.f32.mrb[0].mxu0
      %v5767 = vadd.f32 0.0, %v5766
      %v5768 = vpop.f32.mrb[0].mxu0
      %v5769 = vpop.f32.mrb[0].mxu0
      %v5770 = vadd.f32 0.0, %v5769
      %v5771 = vpop.f32.mrb[0].mxu0
      %5772 = vmatprep.mubr.bf16.mxu0 0
      %5773 = vmatmul.mubr.bf16.gmra.mrb[0].mxu0 %v5672
      %v5774 = vpop.f32.mrb[0].mxu0
      %v5775 = vadd.f32 0.0, %v5774
      %v5776 = vpop.f32.mrb[0].mxu0
      %v5777 = vpop.f32.mrb[0].mxu0
      %v5778 = vadd.f32 0.0, %v5777
      %v5779 = vpop.f32.mrb[0].mxu0
      %5780 = vmatprep.mubr.bf16.mxu0 0
      %5781 = vmatmul.mubr.bf16.gmra.mrb[0].mxu0 %v5675
      %v5782 = vpop.f32.mrb[0].mxu0
      %v5783 = vadd.f32 0.0, %v5782
      %v5784 = vpop.f32.mrb[0].mxu0
      %v5785 = vpop.f32.mrb[0].mxu0
      %v5786 = vadd.f32 0.0, %v5785
      %v5787 = vpop.f32.mrb[0].mxu0
      %5788 = vmatprep.mubr.bf16.mxu0 0
      %5789 = vmatmul.mubr.bf16.gmra.mrb[0].mxu0 %v5678
      %v5790 = vpop.f32.mrb[0].mxu0
      %v5791 = vadd.f32 0.0, %v5790
      %v5792 = vpop.f32.mrb[0].mxu0
      %v5793 = vpop.f32.mrb[0].mxu0
      %v5794 = vadd.f32 0.0, %v5793
      %v5795 = vpop.f32.mrb[0].mxu0
      %5796 = vmatprep.mubr.bf16.mxu0 0
      %5797 = vmatmul.mubr.bf16.gmra.mrb[0].mxu0 %v5681
      %v5798 = vpop.f32.mrb[0].mxu0
      %v5799 = vadd.f32 0.0, %v5798
      %v5800 = vpop.f32.mrb[0].mxu0
      %v5801 = vpop.f32.mrb[0].mxu0
      %v5802 = vadd.f32 0.0, %v5801
      %v5803 = vpop.f32.mrb[0].mxu0
      %5804 = vmatprep.mubr.bf16.mxu0 0
      %5805 = vmatmul.mubr.bf16.gmra.mrb[0].mxu0 %v5684
      %v5806 = vpop.f32.mrb[0].mxu0
      %v5807 = vadd.f32 0.0, %v5806
      %v5808 = vpop.f32.mrb[0].mxu0
      %v5809 = vpop.f32.mrb[0].mxu0
      %v5810 = vadd.f32 0.0, %v5809
      %v5811 = vpop.f32.mrb[0].mxu0
      %5812 = vmatprep.mubr.bf16.mxu0 0
      %5813 = vmatmul.mubr.bf16.gmra.mrb[0].mxu0 %v5687
      %v5814 = vpop.f32.mrb[0].mxu0
      %v5815 = vadd.f32 0.0, %v5814
      %v5816 = vpop.f32.mrb[0].mxu0
      %v5817 = vpop.f32.mrb[0].mxu0
      %v5818 = vadd.f32 0.0, %v5817
      %v5819 = vpop.f32.mrb[0].mxu0
      %5820 = vmatprep.mubr.bf16.mxu0 0
      %5821 = vmatmul.mubr.bf16.gmra.mrb[0].mxu0 %v5690
      %v5822 = vpop.f32.mrb[0].mxu0
      %v5823 = vadd.f32 0.0, %v5822
      %v5824 = vpop.f32.mrb[0].mxu0
      %v5825 = vpop.f32.mrb[0].mxu0
      %v5826 = vadd.f32 0.0, %v5825
      %v5827 = vpop.f32.mrb[0].mxu0
      %5828 = vmatprep.mubr.bf16.mxu0 0
      %5829 = vmatmul.mubr.bf16.gmra.mrb[0].mxu0 %v5693
      %v5830 = vpop.f32.mrb[0].mxu0
      %v5831 = vadd.f32 0.0, %v5830
      %v5832 = vpop.f32.mrb[0].mxu0
      %v5833 = vpop.f32.mrb[0].mxu0
      %v5834 = vadd.f32 0.0, %v5833
      %v5835 = vpop.f32.mrb[0].mxu0
      %5836 = vmatprep.mubr.bf16.mxu0 0
      %5837 = vmatmul.mubr.bf16.gmra.mrb[0].mxu0 %v5696
      %v5838 = vpop.f32.mrb[0].mxu0
      %v5839 = vadd.f32 0.0, %v5838
      %v5840 = vpop.f32.mrb[0].mxu0
      %v5841 = vpop.f32.mrb[0].mxu0
      %v5842 = vadd.f32 0.0, %v5841
      %v5843 = vpop.f32.mrb[0].mxu0
      %5844 = vmatprep.mubr.bf16.mxu0 0
      %5845 = vmatmul.mubr.bf16.gmra.mrb[0].mxu0 %v5699
      %v5846 = vpop.f32.mrb[0].mxu0
      %v5847 = vadd.f32 0.0, %v5846
      %v5848 = vpop.f32.mrb[0].mxu0
      %v5849 = vpop.f32.mrb[0].mxu0
      %v5850 = vadd.f32 0.0, %v5849
      %v5851 = vpop.f32.mrb[0].mxu0
      %5852 = vmatprep.mubr.bf16.mxu0 0
      %5853 = vmatmul.mubr.bf16.gmra.mrb[0].mxu0 %v5702
      %v5854 = vpop.f32.mrb[0].mxu0
      %v5855 = vadd.f32 0.0, %v5854
      %v5856 = vpop.f32.mrb[0].mxu0
      %v5857 = vpop.f32.mrb[0].mxu0
      %v5858 = vadd.f32 0.0, %v5857
      %v5859 = vpop.f32.mrb[0].mxu0
      %5860 = vmatprep.mubr.bf16.mxu0 0
      %5861 = vmatmul.mubr.bf16.gmra.mrb[0].mxu0 %v5705
      %v5862 = vpop.f32.mrb[0].mxu0
      %v5863 = vadd.f32 0.0, %v5862
      %v5864 = vpop.f32.mrb[0].mxu0
      %v5865 = vpop.f32.mrb[0].mxu0
      %v5866 = vadd.f32 0.0, %v5865
      %v5867 = vpop.f32.mrb[0].mxu0
      %5868 = vmatprep.mubr.bf16.mxu0 0
      %5869 = vmatmul.mubr.bf16.gmra.mrb[0].mxu0 %v5708
      %v5870 = vpop.f32.mrb[0].mxu0
      %v5871 = vadd.f32 0.0, %v5870
      %v5872 = vpop.f32.mrb[0].mxu0
      %v5873 = vpop.f32.mrb[0].mxu0
      %v5874 = vadd.f32 0.0, %v5873
      %v5875 = vpop.f32.mrb[0].mxu0
      %5876 = vmatprep.mubr.bf16.mxu0 0
      %5877 = vmatmul.mubr.bf16.gmra.mrb[0].mxu0 %v5711
      %v5878 = vpop.f32.mrb[0].mxu0
      %v5879 = vadd.f32 0.0, %v5878
      %v5880 = vpop.f32.mrb[0].mxu0
      %v5881 = vpop.f32.mrb[0].mxu0
      %v5882 = vadd.f32 0.0, %v5881
      %v5883 = vpop.f32.mrb[0].mxu0
      %5884 = vmatprep.mubr.bf16.mxu0 0
      %5885 = vmatmul.mubr.bf16.gmra.mrb[0].mxu0 %v5714
      %v5886 = vpop.f32.mrb[0].mxu0
      %v5887 = vadd.f32 0.0, %v5886
      %v5888 = vpop.f32.mrb[0].mxu0
      %v5889 = vpop.f32.mrb[0].mxu0
      %v5890 = vadd.f32 0.0, %v5889
      %v5891 = vpop.f32.mrb[0].mxu0
      %5892 = vdwg.mxu0
      %5929 = vrot.lane.b32.xlu0 %v5751, 64
      %v5930 = vpop.permute.xlu0 %5929
      %5931 = vrot.lane.b32.xlu0 %v5754, 64
      %v5932 = vpop.permute.xlu0 %5931
      %5933 = vrot.lane.b32.xlu0 %v5759, 64
      %v5934 = vpop.permute.xlu0 %5933
      %5935 = vrot.lane.b32.xlu0 %v5762, 64
      %v5936 = vpop.permute.xlu0 %5935
      %5937 = vrot.lane.b32.xlu0 %v5767, 64
      %v5938 = vpop.permute.xlu0 %5937
      %5939 = vrot.lane.b32.xlu0 %v5770, 64
      %v5940 = vpop.permute.xlu0 %5939
      %5941 = vrot.lane.b32.xlu0 %v5775, 64
      %v5942 = vpop.permute.xlu0 %5941
      %5943 = vrot.lane.b32.xlu0 %v5778, 64
      %v5944 = vpop.permute.xlu0 %5943
      %5945 = vrot.lane.b32.xlu0 %v5783, 64
      %v5946 = vpop.permute.xlu0 %5945
      %5947 = vrot.lane.b32.xlu0 %v5786, 64
      %v5948 = vpop.permute.xlu0 %5947
      %5949 = vrot.lane.b32.xlu0 %v5791, 64
      %v5950 = vpop.permute.xlu0 %5949
      %5951 = vrot.lane.b32.xlu0 %v5794, 64
      %v5952 = vpop.permute.xlu0 %5951
      %5953 = vrot.lane.b32.xlu0 %v5799, 64
      %v5954 = vpop.permute.xlu0 %5953
      %5955 = vrot.lane.b32.xlu0 %v5802, 64
      %v5956 = vpop.permute.xlu0 %5955
      %5957 = vrot.lane.b32.xlu0 %v5807, 64
      %v5958 = vpop.permute.xlu0 %5957
      %5959 = vrot.lane.b32.xlu0 %v5810, 64
      %v5960 = vpop.permute.xlu0 %5959
      %5961 = vrot.lane.b32.xlu0 %v5815, 64
      %v5962 = vpop.permute.xlu0 %5961
      %5963 = vrot.lane.b32.xlu0 %v5818, 64
      %v5964 = vpop.permute.xlu0 %5963
      %5965 = vrot.lane.b32.xlu0 %v5823, 64
      %v5966 = vpop.permute.xlu0 %5965
      %5967 = vrot.lane.b32.xlu0 %v5826, 64
      %v5968 = vpop.permute.xlu0 %5967
      %5969 = vrot.lane.b32.xlu0 %v5831, 64
      %v5970 = vpop.permute.xlu0 %5969
      %5971 = vrot.lane.b32.xlu0 %v5834, 64
      %v5972 = vpop.permute.xlu0 %5971
      %5973 = vrot.lane.b32.xlu0 %v5839, 64
      %v5974 = vpop.permute.xlu0 %5973
      %5975 = vrot.lane.b32.xlu0 %v5842, 64
      %v5976 = vpop.permute.xlu0 %5975
      %5977 = vrot.lane.b32.xlu0 %v5847, 64
      %v5978 = vpop.permute.xlu0 %5977
      %5979 = vrot.lane.b32.xlu0 %v5850, 64
      %v5980 = vpop.permute.xlu0 %5979
      %5981 = vrot.lane.b32.xlu0 %v5855, 64
      %v5982 = vpop.permute.xlu0 %5981
      %5983 = vrot.lane.b32.xlu0 %v5858, 64
      %v5984 = vpop.permute.xlu0 %5983
      %5985 = vrot.lane.b32.xlu0 %v5863, 64
      %v5986 = vpop.permute.xlu0 %5985
      %5987 = vrot.lane.b32.xlu0 %v5866, 64
      %v5988 = vpop.permute.xlu0 %5987
      %5989 = vrot.lane.b32.xlu0 %v5871, 64
      %v5990 = vpop.permute.xlu0 %5989
      %5991 = vrot.lane.b32.xlu0 %v5874, 64
      %v5992 = vpop.permute.xlu0 %5991
      %5993 = vrot.lane.b32.xlu0 %v5879, 64
      %v5994 = vpop.permute.xlu0 %5993
      %5995 = vrot.lane.b32.xlu0 %v5882, 64
      %v5996 = vpop.permute.xlu0 %5995
      %5997 = vrot.lane.b32.xlu0 %v5887, 64
      %v5998 = vpop.permute.xlu0 %5997
      %5999 = vrot.lane.b32.xlu0 %v5890, 64
      %v6000 = vpop.permute.xlu0 %5999
      %v6037 = vadd.f32 %v5520, %v5930
      %v6038 = vadd.f32 %v5521, %v5932
      %v6039 = vadd.f32 %v5522, %v5934
      %v6040 = vadd.f32 %v5523, %v5936
      %v6041 = vadd.f32 %v5524, %v5938
      %v6042 = vadd.f32 %v5525, %v5940
      %v6043 = vadd.f32 %v5526, %v5942
      %v6044 = vadd.f32 %v5527, %v5944
      %v6045 = vadd.f32 %v5528, %v5946
      %v6046 = vadd.f32 %v5529, %v5948
      %v6047 = vadd.f32 %v5530, %v5950
      %v6048 = vadd.f32 %v5531, %v5952
      %v6049 = vadd.f32 %v5532, %v5954
      %v6050 = vadd.f32 %v5533, %v5956
      %v6051 = vadd.f32 %v5534, %v5958
      %v6052 = vadd.f32 %v5535, %v5960
      %v6053 = vadd.f32 %v5536, %v5962
      %v6054 = vadd.f32 %v5537, %v5964
      %v6055 = vadd.f32 %v5538, %v5966
      %v6056 = vadd.f32 %v5539, %v5968
      %v6057 = vadd.f32 %v5540, %v5970
      %v6058 = vadd.f32 %v5541, %v5972
      %v6059 = vadd.f32 %v5542, %v5974
      %v6060 = vadd.f32 %v5543, %v5976
      %v6061 = vadd.f32 %v5544, %v5978
      %v6062 = vadd.f32 %v5545, %v5980
      %v6063 = vadd.f32 %v5546, %v5982
      %v6064 = vadd.f32 %v5547, %v5984
      %v6065 = vadd.f32 %v5548, %v5986
      %v6066 = vadd.f32 %v5549, %v5988
      %v6067 = vadd.f32 %v5550, %v5990
      %v6068 = vadd.f32 %v5551, %v5992
      %v6069 = vadd.f32 %v5552, %v5994
      %v6070 = vadd.f32 %v5553, %v5996
      %v6071 = vadd.f32 %v5554, %v5998
      %v6072 = vadd.f32 %v5555, %v6000
      %v6073 = vtanh.pop %v6037
      %v6074 = vtanh.pop %v6038
      %v6075 = vtanh.pop %v6039
      %v6076 = vtanh.pop %v6040
      %v6077 = vtanh.pop %v6041
      %v6078 = vtanh.pop %v6042
      %v6079 = vtanh.pop %v6043
      %v6080 = vtanh.pop %v6044
      %v6081 = vtanh.pop %v6045
      %v6082 = vtanh.pop %v6046
      %v6083 = vtanh.pop %v6047
      %v6084 = vtanh.pop %v6048
      %v6085 = vtanh.pop %v6049
      %v6086 = vtanh.pop %v6050
      %v6087 = vtanh.pop %v6051
      %v6088 = vtanh.pop %v6052
      %v6089 = vtanh.pop %v6053
      %v6090 = vtanh.pop %v6054
      %v6091 = vtanh.pop %v6055
      %v6092 = vtanh.pop %v6056
      %v6093 = vtanh.pop %v6057
      %v6094 = vtanh.pop %v6058
      %v6095 = vtanh.pop %v6059
      %v6096 = vtanh.pop %v6060
      %v6097 = vtanh.pop %v6061
      %v6098 = vtanh.pop %v6062
      %v6099 = vtanh.pop %v6063
      %v6100 = vtanh.pop %v6064
      %v6101 = vtanh.pop %v6065
      %v6102 = vtanh.pop %v6066
      %v6103 = vtanh.pop %v6067
      %v6104 = vtanh.pop %v6068
      %v6105 = vtanh.pop %v6069
      %v6106 = vtanh.pop %v6070
      %v6107 = vtanh.pop %v6071
      %v6108 = vtanh.pop %v6072
      %v6109 = vsub.f32 1.0, %v3735
      %v6110 = vsub.f32 1.0, %v3737
      %v6111 = vsub.f32 1.0, %v3739
      %v6112 = vsub.f32 1.0, %v3741
      %v6113 = vsub.f32 1.0, %v3743
      %v6114 = vsub.f32 1.0, %v3745
      %v6115 = vsub.f32 1.0, %v3747
      %v6116 = vsub.f32 1.0, %v3749
      %v6117 = vsub.f32 1.0, %v3751
      %v6118 = vsub.f32 1.0, %v3753
      %v6119 = vsub.f32 1.0, %v3755
      %v6120 = vsub.f32 1.0, %v3757
      %v6121 = vsub.f32 1.0, %v3759
      %v6122 = vsub.f32 1.0, %v3761
      %v6123 = vsub.f32 1.0, %v3763
      %v6124 = vsub.f32 1.0, %v3765
      %v6125 = vsub.f32 1.0, %v3767
      %v6126 = vsub.f32 1.0, %v3769
      %v6127 = vsub.f32 1.0, %v3771
      %v6128 = vsub.f32 1.0, %v3773
      %v6129 = vsub.f32 1.0, %v3775
      %v6130 = vsub.f32 1.0, %v3777
      %v6131 = vsub.f32 1.0, %v3779
      %v6132 = vsub.f32 1.0, %v3781
      %v6133 = vsub.f32 1.0, %v3783
      %v6134 = vsub.f32 1.0, %v3785
      %v6135 = vsub.f32 1.0, %v3787
      %v6136 = vsub.f32 1.0, %v3789
      %v6137 = vsub.f32 1.0, %v3791
      %v6138 = vsub.f32 1.0, %v3793
      %v6139 = vsub.f32 1.0, %v3795
      %v6140 = vsub.f32 1.0, %v3797
      %v6141 = vsub.f32 1.0, %v3799
      %v6142 = vsub.f32 1.0, %v3801
      %v6143 = vsub.f32 1.0, %v3803
      %v6144 = vsub.f32 1.0, %v3805
      %v6145 = vmul.f32 %v6109, %v1778
      %v6146 = vmul.f32 %v6110, %v1780
      %v6147 = vmul.f32 %v6111, %v1782
      %v6148 = vmul.f32 %v6112, %v1784
      %v6149 = vmul.f32 %v6113, %v1786
      %v6150 = vmul.f32 %v6114, %v1788
      %v6151 = vmul.f32 %v6115, %v1790
      %v6152 = vmul.f32 %v6116, %v1792
      %v6153 = vmul.f32 %v6117, %v1794
      %v6154 = vmul.f32 %v6118, %v1796
      %v6155 = vmul.f32 %v6119, %v1798
      %v6156 = vmul.f32 %v6120, %v1800
      %v6157 = vmul.f32 %v6121, %v1802
      %v6158 = vmul.f32 %v6122, %v1804
      %v6159 = vmul.f32 %v6123, %v1806
      %v6160 = vmul.f32 %v6124, %v1808
      %v6161 = vmul.f32 %v6125, %v1810
      %v6162 = vmul.f32 %v6126, %v1812
      %v6163 = vmul.f32 %v6127, %v1814
      %v6164 = vmul.f32 %v6128, %v1816
      %v6165 = vmul.f32 %v6129, %v1818
      %v6166 = vmul.f32 %v6130, %v1820
      %v6167 = vmul.f32 %v6131, %v1822
      %v6168 = vmul.f32 %v6132, %v1824
      %v6169 = vmul.f32 %v6133, %v1826
      %v6170 = vmul.f32 %v6134, %v1828
      %v6171 = vmul.f32 %v6135, %v1830
      %v6172 = vmul.f32 %v6136, %v1832
      %v6173 = vmul.f32 %v6137, %v1834
      %v6174 = vmul.f32 %v6138, %v1836
      %v6175 = vmul.f32 %v6139, %v1838
      %v6176 = vmul.f32 %v6140, %v1840
      %v6177 = vmul.f32 %v6141, %v1842
      %v6178 = vmul.f32 %v6142, %v1844
      %v6179 = vmul.f32 %v6143, %v1846
      %v6180 = vmul.f32 %v6144, %v1848
      %6217 = vrot.lane.b32.xlu0 %v6073, 64
      %v6218 = vpop.permute.xlu0 %6217
      %6219 = vrot.lane.b32.xlu0 %v6074, 64
      %v6220 = vpop.permute.xlu0 %6219
      %6221 = vrot.lane.b32.xlu0 %v6075, 64
      %v6222 = vpop.permute.xlu0 %6221
      %6223 = vrot.lane.b32.xlu0 %v6076, 64
      %v6224 = vpop.permute.xlu0 %6223
      %6225 = vrot.lane.b32.xlu0 %v6077, 64
      %v6226 = vpop.permute.xlu0 %6225
      %6227 = vrot.lane.b32.xlu0 %v6078, 64
      %v6228 = vpop.permute.xlu0 %6227
      %6229 = vrot.lane.b32.xlu0 %v6079, 64
      %v6230 = vpop.permute.xlu0 %6229
      %6231 = vrot.lane.b32.xlu0 %v6080, 64
      %v6232 = vpop.permute.xlu0 %6231
      %6233 = vrot.lane.b32.xlu0 %v6081, 64
      %v6234 = vpop.permute.xlu0 %6233
      %6235 = vrot.lane.b32.xlu0 %v6082, 64
      %v6236 = vpop.permute.xlu0 %6235
      %6237 = vrot.lane.b32.xlu0 %v6083, 64
      %v6238 = vpop.permute.xlu0 %6237
      %6239 = vrot.lane.b32.xlu0 %v6084, 64
      %v6240 = vpop.permute.xlu0 %6239
      %6241 = vrot.lane.b32.xlu0 %v6085, 64
      %v6242 = vpop.permute.xlu0 %6241
      %6243 = vrot.lane.b32.xlu0 %v6086, 64
      %v6244 = vpop.permute.xlu0 %6243
      %6245 = vrot.lane.b32.xlu0 %v6087, 64
      %v6246 = vpop.permute.xlu0 %6245
      %6247 = vrot.lane.b32.xlu0 %v6088, 64
      %v6248 = vpop.permute.xlu0 %6247
      %6249 = vrot.lane.b32.xlu0 %v6089, 64
      %v6250 = vpop.permute.xlu0 %6249
      %6251 = vrot.lane.b32.xlu0 %v6090, 64
      %v6252 = vpop.permute.xlu0 %6251
      %6253 = vrot.lane.b32.xlu0 %v6091, 64
      %v6254 = vpop.permute.xlu0 %6253
      %6255 = vrot.lane.b32.xlu0 %v6092, 64
      %v6256 = vpop.permute.xlu0 %6255
      %6257 = vrot.lane.b32.xlu0 %v6093, 64
      %v6258 = vpop.permute.xlu0 %6257
      %6259 = vrot.lane.b32.xlu0 %v6094, 64
      %v6260 = vpop.permute.xlu0 %6259
      %6261 = vrot.lane.b32.xlu0 %v6095, 64
      %v6262 = vpop.permute.xlu0 %6261
      %6263 = vrot.lane.b32.xlu0 %v6096, 64
      %v6264 = vpop.permute.xlu0 %6263
      %6265 = vrot.lane.b32.xlu0 %v6097, 64
      %v6266 = vpop.permute.xlu0 %6265
      %6267 = vrot.lane.b32.xlu0 %v6098, 64
      %v6268 = vpop.permute.xlu0 %6267
      %6269 = vrot.lane.b32.xlu0 %v6099, 64
      %v6270 = vpop.permute.xlu0 %6269
      %6271 = vrot.lane.b32.xlu0 %v6100, 64
      %v6272 = vpop.permute.xlu0 %6271
      %6273 = vrot.lane.b32.xlu0 %v6101, 64
      %v6274 = vpop.permute.xlu0 %6273
      %6275 = vrot.lane.b32.xlu0 %v6102, 64
      %v6276 = vpop.permute.xlu0 %6275
      %6277 = vrot.lane.b32.xlu0 %v6103, 64
      %v6278 = vpop.permute.xlu0 %6277
      %6279 = vrot.lane.b32.xlu0 %v6104, 64
      %v6280 = vpop.permute.xlu0 %6279
      %6281 = vrot.lane.b32.xlu0 %v6105, 64
      %v6282 = vpop.permute.xlu0 %6281
      %6283 = vrot.lane.b32.xlu0 %v6106, 64
      %v6284 = vpop.permute.xlu0 %6283
      %6285 = vrot.lane.b32.xlu0 %v6107, 64
      %v6286 = vpop.permute.xlu0 %6285
      %6287 = vrot.lane.b32.xlu0 %v6108, 64
      %v6288 = vpop.permute.xlu0 %6287
      %v6325 = vmul.f32 %v3735, %v6218
      %v6326 = vmul.f32 %v3737, %v6220
      %v6327 = vmul.f32 %v3739, %v6222
      %v6328 = vmul.f32 %v3741, %v6224
      %v6329 = vmul.f32 %v3743, %v6226
      %v6330 = vmul.f32 %v3745, %v6228
      %v6331 = vmul.f32 %v3747, %v6230
      %v6332 = vmul.f32 %v3749, %v6232
      %v6333 = vmul.f32 %v3751, %v6234
      %v6334 = vmul.f32 %v3753, %v6236
      %v6335 = vmul.f32 %v3755, %v6238
      %v6336 = vmul.f32 %v3757, %v6240
      %v6337 = vmul.f32 %v3759, %v6242
      %v6338 = vmul.f32 %v3761, %v6244
      %v6339 = vmul.f32 %v3763, %v6246
      %v6340 = vmul.f32 %v3765, %v6248
      %v6341 = vmul.f32 %v3767, %v6250
      %v6342 = vmul.f32 %v3769, %v6252
      %v6343 = vmul.f32 %v3771, %v6254
      %v6344 = vmul.f32 %v3773, %v6256
      %v6345 = vmul.f32 %v3775, %v6258
      %v6346 = vmul.f32 %v3777, %v6260
      %v6347 = vmul.f32 %v3779, %v6262
      %v6348 = vmul.f32 %v3781, %v6264
      %v6349 = vmul.f32 %v3783, %v6266
      %v6350 = vmul.f32 %v3785, %v6268
      %v6351 = vmul.f32 %v3787, %v6270
      %v6352 = vmul.f32 %v3789, %v6272
      %v6353 = vmul.f32 %v3791, %v6274
      %v6354 = vmul.f32 %v3793, %v6276
      %v6355 = vmul.f32 %v3795, %v6278
      %v6356 = vmul.f32 %v3797, %v6280
      %v6357 = vmul.f32 %v3799, %v6282
      %v6358 = vmul.f32 %v3801, %v6284
      %v6359 = vmul.f32 %v3803, %v6286
      %v6360 = vmul.f32 %v3805, %v6288
      %v6361 = vadd.f32 %v6145, %v6325
      %v6362 = vadd.f32 %v6146, %v6326
      %v6363 = vadd.f32 %v6147, %v6327
      %v6364 = vadd.f32 %v6148, %v6328
      %v6365 = vadd.f32 %v6149, %v6329
      %v6366 = vadd.f32 %v6150, %v6330
      %v6367 = vadd.f32 %v6151, %v6331
      %v6368 = vadd.f32 %v6152, %v6332
      %v6369 = vadd.f32 %v6153, %v6333
      %v6370 = vadd.f32 %v6154, %v6334
      %v6371 = vadd.f32 %v6155, %v6335
      %v6372 = vadd.f32 %v6156, %v6336
      %v6373 = vadd.f32 %v6157, %v6337
      %v6374 = vadd.f32 %v6158, %v6338
      %v6375 = vadd.f32 %v6159, %v6339
      %v6376 = vadd.f32 %v6160, %v6340
      %v6377 = vadd.f32 %v6161, %v6341
      %v6378 = vadd.f32 %v6162, %v6342
      %v6379 = vadd.f32 %v6163, %v6343
      %v6380 = vadd.f32 %v6164, %v6344
      %v6381 = vadd.f32 %v6165, %v6345
      %v6382 = vadd.f32 %v6166, %v6346
      %v6383 = vadd.f32 %v6167, %v6347
      %v6384 = vadd.f32 %v6168, %v6348
      %v6385 = vadd.f32 %v6169, %v6349
      %v6386 = vadd.f32 %v6170, %v6350
      %v6387 = vadd.f32 %v6171, %v6351
      %v6388 = vadd.f32 %v6172, %v6352
      %v6389 = vadd.f32 %v6173, %v6353
      %v6390 = vadd.f32 %v6174, %v6354
      %v6391 = vadd.f32 %v6175, %v6355
      %v6392 = vadd.f32 %v6176, %v6356
      %v6393 = vadd.f32 %v6177, %v6357
      %v6394 = vadd.f32 %v6178, %v6358
      %v6395 = vadd.f32 %v6179, %v6359
      %v6396 = vadd.f32 %v6180, %v6360
      %6397 = vst.msk [vmem:[%s305] sm:$0xff] %vm1290, %v6361
      %6398 = vst.msk [vmem:[%s305 + $0x8] sm:$0xff] %vm1290, %v6362
      %6399 = vst.msk [vmem:[%s305 + $0x10] sm:$0xff] %vm1290, %v6363
      %6400 = vst.msk [vmem:[%s305 + $0x18] sm:$0xff] %vm1290, %v6364
      %6401 = vst.msk [vmem:[%s305 + $0x20] sm:$0xff] %vm1290, %v6365
      %6402 = vst.msk [vmem:[%s305 + $0x28] sm:$0xff] %vm1290, %v6366
      %6403 = vst.msk [vmem:[%s305 + $0x30] sm:$0xff] %vm1290, %v6367
      %6404 = vst.msk [vmem:[%s305 + $0x38] sm:$0xff] %vm1290, %v6368
      %6405 = vst.msk [vmem:[%s305 + $0x40] sm:$0xff] %vm1290, %v6369
      %6406 = vst.msk [vmem:[%s305 + $0x48] sm:$0xff] %vm1290, %v6370
      %6407 = vst.msk [vmem:[%s305 + $0x50] sm:$0xff] %vm1290, %v6371
      %6408 = vst.msk [vmem:[%s305 + $0x58] sm:$0xff] %vm1290, %v6372
      %6409 = vst.msk [vmem:[%s305 + $0x60] sm:$0xff] %vm1290, %v6373
      %6410 = vst.msk [vmem:[%s305 + $0x68] sm:$0xff] %vm1290, %v6374
      %6411 = vst.msk [vmem:[%s305 + $0x70] sm:$0xff] %vm1290, %v6375
      %6412 = vst.msk [vmem:[%s305 + $0x78] sm:$0xff] %vm1290, %v6376
      %6413 = vst.msk [vmem:[%s305 + $0x80] sm:$0xff] %vm1290, %v6377
      %6414 = vst.msk [vmem:[%s305 + $0x88] sm:$0xff] %vm1290, %v6378
      %6415 = vst.msk [vmem:[%s305 + $0x90] sm:$0xff] %vm1290, %v6379
      %6416 = vst.msk [vmem:[%s305 + $0x98] sm:$0xff] %vm1290, %v6380
      %6417 = vst.msk [vmem:[%s305 + $0xa0] sm:$0xff] %vm1290, %v6381
      %6418 = vst.msk [vmem:[%s305 + $0xa8] sm:$0xff] %vm1290, %v6382
      %6419 = vst.msk [vmem:[%s305 + $0xb0] sm:$0xff] %vm1290, %v6383
      %6420 = vst.msk [vmem:[%s305 + $0xb8] sm:$0xff] %vm1290, %v6384
      %6421 = vst.msk [vmem:[%s305 + $0xc0] sm:$0xff] %vm1290, %v6385
      %6422 = vst.msk [vmem:[%s305 + $0xc8] sm:$0xff] %vm1290, %v6386
      %6423 = vst.msk [vmem:[%s305 + $0xd0] sm:$0xff] %vm1290, %v6387
      %6424 = vst.msk [vmem:[%s305 + $0xd8] sm:$0xff] %vm1290, %v6388
      %6425 = vst.msk [vmem:[%s305 + $0xe0] sm:$0xff] %vm1290, %v6389
      %6426 = vst.msk [vmem:[%s305 + $0xe8] sm:$0xff] %vm1290, %v6390
      %6427 = vst.msk [vmem:[%s305 + $0xf0] sm:$0xff] %vm1290, %v6391
      %6428 = vst.msk [vmem:[%s305 + $0xf8] sm:$0xff] %vm1290, %v6392
      %6429 = vst.msk [vmem:[%s305 + $0x100] sm:$0xff] %vm1290, %v6393
      %6430 = vst.msk [vmem:[%s305 + $0x108] sm:$0xff] %vm1290, %v6394
      %6431 = vst.msk [vmem:[%s305 + $0x110] sm:$0xff] %vm1290, %v6395
      %6432 = vst.msk [vmem:[%s305 + $0x118] sm:$0xff] %vm1290, %v6396
      %p6433 = scmp.lt.s32.totalorder %s19, 1
      %s6434 = scalar_select %p6433, %s19, 1
      %s6435 = smul.addr %s6434, 36
      %s6436 = smul.addr %s6435, 8
      %s6437 = scalar_lea.vmem %s8, %s6436
      // Predicated region
      $region53: #{tpu_custom_call.1} parent=51 // pred_check
        %p6438 = pneg %p210
      $region54: #{tpu_custom_call.1} parent=51 // pred_check_branch
        %6440 = sbr.rel (%p6438) target = $region56
      $region55: #{tpu_custom_call.1} parent=51 // pred_region
        _
      $region56: #{tpu_custom_call.1} parent=51 // pred_fallthru
        _
    $region52: #{tpu_custom_call.1} parent=5 // pred_fallthru
      _
    %p6441 = scmp.le.s32.totalorder 2, %s14
    // Predicated region
    $region57: #{tpu_custom_call.1} parent=5 // pred_check
      %p6442 = pneg %p6441
    $region58: #{tpu_custom_call.1} parent=5 // pred_check_branch
      %6444 = sbr.rel (%p6442) target = $region60
    $region59: #{tpu_custom_call.1} parent=5 // pred_region
      %s6445 = ssub.s32 %s14, 2
      // Predicated region
      $region61: #{tpu_custom_call.1} parent=59 // pred_check
        %p6446 = pneg %p216
      $region62: #{tpu_custom_call.1} parent=59 // pred_check_branch
        %6448 = sbr.rel (%p6446) target = $region64
      $region63: #{tpu_custom_call.1} parent=59 // pred_region
        %p6449 = scmp.lt.s32.totalorder %s20, 1
        %s6450 = scalar_select %p6449, %s20, 1
        %s6451 = smul.addr %s6450, 36
        %s6452 = smul.addr %s6451, 8
        %s6453 = scalar_lea.vmem %s8, %s6452
      $region64: #{tpu_custom_call.1} parent=59 // pred_fallthru
        _
    $region60: #{tpu_custom_call.1} parent=5 // pred_fallthru
      _
  $region6: #{tpu_custom_call.1} parent=0 // loop_footer
    %s18 = sadd.s32 1, %s14
  $region7: #{tpu_custom_call.1} parent=0 // loop_footer_branch
    %13 = sbr.rel target = $region3
  $region8: #{tpu_custom_call.1} parent=0 // loop_exit
    _

</llo_original>
